<compile_context>
chip_gen: v5e
topology: v5e:2x2
jax: 0.10.0
libtpu: 0.0.40
codegen_flags: <defaults>
</compile_context>

<pallas_src>
import functools

import jax
import jax.numpy as jnp
import numpy as np
from jax.experimental import pallas as pl
from jax.experimental.pallas import tpu as pltpu

EPS = 1e-8  # asteroid gLN epsilon


# ----------------------------- Pallas kernel ------------------------------ #

def tdconvnet_kernel(x_ref, ln_gb_ref, bw_ref, bb_ref,
                     in_w_ref, hid_cols_ref, rs_w_ref, rs_b_ref,
                     mp_ref, mw_ref, mb_ref,
                     out_ref,
                     *, n_blocks, n_repeats, K, t_true, bn_chan,
                     mxu_precision):
    """One batch element per grid step.  x_ref: (in_chan, Tp), Tp % 128 == 0.

    hid_cols_ref packs every per-layer (hid, 1) column parameter:
      [in_b | g1_gamma | g1_beta | dw_w[0..K-1] | dw_b | g2_gamma | g2_beta |
       prelu1_alpha | prelu2_alpha]                         -> (L, hid, K + 8)
    rs_w_ref / rs_b_ref are the fused residual+skip 1x1 conv:
      rs_w = concat(res_w, skip_w)                          -> (L, bn+skip, hid)
    """
    in_chan, Tp = x_ref.shape
    hid_chan = in_w_ref.shape[1]
    skip_chan = rs_w_ref.shape[1] - bn_chan

    # packed column indices inside hid_cols
    C_INB, C_G1G, C_G1B, C_DW = 0, 1, 2, 3
    C_DWB, C_G2G, C_G2B, C_A1, C_A2 = 3 + K, 4 + K, 5 + K, 6 + K, 7 + K

    lane = jax.lax.broadcasted_iota(jnp.int32, (1, Tp), 1)
    valid = lane < t_true                                    # (1, Tp) bool

    inv_in = 1.0 / float(in_chan * t_true)
    inv_hid = 1.0 / float(hid_chan * t_true)

    def gln(h, gamma, beta, inv_count):
        # gLN over (channels, true frames): one masked pass, lane-axis partial
        # sums first, then a per-channel affine so applying the norm is only
        # two full-(C, Tp) VPU ops.
        hm = jnp.where(valid, h, 0.0)
        s1 = jnp.sum(hm, axis=1, keepdims=True)              # (C, 1)
        s2 = jnp.sum(hm * hm, axis=1, keepdims=True)         # (C, 1)
        m = jnp.sum(s1) * inv_count
        var = jnp.maximum(jnp.sum(s2) * inv_count - m * m, 0.0)
        scale = gamma * jax.lax.rsqrt(var + EPS)              # (C, 1)
        shift = beta - m * scale                              # (C, 1)
        return h * scale + shift

    def prelu(h, alpha):
        return jnp.where(h >= 0, h, alpha * h)

    def mxu(w, h):
        # f32 operands, f32 accumulation (matches the f32 torch module).
        # TODO(synk): at production channel counts bf16 operands roughly double
        # MXU throughput if a looser numerical contract is acceptable.
        return jnp.dot(w, h, preferred_element_type=jnp.float32,
                       precision=mxu_precision)

    # Hoisted depthwise tap masks: dilations repeat across repeats, so only
    # n_blocks * (K - 1) distinct offsets exist; build each bool mask once.
    tap_masks = {}
    for xblk in range(n_blocks):
        d = 2 ** xblk
        pad = (K - 1) * d // 2
        for k in range(K):
            off = k * d - pad
            if off != 0 and off not in tap_masks:
                tap_masks[off] = (lane >= -off) if off < 0 else (lane < t_true - off)

    # ---- bottleneck: gLN(in_chan) -> 1x1 conv -> bn_chan ----
    x = x_ref[...]
    xn = gln(x, ln_gb_ref[:, 0:1], ln_gb_ref[:, 1:2], inv_in)
    out0 = mxu(bw_ref[...], xn) + bb_ref[...]
    skip0 = jnp.zeros((skip_chan, Tp), jnp.float32)

    # ---- TCN: fori_loop over repeats, static unroll over the n_blocks
    #      distinct dilations (static roll shifts, bounded live ranges) ----
    def repeat_body(r, carry):
        out, skip_acc = carry
        for xblk in range(n_blocks):
            l = r * n_blocks + xblk
            d = 2 ** xblk
            pad = (K - 1) * d // 2
            cols = hid_cols_ref[l]                            # (hid, K + 8)

            # 1x1 in_conv -> PReLU -> gLN
            h = mxu(in_w_ref[l], out) + cols[:, C_INB:C_INB + 1]
            h = prelu(h, cols[:, C_A1:C_A1 + 1])
            h = gln(h, cols[:, C_G1G:C_G1G + 1], cols[:, C_G1B:C_G1B + 1], inv_hid)

            # depthwise dilated conv ("same" padding, non-causal): tap k reads
            # h[:, t + k*d - pad] via an XLU lane rotation + boolean edge mask
            dh = None
            for k in range(K):
                off = k * d - pad
                if off == 0:
                    tap = h
                else:
                    tap = jnp.where(tap_masks[off],
                                    pltpu.roll(h, (-off) % Tp, axis=1), 0.0)
                term = cols[:, C_DW + k:C_DW + k + 1] * tap
                dh = term if dh is None else dh + term
            dh = dh + cols[:, C_DWB:C_DWB + 1]

            # PReLU -> gLN
            dh = prelu(dh, cols[:, C_A2:C_A2 + 1])
            dh = gln(dh, cols[:, C_G2G:C_G2G + 1], cols[:, C_G2B:C_G2B + 1], inv_hid)

            # fused residual + skip 1x1 conv: one MXU pass per block
            rs = mxu(rs_w_ref[l], dh) + rs_b_ref[l]           # (bn+skip, Tp)
            out = out + rs[:bn_chan]
            skip_acc = skip_acc + rs[bn_chan:]
        return out, skip_acc

    _, skip_acc = jax.lax.fori_loop(0, n_repeats, repeat_body, (out0, skip0))

    # ---- mask net: PReLU -> 1x1 conv -> ReLU (mask_act='relu') ----
    mi = prelu(skip_acc, mp_ref[...])
    score = mxu(mw_ref[...], mi) + mb_ref[...]
    # zero the padded frames so no garbage leaves the kernel
    out_ref[...] = jnp.where(valid, jnp.maximum(score, 0.0), 0.0)
    # TODO(synk): for v7x (64 MiB VMEM / higher HBM BW) emit the mask in bf16
    # to halve the output block and HBM writeback if the consumer tolerates it.


# ------------------------------ JAX wrapper -------------------------------- #

def _ceil_to(a, b):
    return -(-a // b) * b


def _padded_bytes(shape, dtype=jnp.float32):
    s = [int(d) for d in shape]
    s[-1] = _ceil_to(s[-1], 128)
    if len(s) >= 2:
        s[-2] = _ceil_to(s[-2], 8)
    n = 1
    for d in s:
        n *= d
    return n * jnp.dtype(dtype).itemsize


def _vmem_limit_bytes(x_block, out_block, weights, hid_chan, bn_skip, n_out, Tp):
    """Estimate the VMEM footprint instead of hardcoding a full-TC limit."""
    w_bytes = sum(_padded_bytes(a.shape, a.dtype) for a in weights)
    io_bytes = _padded_bytes(x_block) + _padded_bytes(out_block)
    # ~6 live (hid, Tp) temporaries plus the out/skip/rs accumulators
    act_bytes = (6 * hid_chan + 2 * bn_skip + n_out) * _ceil_to(Tp, 128) * 4
    est = 2 * (w_bytes + io_bytes) + act_bytes + (8 << 20)
    # Clamp: leave headroom under v7x's 64 MiB physical VMEM; larger Tp may use
    # more of v5e/v6e's 128 MiB.
    return int(min(max(est, 24 << 20), 96 << 20))


def pack_params(params):
    """Pack per-layer column vectors and fuse res+skip weights (see kernel doc)."""
    L, hid, _ = params["in_w"].shape
    hid_cols = jnp.concatenate(
        [params["in_b"], params["g1g"], params["g1b"], params["dw_w"],
         params["dw_b"], params["g2g"], params["g2b"],
         jnp.broadcast_to(params["p1"], (L, hid, 1)),
         jnp.broadcast_to(params["p2"], (L, hid, 1))],
        axis=2)                                               # (L, hid, K + 8)
    rs_w = jnp.concatenate([params["rw"], params["sw"]], axis=1)
    rs_b = jnp.concatenate([params["rb"], params["sb"]], axis=1)
    ln_gb = jnp.concatenate([params["ln_g"], params["ln_b"]], axis=1)
    return (ln_gb, params["bw"], params["bb"],
            params["in_w"], hid_cols, rs_w, rs_b,
            params["mp"], params["mw"], params["mb"])


def tdconvnet_forward(x, params, *, n_src, out_chan, n_blocks, n_repeats, K):
    B, in_chan, T = x.shape
    n_out = n_src * out_chan
    bn_chan = params["bw"].shape[0]
    hid_chan = params["in_w"].shape[1]
    skip_chan = params["sw"].shape[1]

    # pad frames to a lane-dense multiple of 128 (gLN / final store mask it)
    Tp = max(128, _ceil_to(T, 128))
    xp = jnp.pad(x, ((0, 0), (0, 0), (0, Tp - T)))

    weights = pack_params(params)
    args = (xp,) + weights

    # Batch on the grid; weight blocks use a constant index_map so they are
    # DMA'd once and stay resident across grid steps.
    # TODO(synk): on v7x, single-buffer the constant weight blocks
    # (pipeline_mode=pl.Buffered(1)) or stream per-layer weight slices from HBM
    # (pl.ANY + make_async_copy) for production-sized models.
    # TODO(synk): on v5e with toy channel counts, folding batch into the lane
    # axis (C, B*Tp) would amortize MXU weight pushes; unnecessary at bn/hid of
    # 128/512.
    in_specs = [pl.BlockSpec((None, in_chan, Tp), lambda b: (b, 0, 0))]
    for a in weights:
        in_specs.append(pl.BlockSpec(a.shape, lambda b, nd=a.ndim: (0,) * nd))
    out_spec = pl.BlockSpec((None, n_out, Tp), lambda b: (b, 0, 0))

    vmem_limit = _vmem_limit_bytes((in_chan, Tp), (n_out, Tp), weights,
                                   hid_chan, bn_chan + skip_chan, n_out, Tp)

    def run(precision):
        kern = functools.partial(
            tdconvnet_kernel, n_blocks=n_blocks, n_repeats=n_repeats, K=K,
            t_true=T, bn_chan=bn_chan, mxu_precision=precision)
        return pl.pallas_call(
            kern,
            grid=(B,),
            out_shape=jax.ShapeDtypeStruct((B, n_out, Tp), jnp.float32),
            in_specs=in_specs,
            out_specs=out_spec,
            compiler_params=pltpu.CompilerParams(
                dimension_semantics=("parallel",),   # megacore / 2-TC sharding
                vmem_limit_bytes=vmem_limit),
        )(*args)

    try:
        score = run(jax.lax.Precision.HIGHEST)       # fp32 contract precision
    except Exception:
        # Fallback for toolchains without fp32 contract precision on MXU dots.
        score = run(None)

    return score[..., :T].reshape(B, n_src, out_chan, T)


def make_params(key, *, in_chan, n_src, out_chan, n_blocks, n_repeats,
                bn_chan, hid_chan, skip_chan, K):
    """Deterministic synthetic weights with the same shapes as the torch module."""
    L = n_blocks * n_repeats
    ks = jax.random.split(key, 12)

    def w(k, shape, fan_in):
        return (jax.random.normal(k, shape, jnp.float32) / np.sqrt(fan_in)).astype(jnp.float32)

    def bias(k, shape):
        return 0.1 * jax.random.normal(k, shape, jnp.float32)

    return dict(
        # bottleneck gLN(in_chan) + 1x1 conv(in_chan -> bn_chan)
        ln_g=jnp.ones((in_chan, 1), jnp.float32),
        ln_b=jnp.zeros((in_chan, 1), jnp.float32),
        bw=w(ks[0], (bn_chan, in_chan), in_chan),
        bb=bias(ks[1], (bn_chan, 1)),
        # per-block parameters stacked along L
        in_w=w(ks[2], (L, hid_chan, bn_chan), bn_chan),
        in_b=bias(ks[3], (L, hid_chan, 1)),
        p1=jnp.full((L, 1, 1), 0.25, jnp.float32),            # PReLU default init
        g1g=jnp.ones((L, hid_chan, 1), jnp.float32),
        g1b=jnp.zeros((L, hid_chan, 1), jnp.float32),
        dw_w=w(ks[4], (L, hid_chan, K), K),                    # depthwise (hid, 1, K) squeezed
        dw_b=bias(ks[5], (L, hid_chan, 1)),
        p2=jnp.full((L, 1, 1), 0.25, jnp.float32),
        g2g=jnp.ones((L, hid_chan, 1), jnp.float32),
        g2b=jnp.zeros((L, hid_chan, 1), jnp.float32),
        rw=w(ks[6], (L, bn_chan, hid_chan), hid_chan),
        rb=bias(ks[7], (L, bn_chan, 1)),
        sw=w(ks[8], (L, skip_chan, hid_chan), hid_chan),
        sb=bias(ks[9], (L, skip_chan, 1)),
        # mask net: PReLU + 1x1 conv(skip_chan -> n_src*out_chan)
        mp=jnp.full((1, 1), 0.25, jnp.float32),
        mw=w(ks[10], (n_src * out_chan, skip_chan), skip_chan),
        mb=bias(ks[11], (n_src * out_chan, 1)),
    )


# --------------------------- pure-JAX reference ---------------------------- #
# Faithful f32 mirror of the torch module's math (gLN two-pass stats, fp32
# matmul precision).

def reference_forward(x, params, *, n_src, out_chan, dilations, K):
    B, _, T = x.shape
    P = jax.lax.Precision.HIGHEST

    def gln(h, g, b):
        m = h.mean(axis=(1, 2), keepdims=True)
        v = ((h - m) ** 2).mean(axis=(1, 2), keepdims=True)
        return (h - m) * jax.lax.rsqrt(v + EPS) * g[None] + b[None]

    def prelu(h, a):
        return jnp.where(h >= 0, h, a * h)

    def conv1x1(w, h, b):
        return jnp.einsum("oc,bct->bot", w, h, precision=P) + b[None]

    out = gln(x, params["ln_g"], params["ln_b"])
    out = conv1x1(params["bw"], out, params["bb"])
    skip = jnp.zeros((B, params["sw"].shape[1], T), jnp.float32)
    for l, d in enumerate(dilations):
        h = conv1x1(params["in_w"][l], out, params["in_b"][l])
        h = prelu(h, params["p1"][l][None])
        h = gln(h, params["g1g"][l], params["g1b"][l])
        pad = (K - 1) * d // 2
        hp = jnp.pad(h, ((0, 0), (0, 0), (pad, pad)))
        dh = jnp.zeros_like(h)
        for k in range(K):
            dh = dh + params["dw_w"][l][:, k][None, :, None] * hp[:, :, k * d:k * d + T]
        dh = dh + params["dw_b"][l][None]
        dh = prelu(dh, params["p2"][l][None])
        dh = gln(dh, params["g2g"][l], params["g2b"][l])
        out = out + conv1x1(params["rw"][l], dh, params["rb"][l])
        skip = skip + conv1x1(params["sw"][l], dh, params["sb"][l])
    mi = prelu(skip, params["mp"][None])
    score = conv1x1(params["mw"], mi, params["mb"])
    return jnp.maximum(score.reshape(B, n_src, out_chan, T), 0.0)


# ----------------------------------- main ----------------------------------- #

if __name__ == "__main__":
    # small shapes consistent with TDConvNet.forward
    B, T = 2, 32                    # batch, n_frames
    in_chan, n_src = 16, 2
    out_chan = in_chan              # out_chan=None -> in_chan
    n_blocks, n_repeats = 2, 2
    bn_chan, hid_chan, skip_chan = 16, 32, 16
    K = 3                           # conv_kernel_size
    # non-causal: padding = (K-1)*2**x // 2, dilation = 2**x
    dilations = [2 ** xx for _ in range(n_repeats) for xx in range(n_blocks)]

    key = jax.random.PRNGKey(0)
    kx, kp = jax.random.split(key)
    x = jax.random.normal(kx, (B, in_chan, T), jnp.float32)
    params = make_params(kp, in_chan=in_chan, n_src=n_src, out_chan=out_chan,
                         n_blocks=n_blocks, n_repeats=n_repeats,
                         bn_chan=bn_chan, hid_chan=hid_chan,
                         skip_chan=skip_chan, K=K)

    est_mask = tdconvnet_forward(x, params, n_src=n_src, out_chan=out_chan,
                                 n_blocks=n_blocks, n_repeats=n_repeats, K=K)
    est_mask = jax.block_until_ready(est_mask)

    ref_mask = jax.block_until_ready(
        reference_forward(x, params, n_src=n_src, out_chan=out_chan,
                          dilations=dilations, K=K))

    assert est_mask.shape == (B, n_src, out_chan, T), est_mask.shape
    # With fp32 contract precision on both sides the observed |diff| is ~1e-5;
    # tolerance is sized to also cover backends that fall back to bf16 MXU
    # passes for the 1x1-conv matmuls.
    np.testing.assert_allclose(np.asarray(est_mask), np.asarray(ref_mask),
                               rtol=2e-2, atol=2e-2)
    print("KERNEL_OK")
</pallas_src>

<mosaic_0001>
module attributes {stable_mosaic.version = 11 : i64} {
  func.func @tdconvnet_kernel(%arg0: i32, %arg1: memref<1x16x128xf32, #tpu.memory_space<vmem>>, %arg2: memref<16x2xf32, #tpu.memory_space<vmem>>, %arg3: memref<16x16xf32, #tpu.memory_space<vmem>>, %arg4: memref<16x1xf32, #tpu.memory_space<vmem>>, %arg5: memref<4x32x16xf32, #tpu.memory_space<vmem>>, %arg6: memref<4x32x11xf32, #tpu.memory_space<vmem>>, %arg7: memref<4x32x32xf32, #tpu.memory_space<vmem>>, %arg8: memref<4x32x1xf32, #tpu.memory_space<vmem>>, %arg9: memref<1x1xf32, #tpu.memory_space<vmem>>, %arg10: memref<32x16xf32, #tpu.memory_space<vmem>>, %arg11: memref<32x1xf32, #tpu.memory_space<vmem>>, %arg12: memref<1x32x128xf32, #tpu.memory_space<vmem>>) attributes {dimension_semantics = [#tpu.dimension_semantics<parallel>], iteration_bounds = array<i64: 2>, scalar_prefetch = 0 : i64, scratch_operands = 0 : i64, tpu.core_type = #tpu.core_type<tc>, window_params = [{transform_indices = @transform_0, window_bounds = array<i64: 1, 16, 128>}, {pipeline_mode = #tpu.pipeline_mode<synchronous>, transform_indices = @transform_1, window_bounds = array<i64: 16, 2>}, {pipeline_mode = #tpu.pipeline_mode<synchronous>, transform_indices = @transform_2, window_bounds = array<i64: 16, 16>}, {pipeline_mode = #tpu.pipeline_mode<synchronous>, transform_indices = @transform_3, window_bounds = array<i64: 16, 1>}, {pipeline_mode = #tpu.pipeline_mode<synchronous>, transform_indices = @transform_4, window_bounds = array<i64: 4, 32, 16>}, {pipeline_mode = #tpu.pipeline_mode<synchronous>, transform_indices = @transform_5, window_bounds = array<i64: 4, 32, 11>}, {pipeline_mode = #tpu.pipeline_mode<synchronous>, transform_indices = @transform_6, window_bounds = array<i64: 4, 32, 32>}, {pipeline_mode = #tpu.pipeline_mode<synchronous>, transform_indices = @transform_7, window_bounds = array<i64: 4, 32, 1>}, {pipeline_mode = #tpu.pipeline_mode<synchronous>, transform_indices = @transform_8, window_bounds = array<i64: 1, 1>}, {pipeline_mode = #tpu.pipeline_mode<synchronous>, transform_indices = @transform_9, window_bounds = array<i64: 32, 16>}, {pipeline_mode = #tpu.pipeline_mode<synchronous>, transform_indices = @transform_10, window_bounds = array<i64: 32, 1>}, {transform_indices = @transform_11, window_bounds = array<i64: 1, 32, 128>}]} {
    %0 = tpu.iota {dimensions = array<i32: 1>} : vector<1x128xi32>
    %c32_i32 = arith.constant 32 : i32
    %1 = vector.broadcast %c32_i32 : i32 to vector<1x128xi32>
    %2 = arith.cmpi slt, %0, %1 : vector<1x128xi32>
    %c1_i32 = arith.constant 1 : i32
    %3 = vector.broadcast %c1_i32 : i32 to vector<1x128xi32>
    %4 = arith.cmpi sge, %0, %3 : vector<1x128xi32>
    %c31_i32 = arith.constant 31 : i32
    %5 = vector.broadcast %c31_i32 : i32 to vector<1x128xi32>
    %6 = arith.cmpi slt, %0, %5 : vector<1x128xi32>
    %c2_i32 = arith.constant 2 : i32
    %7 = vector.broadcast %c2_i32 : i32 to vector<1x128xi32>
    %8 = arith.cmpi sge, %0, %7 : vector<1x128xi32>
    %c30_i32 = arith.constant 30 : i32
    %9 = vector.broadcast %c30_i32 : i32 to vector<1x128xi32>
    %10 = arith.cmpi slt, %0, %9 : vector<1x128xi32>
    %c0 = arith.constant 0 : index
    %c0_0 = arith.constant 0 : index
    %c0_1 = arith.constant 0 : index
    %11 = vector.load %arg1[%c0, %c0_0, %c0_1] : memref<1x16x128xf32, #tpu.memory_space<vmem>>, vector<1x16x128xf32>
    %12 = vector.shape_cast %11 : vector<1x16x128xf32> to vector<16x128xf32>
    %c0_2 = arith.constant 0 : index
    %c0_3 = arith.constant 0 : index
    %13 = vector.load %arg2[%c0_2, %c0_3] : memref<16x2xf32, #tpu.memory_space<vmem>>, vector<16x1xf32>
    %c0_4 = arith.constant 0 : index
    %c1 = arith.constant 1 : index
    %14 = vector.load %arg2[%c0_4, %c1] : memref<16x2xf32, #tpu.memory_space<vmem>>, vector<16x1xf32>
    %cst = arith.constant 0.000000e+00 : f32
    %15 = vector.shape_cast %2 : vector<1x128xi1> to vector<1x128xi1>
    %16 = vector.broadcast %15 : vector<1x128xi1> to vector<16x128xi1>
    %17 = vector.broadcast %cst : f32 to vector<16x128xf32>
    %18 = arith.select %16, %12, %17 : vector<16x128xi1>, vector<16x128xf32>
    %cst_5 = arith.constant dense<0.000000e+00> : vector<16xf32>
    %19 = vector.multi_reduction <add>, %18, %cst_5 [1] : vector<16x128xf32> to vector<16xf32>
    %20 = vector.shape_cast %19 : vector<16xf32> to vector<16x1xf32>
    %21 = arith.mulf %18, %18 : vector<16x128xf32>
    %cst_6 = arith.constant dense<0.000000e+00> : vector<16xf32>
    %22 = vector.multi_reduction <add>, %21, %cst_6 [1] : vector<16x128xf32> to vector<16xf32>
    %23 = vector.shape_cast %22 : vector<16xf32> to vector<16x1xf32>
    %24 = vector.shape_cast %20 : vector<16x1xf32> to vector<1x16x1xf32>
    %cst_7 = arith.constant dense<0.000000e+00> : vector<1xf32>
    %25 = vector.multi_reduction <add>, %24, %cst_7 [1, 2] : vector<1x16x1xf32> to vector<1xf32>
    %26 = vector.shape_cast %25 : vector<1xf32> to vector<1x1x1xf32>
    %27 = vector.extract %26[0, 0, 0] : f32 from vector<1x1x1xf32>
    %cst_8 = arith.constant 0.001953125 : f32
    %28 = arith.mulf %27, %cst_8 : f32
    %29 = vector.shape_cast %23 : vector<16x1xf32> to vector<1x16x1xf32>
    %cst_9 = arith.constant dense<0.000000e+00> : vector<1xf32>
    %30 = vector.multi_reduction <add>, %29, %cst_9 [1, 2] : vector<1x16x1xf32> to vector<1xf32>
    %31 = vector.shape_cast %30 : vector<1xf32> to vector<1x1x1xf32>
    %32 = vector.extract %31[0, 0, 0] : f32 from vector<1x1x1xf32>
    %cst_10 = arith.constant 0.001953125 : f32
    %33 = arith.mulf %32, %cst_10 : f32
    %34 = arith.mulf %28, %28 : f32
    %35 = arith.subf %33, %34 : f32
    %cst_11 = arith.constant 0.000000e+00 : f32
    %36 = arith.maximumf %35, %cst_11 : f32
    %cst_12 = arith.constant 9.99999993E-9 : f32
    %37 = arith.addf %36, %cst_12 : f32
    %38 = math.rsqrt %37 : f32
    %39 = vector.broadcast %38 : f32 to vector<16x1xf32>
    %40 = arith.mulf %13, %39 : vector<16x1xf32>
    %41 = vector.broadcast %28 : f32 to vector<16x1xf32>
    %42 = arith.mulf %41, %40 : vector<16x1xf32>
    %43 = arith.subf %14, %42 : vector<16x1xf32>
    %44 = vector.broadcast %40 : vector<16x1xf32> to vector<16x128xf32>
    %45 = arith.mulf %12, %44 : vector<16x128xf32>
    %46 = vector.broadcast %43 : vector<16x1xf32> to vector<16x128xf32>
    %47 = arith.addf %45, %46 : vector<16x128xf32>
    %c0_13 = arith.constant 0 : index
    %c0_14 = arith.constant 0 : index
    %48 = vector.load %arg3[%c0_13, %c0_14] : memref<16x16xf32, #tpu.memory_space<vmem>>, vector<16x16xf32>
    %cst_15 = arith.constant dense<0.000000e+00> : vector<16x128xf32>
    %49 = tpu.matmul %48, %47, %cst_15 {dimension_numbers = #tpu.dot_dimension_numbers<[1], [0], [0], [1], [0, 0, 1, 1], [], []>, precision = #tpu.contract_precision<fp32>} : vector<16x16xf32>, vector<16x128xf32>, vector<16x128xf32> -> vector<16x128xf32>
    %c0_16 = arith.constant 0 : index
    %c0_17 = arith.constant 0 : index
    %50 = vector.load %arg4[%c0_16, %c0_17] : memref<16x1xf32, #tpu.memory_space<vmem>>, vector<16x1xf32>
    %51 = vector.broadcast %50 : vector<16x1xf32> to vector<16x128xf32>
    %52 = arith.addf %49, %51 : vector<16x128xf32>
    %cst_18 = arith.constant 0.000000e+00 : f32
    %53 = vector.broadcast %cst_18 : f32 to vector<16x128xf32>
    %c0_i32 = arith.constant 0 : i32
    %c2_i32_19 = arith.constant 2 : i32
    %54 = arith.addi %c0_i32, %c2_i32_19 : i32
    %c1_i32_20 = arith.constant 1 : i32
    %55:2 = scf.for %arg13 = %c0_i32 to %54 step %c1_i32_20 iter_args(%arg14 = %52, %arg15 = %53) -> (vector<16x128xf32>, vector<16x128xf32>)  : i32 {
      %c2_i32_35 = arith.constant 2 : i32
      %76 = arith.muli %arg13, %c2_i32_35 : i32
      %c0_i32_36 = arith.constant 0 : i32
      %77 = arith.addi %76, %c0_i32_36 : i32
      %78 = arith.index_cast %77 : i32 to index
      %c0_37 = arith.constant 0 : index
      %c0_38 = arith.constant 0 : index
      %79 = vector.load %arg6[%78, %c0_37, %c0_38] : memref<4x32x11xf32, #tpu.memory_space<vmem>>, vector<1x32x11xf32>
      %80 = vector.shape_cast %79 : vector<1x32x11xf32> to vector<32x11xf32>
      %81 = arith.index_cast %77 : i32 to index
      %c0_39 = arith.constant 0 : index
      %c0_40 = arith.constant 0 : index
      %82 = vector.load %arg5[%81, %c0_39, %c0_40] : memref<4x32x16xf32, #tpu.memory_space<vmem>>, vector<1x32x16xf32>
      %83 = vector.shape_cast %82 : vector<1x32x16xf32> to vector<32x16xf32>
      %cst_41 = arith.constant dense<0.000000e+00> : vector<32x128xf32>
      %84 = tpu.matmul %83, %arg14, %cst_41 {dimension_numbers = #tpu.dot_dimension_numbers<[1], [0], [0], [1], [0, 0, 1, 1], [], []>, precision = #tpu.contract_precision<fp32>} : vector<32x16xf32>, vector<16x128xf32>, vector<32x128xf32> -> vector<32x128xf32>
      %85 = vector.extract_strided_slice %80 {offsets = [0, 0], sizes = [32, 1], strides = [1, 1]} : vector<32x11xf32> to vector<32x1xf32>
      %86 = vector.broadcast %85 : vector<32x1xf32> to vector<32x128xf32>
      %87 = arith.addf %84, %86 : vector<32x128xf32>
      %88 = vector.extract_strided_slice %80 {offsets = [0, 9], sizes = [32, 1], strides = [1, 1]} : vector<32x11xf32> to vector<32x1xf32>
      %cst_42 = arith.constant 0.000000e+00 : f32
      %89 = vector.broadcast %cst_42 : f32 to vector<32x128xf32>
      %90 = arith.cmpf oge, %87, %89 : vector<32x128xf32>
      %91 = vector.broadcast %88 : vector<32x1xf32> to vector<32x128xf32>
      %92 = arith.mulf %91, %87 : vector<32x128xf32>
      %93 = arith.select %90, %87, %92 : vector<32x128xi1>, vector<32x128xf32>
      %94 = vector.extract_strided_slice %80 {offsets = [0, 1], sizes = [32, 1], strides = [1, 1]} : vector<32x11xf32> to vector<32x1xf32>
      %95 = vector.extract_strided_slice %80 {offsets = [0, 2], sizes = [32, 1], strides = [1, 1]} : vector<32x11xf32> to vector<32x1xf32>
      %cst_43 = arith.constant 0.000000e+00 : f32
      %96 = vector.shape_cast %2 : vector<1x128xi1> to vector<1x128xi1>
      %97 = vector.broadcast %96 : vector<1x128xi1> to vector<32x128xi1>
      %98 = vector.broadcast %cst_43 : f32 to vector<32x128xf32>
      %99 = arith.select %97, %93, %98 : vector<32x128xi1>, vector<32x128xf32>
      %cst_44 = arith.constant dense<0.000000e+00> : vector<32xf32>
      %100 = vector.multi_reduction <add>, %99, %cst_44 [1] : vector<32x128xf32> to vector<32xf32>
      %101 = vector.shape_cast %100 : vector<32xf32> to vector<32x1xf32>
      %102 = arith.mulf %99, %99 : vector<32x128xf32>
      %cst_45 = arith.constant dense<0.000000e+00> : vector<32xf32>
      %103 = vector.multi_reduction <add>, %102, %cst_45 [1] : vector<32x128xf32> to vector<32xf32>
      %104 = vector.shape_cast %103 : vector<32xf32> to vector<32x1xf32>
      %105 = vector.shape_cast %101 : vector<32x1xf32> to vector<1x32x1xf32>
      %cst_46 = arith.constant dense<0.000000e+00> : vector<1xf32>
      %106 = vector.multi_reduction <add>, %105, %cst_46 [1, 2] : vector<1x32x1xf32> to vector<1xf32>
      %107 = vector.shape_cast %106 : vector<1xf32> to vector<1x1x1xf32>
      %108 = vector.extract %107[0, 0, 0] : f32 from vector<1x1x1xf32>
      %cst_47 = arith.constant 9.765625E-4 : f32
      %109 = arith.mulf %108, %cst_47 : f32
      %110 = vector.shape_cast %104 : vector<32x1xf32> to vector<1x32x1xf32>
      %cst_48 = arith.constant dense<0.000000e+00> : vector<1xf32>
      %111 = vector.multi_reduction <add>, %110, %cst_48 [1, 2] : vector<1x32x1xf32> to vector<1xf32>
      %112 = vector.shape_cast %111 : vector<1xf32> to vector<1x1x1xf32>
      %113 = vector.extract %112[0, 0, 0] : f32 from vector<1x1x1xf32>
      %cst_49 = arith.constant 9.765625E-4 : f32
      %114 = arith.mulf %113, %cst_49 : f32
      %115 = arith.mulf %109, %109 : f32
      %116 = arith.subf %114, %115 : f32
      %cst_50 = arith.constant 0.000000e+00 : f32
      %117 = arith.maximumf %116, %cst_50 : f32
      %cst_51 = arith.constant 9.99999993E-9 : f32
      %118 = arith.addf %117, %cst_51 : f32
      %119 = math.rsqrt %118 : f32
      %120 = vector.broadcast %119 : f32 to vector<32x1xf32>
      %121 = arith.mulf %94, %120 : vector<32x1xf32>
      %122 = vector.broadcast %109 : f32 to vector<32x1xf32>
      %123 = arith.mulf %122, %121 : vector<32x1xf32>
      %124 = arith.subf %95, %123 : vector<32x1xf32>
      %125 = vector.broadcast %121 : vector<32x1xf32> to vector<32x128xf32>
      %126 = arith.mulf %93, %125 : vector<32x128xf32>
      %127 = vector.broadcast %124 : vector<32x1xf32> to vector<32x128xf32>
      %128 = arith.addf %126, %127 : vector<32x128xf32>
      %c1_i32_52 = arith.constant 1 : i32
      %129 = tpu.dynamic_rotate %128 by %c1_i32_52 dim 1 : vector<32x128xf32>, i32 -> vector<32x128xf32>
      %cst_53 = arith.constant 0.000000e+00 : f32
      %130 = vector.shape_cast %4 : vector<1x128xi1> to vector<1x128xi1>
      %131 = vector.broadcast %130 : vector<1x128xi1> to vector<32x128xi1>
      %132 = vector.broadcast %cst_53 : f32 to vector<32x128xf32>
      %133 = arith.select %131, %129, %132 : vector<32x128xi1>, vector<32x128xf32>
      %134 = vector.extract_strided_slice %80 {offsets = [0, 3], sizes = [32, 1], strides = [1, 1]} : vector<32x11xf32> to vector<32x1xf32>
      %135 = vector.broadcast %134 : vector<32x1xf32> to vector<32x128xf32>
      %136 = arith.mulf %135, %133 : vector<32x128xf32>
      %137 = vector.extract_strided_slice %80 {offsets = [0, 4], sizes = [32, 1], strides = [1, 1]} : vector<32x11xf32> to vector<32x1xf32>
      %138 = vector.broadcast %137 : vector<32x1xf32> to vector<32x128xf32>
      %139 = arith.mulf %138, %128 : vector<32x128xf32>
      %140 = arith.addf %136, %139 : vector<32x128xf32>
      %c127_i32 = arith.constant 127 : i32
      %141 = tpu.dynamic_rotate %128 by %c127_i32 dim 1 : vector<32x128xf32>, i32 -> vector<32x128xf32>
      %cst_54 = arith.constant 0.000000e+00 : f32
      %142 = vector.shape_cast %6 : vector<1x128xi1> to vector<1x128xi1>
      %143 = vector.broadcast %142 : vector<1x128xi1> to vector<32x128xi1>
      %144 = vector.broadcast %cst_54 : f32 to vector<32x128xf32>
      %145 = arith.select %143, %141, %144 : vector<32x128xi1>, vector<32x128xf32>
      %146 = vector.extract_strided_slice %80 {offsets = [0, 5], sizes = [32, 1], strides = [1, 1]} : vector<32x11xf32> to vector<32x1xf32>
      %147 = vector.broadcast %146 : vector<32x1xf32> to vector<32x128xf32>
      %148 = arith.mulf %147, %145 : vector<32x128xf32>
      %149 = arith.addf %140, %148 : vector<32x128xf32>
      %150 = vector.extract_strided_slice %80 {offsets = [0, 6], sizes = [32, 1], strides = [1, 1]} : vector<32x11xf32> to vector<32x1xf32>
      %151 = vector.broadcast %150 : vector<32x1xf32> to vector<32x128xf32>
      %152 = arith.addf %149, %151 : vector<32x128xf32>
      %153 = vector.extract_strided_slice %80 {offsets = [0, 10], sizes = [32, 1], strides = [1, 1]} : vector<32x11xf32> to vector<32x1xf32>
      %cst_55 = arith.constant 0.000000e+00 : f32
      %154 = vector.broadcast %cst_55 : f32 to vector<32x128xf32>
      %155 = arith.cmpf oge, %152, %154 : vector<32x128xf32>
      %156 = vector.broadcast %153 : vector<32x1xf32> to vector<32x128xf32>
      %157 = arith.mulf %156, %152 : vector<32x128xf32>
      %158 = arith.select %155, %152, %157 : vector<32x128xi1>, vector<32x128xf32>
      %159 = vector.extract_strided_slice %80 {offsets = [0, 7], sizes = [32, 1], strides = [1, 1]} : vector<32x11xf32> to vector<32x1xf32>
      %160 = vector.extract_strided_slice %80 {offsets = [0, 8], sizes = [32, 1], strides = [1, 1]} : vector<32x11xf32> to vector<32x1xf32>
      %cst_56 = arith.constant 0.000000e+00 : f32
      %161 = vector.shape_cast %2 : vector<1x128xi1> to vector<1x128xi1>
      %162 = vector.broadcast %161 : vector<1x128xi1> to vector<32x128xi1>
      %163 = vector.broadcast %cst_56 : f32 to vector<32x128xf32>
      %164 = arith.select %162, %158, %163 : vector<32x128xi1>, vector<32x128xf32>
      %cst_57 = arith.constant dense<0.000000e+00> : vector<32xf32>
      %165 = vector.multi_reduction <add>, %164, %cst_57 [1] : vector<32x128xf32> to vector<32xf32>
      %166 = vector.shape_cast %165 : vector<32xf32> to vector<32x1xf32>
      %167 = arith.mulf %164, %164 : vector<32x128xf32>
      %cst_58 = arith.constant dense<0.000000e+00> : vector<32xf32>
      %168 = vector.multi_reduction <add>, %167, %cst_58 [1] : vector<32x128xf32> to vector<32xf32>
      %169 = vector.shape_cast %168 : vector<32xf32> to vector<32x1xf32>
      %170 = vector.shape_cast %166 : vector<32x1xf32> to vector<1x32x1xf32>
      %cst_59 = arith.constant dense<0.000000e+00> : vector<1xf32>
      %171 = vector.multi_reduction <add>, %170, %cst_59 [1, 2] : vector<1x32x1xf32> to vector<1xf32>
      %172 = vector.shape_cast %171 : vector<1xf32> to vector<1x1x1xf32>
      %173 = vector.extract %172[0, 0, 0] : f32 from vector<1x1x1xf32>
      %cst_60 = arith.constant 9.765625E-4 : f32
      %174 = arith.mulf %173, %cst_60 : f32
      %175 = vector.shape_cast %169 : vector<32x1xf32> to vector<1x32x1xf32>
      %cst_61 = arith.constant dense<0.000000e+00> : vector<1xf32>
      %176 = vector.multi_reduction <add>, %175, %cst_61 [1, 2] : vector<1x32x1xf32> to vector<1xf32>
      %177 = vector.shape_cast %176 : vector<1xf32> to vector<1x1x1xf32>
      %178 = vector.extract %177[0, 0, 0] : f32 from vector<1x1x1xf32>
      %cst_62 = arith.constant 9.765625E-4 : f32
      %179 = arith.mulf %178, %cst_62 : f32
      %180 = arith.mulf %174, %174 : f32
      %181 = arith.subf %179, %180 : f32
      %cst_63 = arith.constant 0.000000e+00 : f32
      %182 = arith.maximumf %181, %cst_63 : f32
      %cst_64 = arith.constant 9.99999993E-9 : f32
      %183 = arith.addf %182, %cst_64 : f32
      %184 = math.rsqrt %183 : f32
      %185 = vector.broadcast %184 : f32 to vector<32x1xf32>
      %186 = arith.mulf %159, %185 : vector<32x1xf32>
      %187 = vector.broadcast %174 : f32 to vector<32x1xf32>
      %188 = arith.mulf %187, %186 : vector<32x1xf32>
      %189 = arith.subf %160, %188 : vector<32x1xf32>
      %190 = vector.broadcast %186 : vector<32x1xf32> to vector<32x128xf32>
      %191 = arith.mulf %158, %190 : vector<32x128xf32>
      %192 = vector.broadcast %189 : vector<32x1xf32> to vector<32x128xf32>
      %193 = arith.addf %191, %192 : vector<32x128xf32>
      %194 = arith.index_cast %77 : i32 to index
      %c0_65 = arith.constant 0 : index
      %c0_66 = arith.constant 0 : index
      %195 = vector.load %arg7[%194, %c0_65, %c0_66] : memref<4x32x32xf32, #tpu.memory_space<vmem>>, vector<1x32x32xf32>
      %196 = vector.shape_cast %195 : vector<1x32x32xf32> to vector<32x32xf32>
      %cst_67 = arith.constant dense<0.000000e+00> : vector<32x128xf32>
      %197 = tpu.matmul %196, %193, %cst_67 {dimension_numbers = #tpu.dot_dimension_numbers<[1], [0], [0], [1], [0, 0, 1, 1], [], []>, precision = #tpu.contract_precision<fp32>} : vector<32x32xf32>, vector<32x128xf32>, vector<32x128xf32> -> vector<32x128xf32>
      %198 = arith.index_cast %77 : i32 to index
      %c0_68 = arith.constant 0 : index
      %c0_69 = arith.constant 0 : index
      %199 = vector.load %arg8[%198, %c0_68, %c0_69] : memref<4x32x1xf32, #tpu.memory_space<vmem>>, vector<1x32x1xf32>
      %200 = vector.shape_cast %199 : vector<1x32x1xf32> to vector<32x1xf32>
      %201 = vector.broadcast %200 : vector<32x1xf32> to vector<32x128xf32>
      %202 = arith.addf %197, %201 : vector<32x128xf32>
      %203 = vector.extract_strided_slice %202 {offsets = [0, 0], sizes = [16, 128], strides = [1, 1]} : vector<32x128xf32> to vector<16x128xf32>
      %204 = arith.addf %arg14, %203 : vector<16x128xf32>
      %205 = vector.extract_strided_slice %202 {offsets = [16, 0], sizes = [16, 128], strides = [1, 1]} : vector<32x128xf32> to vector<16x128xf32>
      %206 = arith.addf %arg15, %205 : vector<16x128xf32>
      %c2_i32_70 = arith.constant 2 : i32
      %207 = arith.muli %arg13, %c2_i32_70 : i32
      %c1_i32_71 = arith.constant 1 : i32
      %208 = arith.addi %207, %c1_i32_71 : i32
      %209 = arith.index_cast %208 : i32 to index
      %c0_72 = arith.constant 0 : index
      %c0_73 = arith.constant 0 : index
      %210 = vector.load %arg6[%209, %c0_72, %c0_73] : memref<4x32x11xf32, #tpu.memory_space<vmem>>, vector<1x32x11xf32>
      %211 = vector.shape_cast %210 : vector<1x32x11xf32> to vector<32x11xf32>
      %212 = arith.index_cast %208 : i32 to index
      %c0_74 = arith.constant 0 : index
      %c0_75 = arith.constant 0 : index
      %213 = vector.load %arg5[%212, %c0_74, %c0_75] : memref<4x32x16xf32, #tpu.memory_space<vmem>>, vector<1x32x16xf32>
      %214 = vector.shape_cast %213 : vector<1x32x16xf32> to vector<32x16xf32>
      %cst_76 = arith.constant dense<0.000000e+00> : vector<32x128xf32>
      %215 = tpu.matmul %214, %204, %cst_76 {dimension_numbers = #tpu.dot_dimension_numbers<[1], [0], [0], [1], [0, 0, 1, 1], [], []>, precision = #tpu.contract_precision<fp32>} : vector<32x16xf32>, vector<16x128xf32>, vector<32x128xf32> -> vector<32x128xf32>
      %216 = vector.extract_strided_slice %211 {offsets = [0, 0], sizes = [32, 1], strides = [1, 1]} : vector<32x11xf32> to vector<32x1xf32>
      %217 = vector.broadcast %216 : vector<32x1xf32> to vector<32x128xf32>
      %218 = arith.addf %215, %217 : vector<32x128xf32>
      %219 = vector.extract_strided_slice %211 {offsets = [0, 9], sizes = [32, 1], strides = [1, 1]} : vector<32x11xf32> to vector<32x1xf32>
      %cst_77 = arith.constant 0.000000e+00 : f32
      %220 = vector.broadcast %cst_77 : f32 to vector<32x128xf32>
      %221 = arith.cmpf oge, %218, %220 : vector<32x128xf32>
      %222 = vector.broadcast %219 : vector<32x1xf32> to vector<32x128xf32>
      %223 = arith.mulf %222, %218 : vector<32x128xf32>
      %224 = arith.select %221, %218, %223 : vector<32x128xi1>, vector<32x128xf32>
      %225 = vector.extract_strided_slice %211 {offsets = [0, 1], sizes = [32, 1], strides = [1, 1]} : vector<32x11xf32> to vector<32x1xf32>
      %226 = vector.extract_strided_slice %211 {offsets = [0, 2], sizes = [32, 1], strides = [1, 1]} : vector<32x11xf32> to vector<32x1xf32>
      %cst_78 = arith.constant 0.000000e+00 : f32
      %227 = vector.shape_cast %2 : vector<1x128xi1> to vector<1x128xi1>
      %228 = vector.broadcast %227 : vector<1x128xi1> to vector<32x128xi1>
      %229 = vector.broadcast %cst_78 : f32 to vector<32x128xf32>
      %230 = arith.select %228, %224, %229 : vector<32x128xi1>, vector<32x128xf32>
      %cst_79 = arith.constant dense<0.000000e+00> : vector<32xf32>
      %231 = vector.multi_reduction <add>, %230, %cst_79 [1] : vector<32x128xf32> to vector<32xf32>
      %232 = vector.shape_cast %231 : vector<32xf32> to vector<32x1xf32>
      %233 = arith.mulf %230, %230 : vector<32x128xf32>
      %cst_80 = arith.constant dense<0.000000e+00> : vector<32xf32>
      %234 = vector.multi_reduction <add>, %233, %cst_80 [1] : vector<32x128xf32> to vector<32xf32>
      %235 = vector.shape_cast %234 : vector<32xf32> to vector<32x1xf32>
      %236 = vector.shape_cast %232 : vector<32x1xf32> to vector<1x32x1xf32>
      %cst_81 = arith.constant dense<0.000000e+00> : vector<1xf32>
      %237 = vector.multi_reduction <add>, %236, %cst_81 [1, 2] : vector<1x32x1xf32> to vector<1xf32>
      %238 = vector.shape_cast %237 : vector<1xf32> to vector<1x1x1xf32>
      %239 = vector.extract %238[0, 0, 0] : f32 from vector<1x1x1xf32>
      %cst_82 = arith.constant 9.765625E-4 : f32
      %240 = arith.mulf %239, %cst_82 : f32
      %241 = vector.shape_cast %235 : vector<32x1xf32> to vector<1x32x1xf32>
      %cst_83 = arith.constant dense<0.000000e+00> : vector<1xf32>
      %242 = vector.multi_reduction <add>, %241, %cst_83 [1, 2] : vector<1x32x1xf32> to vector<1xf32>
      %243 = vector.shape_cast %242 : vector<1xf32> to vector<1x1x1xf32>
      %244 = vector.extract %243[0, 0, 0] : f32 from vector<1x1x1xf32>
      %cst_84 = arith.constant 9.765625E-4 : f32
      %245 = arith.mulf %244, %cst_84 : f32
      %246 = arith.mulf %240, %240 : f32
      %247 = arith.subf %245, %246 : f32
      %cst_85 = arith.constant 0.000000e+00 : f32
      %248 = arith.maximumf %247, %cst_85 : f32
      %cst_86 = arith.constant 9.99999993E-9 : f32
      %249 = arith.addf %248, %cst_86 : f32
      %250 = math.rsqrt %249 : f32
      %251 = vector.broadcast %250 : f32 to vector<32x1xf32>
      %252 = arith.mulf %225, %251 : vector<32x1xf32>
      %253 = vector.broadcast %240 : f32 to vector<32x1xf32>
      %254 = arith.mulf %253, %252 : vector<32x1xf32>
      %255 = arith.subf %226, %254 : vector<32x1xf32>
      %256 = vector.broadcast %252 : vector<32x1xf32> to vector<32x128xf32>
      %257 = arith.mulf %224, %256 : vector<32x128xf32>
      %258 = vector.broadcast %255 : vector<32x1xf32> to vector<32x128xf32>
      %259 = arith.addf %257, %258 : vector<32x128xf32>
      %c2_i32_87 = arith.constant 2 : i32
      %260 = tpu.dynamic_rotate %259 by %c2_i32_87 dim 1 : vector<32x128xf32>, i32 -> vector<32x128xf32>
      %cst_88 = arith.constant 0.000000e+00 : f32
      %261 = vector.shape_cast %8 : vector<1x128xi1> to vector<1x128xi1>
      %262 = vector.broadcast %261 : vector<1x128xi1> to vector<32x128xi1>
      %263 = vector.broadcast %cst_88 : f32 to vector<32x128xf32>
      %264 = arith.select %262, %260, %263 : vector<32x128xi1>, vector<32x128xf32>
      %265 = vector.extract_strided_slice %211 {offsets = [0, 3], sizes = [32, 1], strides = [1, 1]} : vector<32x11xf32> to vector<32x1xf32>
      %266 = vector.broadcast %265 : vector<32x1xf32> to vector<32x128xf32>
      %267 = arith.mulf %266, %264 : vector<32x128xf32>
      %268 = vector.extract_strided_slice %211 {offsets = [0, 4], sizes = [32, 1], strides = [1, 1]} : vector<32x11xf32> to vector<32x1xf32>
      %269 = vector.broadcast %268 : vector<32x1xf32> to vector<32x128xf32>
      %270 = arith.mulf %269, %259 : vector<32x128xf32>
      %271 = arith.addf %267, %270 : vector<32x128xf32>
      %c126_i32 = arith.constant 126 : i32
      %272 = tpu.dynamic_rotate %259 by %c126_i32 dim 1 : vector<32x128xf32>, i32 -> vector<32x128xf32>
      %cst_89 = arith.constant 0.000000e+00 : f32
      %273 = vector.shape_cast %10 : vector<1x128xi1> to vector<1x128xi1>
      %274 = vector.broadcast %273 : vector<1x128xi1> to vector<32x128xi1>
      %275 = vector.broadcast %cst_89 : f32 to vector<32x128xf32>
      %276 = arith.select %274, %272, %275 : vector<32x128xi1>, vector<32x128xf32>
      %277 = vector.extract_strided_slice %211 {offsets = [0, 5], sizes = [32, 1], strides = [1, 1]} : vector<32x11xf32> to vector<32x1xf32>
      %278 = vector.broadcast %277 : vector<32x1xf32> to vector<32x128xf32>
      %279 = arith.mulf %278, %276 : vector<32x128xf32>
      %280 = arith.addf %271, %279 : vector<32x128xf32>
      %281 = vector.extract_strided_slice %211 {offsets = [0, 6], sizes = [32, 1], strides = [1, 1]} : vector<32x11xf32> to vector<32x1xf32>
      %282 = vector.broadcast %281 : vector<32x1xf32> to vector<32x128xf32>
      %283 = arith.addf %280, %282 : vector<32x128xf32>
      %284 = vector.extract_strided_slice %211 {offsets = [0, 10], sizes = [32, 1], strides = [1, 1]} : vector<32x11xf32> to vector<32x1xf32>
      %cst_90 = arith.constant 0.000000e+00 : f32
      %285 = vector.broadcast %cst_90 : f32 to vector<32x128xf32>
      %286 = arith.cmpf oge, %283, %285 : vector<32x128xf32>
      %287 = vector.broadcast %284 : vector<32x1xf32> to vector<32x128xf32>
      %288 = arith.mulf %287, %283 : vector<32x128xf32>
      %289 = arith.select %286, %283, %288 : vector<32x128xi1>, vector<32x128xf32>
      %290 = vector.extract_strided_slice %211 {offsets = [0, 7], sizes = [32, 1], strides = [1, 1]} : vector<32x11xf32> to vector<32x1xf32>
      %291 = vector.extract_strided_slice %211 {offsets = [0, 8], sizes = [32, 1], strides = [1, 1]} : vector<32x11xf32> to vector<32x1xf32>
      %cst_91 = arith.constant 0.000000e+00 : f32
      %292 = vector.shape_cast %2 : vector<1x128xi1> to vector<1x128xi1>
      %293 = vector.broadcast %292 : vector<1x128xi1> to vector<32x128xi1>
      %294 = vector.broadcast %cst_91 : f32 to vector<32x128xf32>
      %295 = arith.select %293, %289, %294 : vector<32x128xi1>, vector<32x128xf32>
      %cst_92 = arith.constant dense<0.000000e+00> : vector<32xf32>
      %296 = vector.multi_reduction <add>, %295, %cst_92 [1] : vector<32x128xf32> to vector<32xf32>
      %297 = vector.shape_cast %296 : vector<32xf32> to vector<32x1xf32>
      %298 = arith.mulf %295, %295 : vector<32x128xf32>
      %cst_93 = arith.constant dense<0.000000e+00> : vector<32xf32>
      %299 = vector.multi_reduction <add>, %298, %cst_93 [1] : vector<32x128xf32> to vector<32xf32>
      %300 = vector.shape_cast %299 : vector<32xf32> to vector<32x1xf32>
      %301 = vector.shape_cast %297 : vector<32x1xf32> to vector<1x32x1xf32>
      %cst_94 = arith.constant dense<0.000000e+00> : vector<1xf32>
      %302 = vector.multi_reduction <add>, %301, %cst_94 [1, 2] : vector<1x32x1xf32> to vector<1xf32>
      %303 = vector.shape_cast %302 : vector<1xf32> to vector<1x1x1xf32>
      %304 = vector.extract %303[0, 0, 0] : f32 from vector<1x1x1xf32>
      %cst_95 = arith.constant 9.765625E-4 : f32
      %305 = arith.mulf %304, %cst_95 : f32
      %306 = vector.shape_cast %300 : vector<32x1xf32> to vector<1x32x1xf32>
      %cst_96 = arith.constant dense<0.000000e+00> : vector<1xf32>
      %307 = vector.multi_reduction <add>, %306, %cst_96 [1, 2] : vector<1x32x1xf32> to vector<1xf32>
      %308 = vector.shape_cast %307 : vector<1xf32> to vector<1x1x1xf32>
      %309 = vector.extract %308[0, 0, 0] : f32 from vector<1x1x1xf32>
      %cst_97 = arith.constant 9.765625E-4 : f32
      %310 = arith.mulf %309, %cst_97 : f32
      %311 = arith.mulf %305, %305 : f32
      %312 = arith.subf %310, %311 : f32
      %cst_98 = arith.constant 0.000000e+00 : f32
      %313 = arith.maximumf %312, %cst_98 : f32
      %cst_99 = arith.constant 9.99999993E-9 : f32
      %314 = arith.addf %313, %cst_99 : f32
      %315 = math.rsqrt %314 : f32
      %316 = vector.broadcast %315 : f32 to vector<32x1xf32>
      %317 = arith.mulf %290, %316 : vector<32x1xf32>
      %318 = vector.broadcast %305 : f32 to vector<32x1xf32>
      %319 = arith.mulf %318, %317 : vector<32x1xf32>
      %320 = arith.subf %291, %319 : vector<32x1xf32>
      %321 = vector.broadcast %317 : vector<32x1xf32> to vector<32x128xf32>
      %322 = arith.mulf %289, %321 : vector<32x128xf32>
      %323 = vector.broadcast %320 : vector<32x1xf32> to vector<32x128xf32>
      %324 = arith.addf %322, %323 : vector<32x128xf32>
      %325 = arith.index_cast %208 : i32 to index
      %c0_100 = arith.constant 0 : index
      %c0_101 = arith.constant 0 : index
      %326 = vector.load %arg7[%325, %c0_100, %c0_101] : memref<4x32x32xf32, #tpu.memory_space<vmem>>, vector<1x32x32xf32>
      %327 = vector.shape_cast %326 : vector<1x32x32xf32> to vector<32x32xf32>
      %cst_102 = arith.constant dense<0.000000e+00> : vector<32x128xf32>
      %328 = tpu.matmul %327, %324, %cst_102 {dimension_numbers = #tpu.dot_dimension_numbers<[1], [0], [0], [1], [0, 0, 1, 1], [], []>, precision = #tpu.contract_precision<fp32>} : vector<32x32xf32>, vector<32x128xf32>, vector<32x128xf32> -> vector<32x128xf32>
      %329 = arith.index_cast %208 : i32 to index
      %c0_103 = arith.constant 0 : index
      %c0_104 = arith.constant 0 : index
      %330 = vector.load %arg8[%329, %c0_103, %c0_104] : memref<4x32x1xf32, #tpu.memory_space<vmem>>, vector<1x32x1xf32>
      %331 = vector.shape_cast %330 : vector<1x32x1xf32> to vector<32x1xf32>
      %332 = vector.broadcast %331 : vector<32x1xf32> to vector<32x128xf32>
      %333 = arith.addf %328, %332 : vector<32x128xf32>
      %334 = vector.extract_strided_slice %333 {offsets = [0, 0], sizes = [16, 128], strides = [1, 1]} : vector<32x128xf32> to vector<16x128xf32>
      %335 = arith.addf %204, %334 : vector<16x128xf32>
      %336 = vector.extract_strided_slice %333 {offsets = [16, 0], sizes = [16, 128], strides = [1, 1]} : vector<32x128xf32> to vector<16x128xf32>
      %337 = arith.addf %206, %336 : vector<16x128xf32>
      scf.yield %335, %337 : vector<16x128xf32>, vector<16x128xf32>
    }
    %c2_i32_21 = arith.constant 2 : i32
    %c0_22 = arith.constant 0 : index
    %c0_23 = arith.constant 0 : index
    %56 = vector.load %arg9[%c0_22, %c0_23] : memref<1x1xf32, #tpu.memory_space<vmem>>, vector<1x1xf32>
    %cst_24 = arith.constant 0.000000e+00 : f32
    %57 = vector.broadcast %cst_24 : f32 to vector<16x128xf32>
    %58 = arith.cmpf oge, %55#1, %57 : vector<16x128xf32>
    %59 = vector.broadcast %56 : vector<1x1xf32> to vector<16x128xf32>
    %60 = arith.mulf %59, %55#1 : vector<16x128xf32>
    %61 = arith.select %58, %55#1, %60 : vector<16x128xi1>, vector<16x128xf32>
    %c0_25 = arith.constant 0 : index
    %c0_26 = arith.constant 0 : index
    %62 = vector.load %arg10[%c0_25, %c0_26] : memref<32x16xf32, #tpu.memory_space<vmem>>, vector<32x16xf32>
    %cst_27 = arith.constant dense<0.000000e+00> : vector<32x128xf32>
    %63 = tpu.matmul %62, %61, %cst_27 {dimension_numbers = #tpu.dot_dimension_numbers<[1], [0], [0], [1], [0, 0, 1, 1], [], []>, precision = #tpu.contract_precision<fp32>} : vector<32x16xf32>, vector<16x128xf32>, vector<32x128xf32> -> vector<32x128xf32>
    %c0_28 = arith.constant 0 : index
    %c0_29 = arith.constant 0 : index
    %64 = vector.load %arg11[%c0_28, %c0_29] : memref<32x1xf32, #tpu.memory_space<vmem>>, vector<32x1xf32>
    %65 = vector.broadcast %64 : vector<32x1xf32> to vector<32x128xf32>
    %66 = arith.addf %63, %65 : vector<32x128xf32>
    %cst_30 = arith.constant 0.000000e+00 : f32
    %67 = vector.broadcast %cst_30 : f32 to vector<32x128xf32>
    %68 = arith.maximumf %66, %67 : vector<32x128xf32>
    %cst_31 = arith.constant 0.000000e+00 : f32
    %69 = vector.shape_cast %2 : vector<1x128xi1> to vector<1x128xi1>
    %70 = vector.broadcast %69 : vector<1x128xi1> to vector<32x128xi1>
    %71 = vector.broadcast %cst_31 : f32 to vector<32x128xf32>
    %72 = arith.select %70, %68, %71 : vector<32x128xi1>, vector<32x128xf32>
    %c0_32 = arith.constant 0 : index
    %c0_33 = arith.constant 0 : index
    %c0_34 = arith.constant 0 : index
    %73 = vector.load %arg12[%c0_32, %c0_33, %c0_34] : memref<1x32x128xf32, #tpu.memory_space<vmem>>, vector<1x32x128xf32>
    %74 = vector.shape_cast %73 : vector<1x32x128xf32> to vector<32x128xf32>
    %75 = vector.shape_cast %72 : vector<32x128xf32> to vector<1x32x128xf32>
    tpu.vector_store %arg12[%c0_32, %c0_33, %c0_34], %75 {strides = array<i32>} : memref<1x32x128xf32, #tpu.memory_space<vmem>>, vector<1x32x128xf32>,
    return
  }
  func.func @transform_0(%arg0: i32) -> (i32, i32, i32) {
    %c0_i32 = arith.constant 0 : i32
    %c0_i32_0 = arith.constant 0 : i32
    %c0_i32_1 = arith.constant 0 : i32
    return %arg0, %c0_i32, %c0_i32_0 : i32, i32, i32
  }
  func.func @transform_1(%arg0: i32) -> (i32, i32) {
    %c0_i32 = arith.constant 0 : i32
    %c0_i32_0 = arith.constant 0 : i32
    %c0_i32_1 = arith.constant 0 : i32
    return %c0_i32, %c0_i32_0 : i32, i32
  }
  func.func @transform_2(%arg0: i32) -> (i32, i32) {
    %c0_i32 = arith.constant 0 : i32
    %c0_i32_0 = arith.constant 0 : i32
    %c0_i32_1 = arith.constant 0 : i32
    return %c0_i32, %c0_i32_0 : i32, i32
  }
  func.func @transform_3(%arg0: i32) -> (i32, i32) {
    %c0_i32 = arith.constant 0 : i32
    %c0_i32_0 = arith.constant 0 : i32
    %c0_i32_1 = arith.constant 0 : i32
    return %c0_i32, %c0_i32_0 : i32, i32
  }
  func.func @transform_4(%arg0: i32) -> (i32, i32, i32) {
    %c0_i32 = arith.constant 0 : i32
    %c0_i32_0 = arith.constant 0 : i32
    %c0_i32_1 = arith.constant 0 : i32
    %c0_i32_2 = arith.constant 0 : i32
    return %c0_i32, %c0_i32_0, %c0_i32_1 : i32, i32, i32
  }
  func.func @transform_5(%arg0: i32) -> (i32, i32, i32) {
    %c0_i32 = arith.constant 0 : i32
    %c0_i32_0 = arith.constant 0 : i32
    %c0_i32_1 = arith.constant 0 : i32
    %c0_i32_2 = arith.constant 0 : i32
    return %c0_i32, %c0_i32_0, %c0_i32_1 : i32, i32, i32
  }
  func.func @transform_6(%arg0: i32) -> (i32, i32, i32) {
    %c0_i32 = arith.constant 0 : i32
    %c0_i32_0 = arith.constant 0 : i32
    %c0_i32_1 = arith.constant 0 : i32
    %c0_i32_2 = arith.constant 0 : i32
    return %c0_i32, %c0_i32_0, %c0_i32_1 : i32, i32, i32
  }
  func.func @transform_7(%arg0: i32) -> (i32, i32, i32) {
    %c0_i32 = arith.constant 0 : i32
    %c0_i32_0 = arith.constant 0 : i32
    %c0_i32_1 = arith.constant 0 : i32
    %c0_i32_2 = arith.constant 0 : i32
    return %c0_i32, %c0_i32_0, %c0_i32_1 : i32, i32, i32
  }
  func.func @transform_8(%arg0: i32) -> (i32, i32) {
    %c0_i32 = arith.constant 0 : i32
    %c0_i32_0 = arith.constant 0 : i32
    %c0_i32_1 = arith.constant 0 : i32
    return %c0_i32, %c0_i32_0 : i32, i32
  }
  func.func @transform_9(%arg0: i32) -> (i32, i32) {
    %c0_i32 = arith.constant 0 : i32
    %c0_i32_0 = arith.constant 0 : i32
    %c0_i32_1 = arith.constant 0 : i32
    return %c0_i32, %c0_i32_0 : i32, i32
  }
  func.func @transform_10(%arg0: i32) -> (i32, i32) {
    %c0_i32 = arith.constant 0 : i32
    %c0_i32_0 = arith.constant 0 : i32
    %c0_i32_1 = arith.constant 0 : i32
    return %c0_i32, %c0_i32_0 : i32, i32
  }
  func.func @transform_11(%arg0: i32) -> (i32, i32, i32) {
    %c0_i32 = arith.constant 0 : i32
    %c0_i32_0 = arith.constant 0 : i32
    %c0_i32_1 = arith.constant 0 : i32
    return %arg0, %c0_i32, %c0_i32_0 : i32, i32, i32
  }
}

module attributes {stable_mosaic.version = 11 : i64} {
  func.func @tdconvnet_kernel(%arg0: i32, %arg1: memref<1x16x128xf32, #tpu.memory_space<vmem>>, %arg2: memref<16x2xf32, #tpu.memory_space<vmem>>, %arg3: memref<16x16xf32, #tpu.memory_space<vmem>>, %arg4: memref<16x1xf32, #tpu.memory_space<vmem>>, %arg5: memref<4x32x16xf32, #tpu.memory_space<vmem>>, %arg6: memref<4x32x11xf32, #tpu.memory_space<vmem>>, %arg7: memref<4x32x32xf32, #tpu.memory_space<vmem>>, %arg8: memref<4x32x1xf32, #tpu.memory_space<vmem>>, %arg9: memref<1x1xf32, #tpu.memory_space<vmem>>, %arg10: memref<32x16xf32, #tpu.memory_space<vmem>>, %arg11: memref<32x1xf32, #tpu.memory_space<vmem>>, %arg12: memref<1x32x128xf32, #tpu.memory_space<vmem>>) attributes {dimension_semantics = [#tpu.dimension_semantics<parallel>], iteration_bounds = array<i64: 2>, scalar_prefetch = 0 : i64, scratch_operands = 0 : i64, tpu.core_type = #tpu.core_type<tc>, window_params = [{transform_indices = @transform_0, window_bounds = array<i64: 1, 16, 128>}, {pipeline_mode = #tpu.pipeline_mode<synchronous>, transform_indices = @transform_1, window_bounds = array<i64: 16, 2>}, {pipeline_mode = #tpu.pipeline_mode<synchronous>, transform_indices = @transform_2, window_bounds = array<i64: 16, 16>}, {pipeline_mode = #tpu.pipeline_mode<synchronous>, transform_indices = @transform_3, window_bounds = array<i64: 16, 1>}, {pipeline_mode = #tpu.pipeline_mode<synchronous>, transform_indices = @transform_4, window_bounds = array<i64: 4, 32, 16>}, {pipeline_mode = #tpu.pipeline_mode<synchronous>, transform_indices = @transform_5, window_bounds = array<i64: 4, 32, 11>}, {pipeline_mode = #tpu.pipeline_mode<synchronous>, transform_indices = @transform_6, window_bounds = array<i64: 4, 32, 32>}, {pipeline_mode = #tpu.pipeline_mode<synchronous>, transform_indices = @transform_7, window_bounds = array<i64: 4, 32, 1>}, {pipeline_mode = #tpu.pipeline_mode<synchronous>, transform_indices = @transform_8, window_bounds = array<i64: 1, 1>}, {pipeline_mode = #tpu.pipeline_mode<synchronous>, transform_indices = @transform_9, window_bounds = array<i64: 32, 16>}, {pipeline_mode = #tpu.pipeline_mode<synchronous>, transform_indices = @transform_10, window_bounds = array<i64: 32, 1>}, {transform_indices = @transform_11, window_bounds = array<i64: 1, 32, 128>}]} {
    %0 = tpu.iota {dimensions = array<i32: 1>} : vector<1x128xi32>
    %c32_i32 = arith.constant 32 : i32
    %1 = vector.broadcast %c32_i32 : i32 to vector<1x128xi32>
    %2 = arith.cmpi slt, %0, %1 : vector<1x128xi32>
    %c1_i32 = arith.constant 1 : i32
    %3 = vector.broadcast %c1_i32 : i32 to vector<1x128xi32>
    %4 = arith.cmpi sge, %0, %3 : vector<1x128xi32>
    %c31_i32 = arith.constant 31 : i32
    %5 = vector.broadcast %c31_i32 : i32 to vector<1x128xi32>
    %6 = arith.cmpi slt, %0, %5 : vector<1x128xi32>
    %c2_i32 = arith.constant 2 : i32
    %7 = vector.broadcast %c2_i32 : i32 to vector<1x128xi32>
    %8 = arith.cmpi sge, %0, %7 : vector<1x128xi32>
    %c30_i32 = arith.constant 30 : i32
    %9 = vector.broadcast %c30_i32 : i32 to vector<1x128xi32>
    %10 = arith.cmpi slt, %0, %9 : vector<1x128xi32>
    %c0 = arith.constant 0 : index
    %c0_0 = arith.constant 0 : index
    %c0_1 = arith.constant 0 : index
    %11 = vector.load %arg1[%c0, %c0_0, %c0_1] : memref<1x16x128xf32, #tpu.memory_space<vmem>>, vector<1x16x128xf32>
    %12 = vector.shape_cast %11 : vector<1x16x128xf32> to vector<16x128xf32>
    %c0_2 = arith.constant 0 : index
    %c0_3 = arith.constant 0 : index
    %13 = vector.load %arg2[%c0_2, %c0_3] : memref<16x2xf32, #tpu.memory_space<vmem>>, vector<16x1xf32>
    %c0_4 = arith.constant 0 : index
    %c1 = arith.constant 1 : index
    %14 = vector.load %arg2[%c0_4, %c1] : memref<16x2xf32, #tpu.memory_space<vmem>>, vector<16x1xf32>
    %cst = arith.constant 0.000000e+00 : f32
    %15 = vector.shape_cast %2 : vector<1x128xi1> to vector<1x128xi1>
    %16 = vector.broadcast %15 : vector<1x128xi1> to vector<16x128xi1>
    %17 = vector.broadcast %cst : f32 to vector<16x128xf32>
    %18 = arith.select %16, %12, %17 : vector<16x128xi1>, vector<16x128xf32>
    %cst_5 = arith.constant dense<0.000000e+00> : vector<16xf32>
    %19 = vector.multi_reduction <add>, %18, %cst_5 [1] : vector<16x128xf32> to vector<16xf32>
    %20 = vector.shape_cast %19 : vector<16xf32> to vector<16x1xf32>
    %21 = arith.mulf %18, %18 : vector<16x128xf32>
    %cst_6 = arith.constant dense<0.000000e+00> : vector<16xf32>
    %22 = vector.multi_reduction <add>, %21, %cst_6 [1] : vector<16x128xf32> to vector<16xf32>
    %23 = vector.shape_cast %22 : vector<16xf32> to vector<16x1xf32>
    %24 = vector.shape_cast %20 : vector<16x1xf32> to vector<1x16x1xf32>
    %cst_7 = arith.constant dense<0.000000e+00> : vector<1xf32>
    %25 = vector.multi_reduction <add>, %24, %cst_7 [1, 2] : vector<1x16x1xf32> to vector<1xf32>
    %26 = vector.shape_cast %25 : vector<1xf32> to vector<1x1x1xf32>
    %27 = vector.extract %26[0, 0, 0] : f32 from vector<1x1x1xf32>
    %cst_8 = arith.constant 0.001953125 : f32
    %28 = arith.mulf %27, %cst_8 : f32
    %29 = vector.shape_cast %23 : vector<16x1xf32> to vector<1x16x1xf32>
    %cst_9 = arith.constant dense<0.000000e+00> : vector<1xf32>
    %30 = vector.multi_reduction <add>, %29, %cst_9 [1, 2] : vector<1x16x1xf32> to vector<1xf32>
    %31 = vector.shape_cast %30 : vector<1xf32> to vector<1x1x1xf32>
    %32 = vector.extract %31[0, 0, 0] : f32 from vector<1x1x1xf32>
    %cst_10 = arith.constant 0.001953125 : f32
    %33 = arith.mulf %32, %cst_10 : f32
    %34 = arith.mulf %28, %28 : f32
    %35 = arith.subf %33, %34 : f32
    %cst_11 = arith.constant 0.000000e+00 : f32
    %36 = arith.maximumf %35, %cst_11 : f32
    %cst_12 = arith.constant 9.99999993E-9 : f32
    %37 = arith.addf %36, %cst_12 : f32
    %38 = math.rsqrt %37 : f32
    %39 = vector.broadcast %38 : f32 to vector<16x1xf32>
    %40 = arith.mulf %13, %39 : vector<16x1xf32>
    %41 = vector.broadcast %28 : f32 to vector<16x1xf32>
    %42 = arith.mulf %41, %40 : vector<16x1xf32>
    %43 = arith.subf %14, %42 : vector<16x1xf32>
    %44 = vector.broadcast %40 : vector<16x1xf32> to vector<16x128xf32>
    %45 = arith.mulf %12, %44 : vector<16x128xf32>
    %46 = vector.broadcast %43 : vector<16x1xf32> to vector<16x128xf32>
    %47 = arith.addf %45, %46 : vector<16x128xf32>
    %c0_13 = arith.constant 0 : index
    %c0_14 = arith.constant 0 : index
    %48 = vector.load %arg3[%c0_13, %c0_14] : memref<16x16xf32, #tpu.memory_space<vmem>>, vector<16x16xf32>
    %cst_15 = arith.constant dense<0.000000e+00> : vector<16x128xf32>
    %49 = tpu.matmul %48, %47, %cst_15 {dimension_numbers = #tpu.dot_dimension_numbers<[1], [0], [0], [1], [0, 0, 1, 1], [], []>} : vector<16x16xf32>, vector<16x128xf32>, vector<16x128xf32> -> vector<16x128xf32>
    %c0_16 = arith.constant 0 : index
    %c0_17 = arith.constant 0 : index
    %50 = vector.load %arg4[%c0_16, %c0_17] : memref<16x1xf32, #tpu.memory_space<vmem>>, vector<16x1xf32>
    %51 = vector.broadcast %50 : vector<16x1xf32> to vector<16x128xf32>
    %52 = arith.addf %49, %51 : vector<16x128xf32>
    %cst_18 = arith.constant 0.000000e+00 : f32
    %53 = vector.broadcast %cst_18 : f32 to vector<16x128xf32>
    %c0_i32 = arith.constant 0 : i32
    %c2_i32_19 = arith.constant 2 : i32
    %54 = arith.addi %c0_i32, %c2_i32_19 : i32
    %c1_i32_20 = arith.constant 1 : i32
    %55:2 = scf.for %arg13 = %c0_i32 to %54 step %c1_i32_20 iter_args(%arg14 = %52, %arg15 = %53) -> (vector<16x128xf32>, vector<16x128xf32>)  : i32 {
      %c2_i32_35 = arith.constant 2 : i32
      %76 = arith.muli %arg13, %c2_i32_35 : i32
      %c0_i32_36 = arith.constant 0 : i32
      %77 = arith.addi %76, %c0_i32_36 : i32
      %78 = arith.index_cast %77 : i32 to index
      %c0_37 = arith.constant 0 : index
      %c0_38 = arith.constant 0 : index
      %79 = vector.load %arg6[%78, %c0_37, %c0_38] : memref<4x32x11xf32, #tpu.memory_space<vmem>>, vector<1x32x11xf32>
      %80 = vector.shape_cast %79 : vector<1x32x11xf32> to vector<32x11xf32>
      %81 = arith.index_cast %77 : i32 to index
      %c0_39 = arith.constant 0 : index
      %c0_40 = arith.constant 0 : index
      %82 = vector.load %arg5[%81, %c0_39, %c0_40] : memref<4x32x16xf32, #tpu.memory_space<vmem>>, vector<1x32x16xf32>
      %83 = vector.shape_cast %82 : vector<1x32x16xf32> to vector<32x16xf32>
      %cst_41 = arith.constant dense<0.000000e+00> : vector<32x128xf32>
      %84 = tpu.matmul %83, %arg14, %cst_41 {dimension_numbers = #tpu.dot_dimension_numbers<[1], [0], [0], [1], [0, 0, 1, 1], [], []>} : vector<32x16xf32>, vector<16x128xf32>, vector<32x128xf32> -> vector<32x128xf32>
      %85 = vector.extract_strided_slice %80 {offsets = [0, 0], sizes = [32, 1], strides = [1, 1]} : vector<32x11xf32> to vector<32x1xf32>
      %86 = vector.broadcast %85 : vector<32x1xf32> to vector<32x128xf32>
      %87 = arith.addf %84, %86 : vector<32x128xf32>
      %88 = vector.extract_strided_slice %80 {offsets = [0, 9], sizes = [32, 1], strides = [1, 1]} : vector<32x11xf32> to vector<32x1xf32>
      %cst_42 = arith.constant 0.000000e+00 : f32
      %89 = vector.broadcast %cst_42 : f32 to vector<32x128xf32>
      %90 = arith.cmpf oge, %87, %89 : vector<32x128xf32>
      %91 = vector.broadcast %88 : vector<32x1xf32> to vector<32x128xf32>
      %92 = arith.mulf %91, %87 : vector<32x128xf32>
      %93 = arith.select %90, %87, %92 : vector<32x128xi1>, vector<32x128xf32>
      %94 = vector.extract_strided_slice %80 {offsets = [0, 1], sizes = [32, 1], strides = [1, 1]} : vector<32x11xf32> to vector<32x1xf32>
      %95 = vector.extract_strided_slice %80 {offsets = [0, 2], sizes = [32, 1], strides = [1, 1]} : vector<32x11xf32> to vector<32x1xf32>
      %cst_43 = arith.constant 0.000000e+00 : f32
      %96 = vector.shape_cast %2 : vector<1x128xi1> to vector<1x128xi1>
      %97 = vector.broadcast %96 : vector<1x128xi1> to vector<32x128xi1>
      %98 = vector.broadcast %cst_43 : f32 to vector<32x128xf32>
      %99 = arith.select %97, %93, %98 : vector<32x128xi1>, vector<32x128xf32>
      %cst_44 = arith.constant dense<0.000000e+00> : vector<32xf32>
      %100 = vector.multi_reduction <add>, %99, %cst_44 [1] : vector<32x128xf32> to vector<32xf32>
      %101 = vector.shape_cast %100 : vector<32xf32> to vector<32x1xf32>
      %102 = arith.mulf %99, %99 : vector<32x128xf32>
      %cst_45 = arith.constant dense<0.000000e+00> : vector<32xf32>
      %103 = vector.multi_reduction <add>, %102, %cst_45 [1] : vector<32x128xf32> to vector<32xf32>
      %104 = vector.shape_cast %103 : vector<32xf32> to vector<32x1xf32>
      %105 = vector.shape_cast %101 : vector<32x1xf32> to vector<1x32x1xf32>
      %cst_46 = arith.constant dense<0.000000e+00> : vector<1xf32>
      %106 = vector.multi_reduction <add>, %105, %cst_46 [1, 2] : vector<1x32x1xf32> to vector<1xf32>
      %107 = vector.shape_cast %106 : vector<1xf32> to vector<1x1x1xf32>
      %108 = vector.extract %107[0, 0, 0] : f32 from vector<1x1x1xf32>
      %cst_47 = arith.constant 9.765625E-4 : f32
      %109 = arith.mulf %108, %cst_47 : f32
      %110 = vector.shape_cast %104 : vector<32x1xf32> to vector<1x32x1xf32>
      %cst_48 = arith.constant dense<0.000000e+00> : vector<1xf32>
      %111 = vector.multi_reduction <add>, %110, %cst_48 [1, 2] : vector<1x32x1xf32> to vector<1xf32>
      %112 = vector.shape_cast %111 : vector<1xf32> to vector<1x1x1xf32>
      %113 = vector.extract %112[0, 0, 0] : f32 from vector<1x1x1xf32>
      %cst_49 = arith.constant 9.765625E-4 : f32
      %114 = arith.mulf %113, %cst_49 : f32
      %115 = arith.mulf %109, %109 : f32
      %116 = arith.subf %114, %115 : f32
      %cst_50 = arith.constant 0.000000e+00 : f32
      %117 = arith.maximumf %116, %cst_50 : f32
      %cst_51 = arith.constant 9.99999993E-9 : f32
      %118 = arith.addf %117, %cst_51 : f32
      %119 = math.rsqrt %118 : f32
      %120 = vector.broadcast %119 : f32 to vector<32x1xf32>
      %121 = arith.mulf %94, %120 : vector<32x1xf32>
      %122 = vector.broadcast %109 : f32 to vector<32x1xf32>
      %123 = arith.mulf %122, %121 : vector<32x1xf32>
      %124 = arith.subf %95, %123 : vector<32x1xf32>
      %125 = vector.broadcast %121 : vector<32x1xf32> to vector<32x128xf32>
      %126 = arith.mulf %93, %125 : vector<32x128xf32>
      %127 = vector.broadcast %124 : vector<32x1xf32> to vector<32x128xf32>
      %128 = arith.addf %126, %127 : vector<32x128xf32>
      %c1_i32_52 = arith.constant 1 : i32
      %129 = tpu.dynamic_rotate %128 by %c1_i32_52 dim 1 : vector<32x128xf32>, i32 -> vector<32x128xf32>
      %cst_53 = arith.constant 0.000000e+00 : f32
      %130 = vector.shape_cast %4 : vector<1x128xi1> to vector<1x128xi1>
      %131 = vector.broadcast %130 : vector<1x128xi1> to vector<32x128xi1>
      %132 = vector.broadcast %cst_53 : f32 to vector<32x128xf32>
      %133 = arith.select %131, %129, %132 : vector<32x128xi1>, vector<32x128xf32>
      %134 = vector.extract_strided_slice %80 {offsets = [0, 3], sizes = [32, 1], strides = [1, 1]} : vector<32x11xf32> to vector<32x1xf32>
      %135 = vector.broadcast %134 : vector<32x1xf32> to vector<32x128xf32>
      %136 = arith.mulf %135, %133 : vector<32x128xf32>
      %137 = vector.extract_strided_slice %80 {offsets = [0, 4], sizes = [32, 1], strides = [1, 1]} : vector<32x11xf32> to vector<32x1xf32>
      %138 = vector.broadcast %137 : vector<32x1xf32> to vector<32x128xf32>
      %139 = arith.mulf %138, %128 : vector<32x128xf32>
      %140 = arith.addf %136, %139 : vector<32x128xf32>
      %c127_i32 = arith.constant 127 : i32
      %141 = tpu.dynamic_rotate %128 by %c127_i32 dim 1 : vector<32x128xf32>, i32 -> vector<32x128xf32>
      %cst_54 = arith.constant 0.000000e+00 : f32
      %142 = vector.shape_cast %6 : vector<1x128xi1> to vector<1x128xi1>
      %143 = vector.broadcast %142 : vector<1x128xi1> to vector<32x128xi1>
      %144 = vector.broadcast %cst_54 : f32 to vector<32x128xf32>
      %145 = arith.select %143, %141, %144 : vector<32x128xi1>, vector<32x128xf32>
      %146 = vector.extract_strided_slice %80 {offsets = [0, 5], sizes = [32, 1], strides = [1, 1]} : vector<32x11xf32> to vector<32x1xf32>
      %147 = vector.broadcast %146 : vector<32x1xf32> to vector<32x128xf32>
      %148 = arith.mulf %147, %145 : vector<32x128xf32>
      %149 = arith.addf %140, %148 : vector<32x128xf32>
      %150 = vector.extract_strided_slice %80 {offsets = [0, 6], sizes = [32, 1], strides = [1, 1]} : vector<32x11xf32> to vector<32x1xf32>
      %151 = vector.broadcast %150 : vector<32x1xf32> to vector<32x128xf32>
      %152 = arith.addf %149, %151 : vector<32x128xf32>
      %153 = vector.extract_strided_slice %80 {offsets = [0, 10], sizes = [32, 1], strides = [1, 1]} : vector<32x11xf32> to vector<32x1xf32>
      %cst_55 = arith.constant 0.000000e+00 : f32
      %154 = vector.broadcast %cst_55 : f32 to vector<32x128xf32>
      %155 = arith.cmpf oge, %152, %154 : vector<32x128xf32>
      %156 = vector.broadcast %153 : vector<32x1xf32> to vector<32x128xf32>
      %157 = arith.mulf %156, %152 : vector<32x128xf32>
      %158 = arith.select %155, %152, %157 : vector<32x128xi1>, vector<32x128xf32>
      %159 = vector.extract_strided_slice %80 {offsets = [0, 7], sizes = [32, 1], strides = [1, 1]} : vector<32x11xf32> to vector<32x1xf32>
      %160 = vector.extract_strided_slice %80 {offsets = [0, 8], sizes = [32, 1], strides = [1, 1]} : vector<32x11xf32> to vector<32x1xf32>
      %cst_56 = arith.constant 0.000000e+00 : f32
      %161 = vector.shape_cast %2 : vector<1x128xi1> to vector<1x128xi1>
      %162 = vector.broadcast %161 : vector<1x128xi1> to vector<32x128xi1>
      %163 = vector.broadcast %cst_56 : f32 to vector<32x128xf32>
      %164 = arith.select %162, %158, %163 : vector<32x128xi1>, vector<32x128xf32>
      %cst_57 = arith.constant dense<0.000000e+00> : vector<32xf32>
      %165 = vector.multi_reduction <add>, %164, %cst_57 [1] : vector<32x128xf32> to vector<32xf32>
      %166 = vector.shape_cast %165 : vector<32xf32> to vector<32x1xf32>
      %167 = arith.mulf %164, %164 : vector<32x128xf32>
      %cst_58 = arith.constant dense<0.000000e+00> : vector<32xf32>
      %168 = vector.multi_reduction <add>, %167, %cst_58 [1] : vector<32x128xf32> to vector<32xf32>
      %169 = vector.shape_cast %168 : vector<32xf32> to vector<32x1xf32>
      %170 = vector.shape_cast %166 : vector<32x1xf32> to vector<1x32x1xf32>
      %cst_59 = arith.constant dense<0.000000e+00> : vector<1xf32>
      %171 = vector.multi_reduction <add>, %170, %cst_59 [1, 2] : vector<1x32x1xf32> to vector<1xf32>
      %172 = vector.shape_cast %171 : vector<1xf32> to vector<1x1x1xf32>
      %173 = vector.extract %172[0, 0, 0] : f32 from vector<1x1x1xf32>
      %cst_60 = arith.constant 9.765625E-4 : f32
      %174 = arith.mulf %173, %cst_60 : f32
      %175 = vector.shape_cast %169 : vector<32x1xf32> to vector<1x32x1xf32>
      %cst_61 = arith.constant dense<0.000000e+00> : vector<1xf32>
      %176 = vector.multi_reduction <add>, %175, %cst_61 [1, 2] : vector<1x32x1xf32> to vector<1xf32>
      %177 = vector.shape_cast %176 : vector<1xf32> to vector<1x1x1xf32>
      %178 = vector.extract %177[0, 0, 0] : f32 from vector<1x1x1xf32>
      %cst_62 = arith.constant 9.765625E-4 : f32
      %179 = arith.mulf %178, %cst_62 : f32
      %180 = arith.mulf %174, %174 : f32
      %181 = arith.subf %179, %180 : f32
      %cst_63 = arith.constant 0.000000e+00 : f32
      %182 = arith.maximumf %181, %cst_63 : f32
      %cst_64 = arith.constant 9.99999993E-9 : f32
      %183 = arith.addf %182, %cst_64 : f32
      %184 = math.rsqrt %183 : f32
      %185 = vector.broadcast %184 : f32 to vector<32x1xf32>
      %186 = arith.mulf %159, %185 : vector<32x1xf32>
      %187 = vector.broadcast %174 : f32 to vector<32x1xf32>
      %188 = arith.mulf %187, %186 : vector<32x1xf32>
      %189 = arith.subf %160, %188 : vector<32x1xf32>
      %190 = vector.broadcast %186 : vector<32x1xf32> to vector<32x128xf32>
      %191 = arith.mulf %158, %190 : vector<32x128xf32>
      %192 = vector.broadcast %189 : vector<32x1xf32> to vector<32x128xf32>
      %193 = arith.addf %191, %192 : vector<32x128xf32>
      %194 = arith.index_cast %77 : i32 to index
      %c0_65 = arith.constant 0 : index
      %c0_66 = arith.constant 0 : index
      %195 = vector.load %arg7[%194, %c0_65, %c0_66] : memref<4x32x32xf32, #tpu.memory_space<vmem>>, vector<1x32x32xf32>
      %196 = vector.shape_cast %195 : vector<1x32x32xf32> to vector<32x32xf32>
      %cst_67 = arith.constant dense<0.000000e+00> : vector<32x128xf32>
      %197 = tpu.matmul %196, %193, %cst_67 {dimension_numbers = #tpu.dot_dimension_numbers<[1], [0], [0], [1], [0, 0, 1, 1], [], []>} : vector<32x32xf32>, vector<32x128xf32>, vector<32x128xf32> -> vector<32x128xf32>
      %198 = arith.index_cast %77 : i32 to index
      %c0_68 = arith.constant 0 : index
      %c0_69 = arith.constant 0 : index
      %199 = vector.load %arg8[%198, %c0_68, %c0_69] : memref<4x32x1xf32, #tpu.memory_space<vmem>>, vector<1x32x1xf32>
      %200 = vector.shape_cast %199 : vector<1x32x1xf32> to vector<32x1xf32>
      %201 = vector.broadcast %200 : vector<32x1xf32> to vector<32x128xf32>
      %202 = arith.addf %197, %201 : vector<32x128xf32>
      %203 = vector.extract_strided_slice %202 {offsets = [0, 0], sizes = [16, 128], strides = [1, 1]} : vector<32x128xf32> to vector<16x128xf32>
      %204 = arith.addf %arg14, %203 : vector<16x128xf32>
      %205 = vector.extract_strided_slice %202 {offsets = [16, 0], sizes = [16, 128], strides = [1, 1]} : vector<32x128xf32> to vector<16x128xf32>
      %206 = arith.addf %arg15, %205 : vector<16x128xf32>
      %c2_i32_70 = arith.constant 2 : i32
      %207 = arith.muli %arg13, %c2_i32_70 : i32
      %c1_i32_71 = arith.constant 1 : i32
      %208 = arith.addi %207, %c1_i32_71 : i32
      %209 = arith.index_cast %208 : i32 to index
      %c0_72 = arith.constant 0 : index
      %c0_73 = arith.constant 0 : index
      %210 = vector.load %arg6[%209, %c0_72, %c0_73] : memref<4x32x11xf32, #tpu.memory_space<vmem>>, vector<1x32x11xf32>
      %211 = vector.shape_cast %210 : vector<1x32x11xf32> to vector<32x11xf32>
      %212 = arith.index_cast %208 : i32 to index
      %c0_74 = arith.constant 0 : index
      %c0_75 = arith.constant 0 : index
      %213 = vector.load %arg5[%212, %c0_74, %c0_75] : memref<4x32x16xf32, #tpu.memory_space<vmem>>, vector<1x32x16xf32>
      %214 = vector.shape_cast %213 : vector<1x32x16xf32> to vector<32x16xf32>
      %cst_76 = arith.constant dense<0.000000e+00> : vector<32x128xf32>
      %215 = tpu.matmul %214, %204, %cst_76 {dimension_numbers = #tpu.dot_dimension_numbers<[1], [0], [0], [1], [0, 0, 1, 1], [], []>} : vector<32x16xf32>, vector<16x128xf32>, vector<32x128xf32> -> vector<32x128xf32>
      %216 = vector.extract_strided_slice %211 {offsets = [0, 0], sizes = [32, 1], strides = [1, 1]} : vector<32x11xf32> to vector<32x1xf32>
      %217 = vector.broadcast %216 : vector<32x1xf32> to vector<32x128xf32>
      %218 = arith.addf %215, %217 : vector<32x128xf32>
      %219 = vector.extract_strided_slice %211 {offsets = [0, 9], sizes = [32, 1], strides = [1, 1]} : vector<32x11xf32> to vector<32x1xf32>
      %cst_77 = arith.constant 0.000000e+00 : f32
      %220 = vector.broadcast %cst_77 : f32 to vector<32x128xf32>
      %221 = arith.cmpf oge, %218, %220 : vector<32x128xf32>
      %222 = vector.broadcast %219 : vector<32x1xf32> to vector<32x128xf32>
      %223 = arith.mulf %222, %218 : vector<32x128xf32>
      %224 = arith.select %221, %218, %223 : vector<32x128xi1>, vector<32x128xf32>
      %225 = vector.extract_strided_slice %211 {offsets = [0, 1], sizes = [32, 1], strides = [1, 1]} : vector<32x11xf32> to vector<32x1xf32>
      %226 = vector.extract_strided_slice %211 {offsets = [0, 2], sizes = [32, 1], strides = [1, 1]} : vector<32x11xf32> to vector<32x1xf32>
      %cst_78 = arith.constant 0.000000e+00 : f32
      %227 = vector.shape_cast %2 : vector<1x128xi1> to vector<1x128xi1>
      %228 = vector.broadcast %227 : vector<1x128xi1> to vector<32x128xi1>
      %229 = vector.broadcast %cst_78 : f32 to vector<32x128xf32>
      %230 = arith.select %228, %224, %229 : vector<32x128xi1>, vector<32x128xf32>
      %cst_79 = arith.constant dense<0.000000e+00> : vector<32xf32>
      %231 = vector.multi_reduction <add>, %230, %cst_79 [1] : vector<32x128xf32> to vector<32xf32>
      %232 = vector.shape_cast %231 : vector<32xf32> to vector<32x1xf32>
      %233 = arith.mulf %230, %230 : vector<32x128xf32>
      %cst_80 = arith.constant dense<0.000000e+00> : vector<32xf32>
      %234 = vector.multi_reduction <add>, %233, %cst_80 [1] : vector<32x128xf32> to vector<32xf32>
      %235 = vector.shape_cast %234 : vector<32xf32> to vector<32x1xf32>
      %236 = vector.shape_cast %232 : vector<32x1xf32> to vector<1x32x1xf32>
      %cst_81 = arith.constant dense<0.000000e+00> : vector<1xf32>
      %237 = vector.multi_reduction <add>, %236, %cst_81 [1, 2] : vector<1x32x1xf32> to vector<1xf32>
      %238 = vector.shape_cast %237 : vector<1xf32> to vector<1x1x1xf32>
      %239 = vector.extract %238[0, 0, 0] : f32 from vector<1x1x1xf32>
      %cst_82 = arith.constant 9.765625E-4 : f32
      %240 = arith.mulf %239, %cst_82 : f32
      %241 = vector.shape_cast %235 : vector<32x1xf32> to vector<1x32x1xf32>
      %cst_83 = arith.constant dense<0.000000e+00> : vector<1xf32>
      %242 = vector.multi_reduction <add>, %241, %cst_83 [1, 2] : vector<1x32x1xf32> to vector<1xf32>
      %243 = vector.shape_cast %242 : vector<1xf32> to vector<1x1x1xf32>
      %244 = vector.extract %243[0, 0, 0] : f32 from vector<1x1x1xf32>
      %cst_84 = arith.constant 9.765625E-4 : f32
      %245 = arith.mulf %244, %cst_84 : f32
      %246 = arith.mulf %240, %240 : f32
      %247 = arith.subf %245, %246 : f32
      %cst_85 = arith.constant 0.000000e+00 : f32
      %248 = arith.maximumf %247, %cst_85 : f32
      %cst_86 = arith.constant 9.99999993E-9 : f32
      %249 = arith.addf %248, %cst_86 : f32
      %250 = math.rsqrt %249 : f32
      %251 = vector.broadcast %250 : f32 to vector<32x1xf32>
      %252 = arith.mulf %225, %251 : vector<32x1xf32>
      %253 = vector.broadcast %240 : f32 to vector<32x1xf32>
      %254 = arith.mulf %253, %252 : vector<32x1xf32>
      %255 = arith.subf %226, %254 : vector<32x1xf32>
      %256 = vector.broadcast %252 : vector<32x1xf32> to vector<32x128xf32>
      %257 = arith.mulf %224, %256 : vector<32x128xf32>
      %258 = vector.broadcast %255 : vector<32x1xf32> to vector<32x128xf32>
      %259 = arith.addf %257, %258 : vector<32x128xf32>
      %c2_i32_87 = arith.constant 2 : i32
      %260 = tpu.dynamic_rotate %259 by %c2_i32_87 dim 1 : vector<32x128xf32>, i32 -> vector<32x128xf32>
      %cst_88 = arith.constant 0.000000e+00 : f32
      %261 = vector.shape_cast %8 : vector<1x128xi1> to vector<1x128xi1>
      %262 = vector.broadcast %261 : vector<1x128xi1> to vector<32x128xi1>
      %263 = vector.broadcast %cst_88 : f32 to vector<32x128xf32>
      %264 = arith.select %262, %260, %263 : vector<32x128xi1>, vector<32x128xf32>
      %265 = vector.extract_strided_slice %211 {offsets = [0, 3], sizes = [32, 1], strides = [1, 1]} : vector<32x11xf32> to vector<32x1xf32>
      %266 = vector.broadcast %265 : vector<32x1xf32> to vector<32x128xf32>
      %267 = arith.mulf %266, %264 : vector<32x128xf32>
      %268 = vector.extract_strided_slice %211 {offsets = [0, 4], sizes = [32, 1], strides = [1, 1]} : vector<32x11xf32> to vector<32x1xf32>
      %269 = vector.broadcast %268 : vector<32x1xf32> to vector<32x128xf32>
      %270 = arith.mulf %269, %259 : vector<32x128xf32>
      %271 = arith.addf %267, %270 : vector<32x128xf32>
      %c126_i32 = arith.constant 126 : i32
      %272 = tpu.dynamic_rotate %259 by %c126_i32 dim 1 : vector<32x128xf32>, i32 -> vector<32x128xf32>
      %cst_89 = arith.constant 0.000000e+00 : f32
      %273 = vector.shape_cast %10 : vector<1x128xi1> to vector<1x128xi1>
      %274 = vector.broadcast %273 : vector<1x128xi1> to vector<32x128xi1>
      %275 = vector.broadcast %cst_89 : f32 to vector<32x128xf32>
      %276 = arith.select %274, %272, %275 : vector<32x128xi1>, vector<32x128xf32>
      %277 = vector.extract_strided_slice %211 {offsets = [0, 5], sizes = [32, 1], strides = [1, 1]} : vector<32x11xf32> to vector<32x1xf32>
      %278 = vector.broadcast %277 : vector<32x1xf32> to vector<32x128xf32>
      %279 = arith.mulf %278, %276 : vector<32x128xf32>
      %280 = arith.addf %271, %279 : vector<32x128xf32>
      %281 = vector.extract_strided_slice %211 {offsets = [0, 6], sizes = [32, 1], strides = [1, 1]} : vector<32x11xf32> to vector<32x1xf32>
      %282 = vector.broadcast %281 : vector<32x1xf32> to vector<32x128xf32>
      %283 = arith.addf %280, %282 : vector<32x128xf32>
      %284 = vector.extract_strided_slice %211 {offsets = [0, 10], sizes = [32, 1], strides = [1, 1]} : vector<32x11xf32> to vector<32x1xf32>
      %cst_90 = arith.constant 0.000000e+00 : f32
      %285 = vector.broadcast %cst_90 : f32 to vector<32x128xf32>
      %286 = arith.cmpf oge, %283, %285 : vector<32x128xf32>
      %287 = vector.broadcast %284 : vector<32x1xf32> to vector<32x128xf32>
      %288 = arith.mulf %287, %283 : vector<32x128xf32>
      %289 = arith.select %286, %283, %288 : vector<32x128xi1>, vector<32x128xf32>
      %290 = vector.extract_strided_slice %211 {offsets = [0, 7], sizes = [32, 1], strides = [1, 1]} : vector<32x11xf32> to vector<32x1xf32>
      %291 = vector.extract_strided_slice %211 {offsets = [0, 8], sizes = [32, 1], strides = [1, 1]} : vector<32x11xf32> to vector<32x1xf32>
      %cst_91 = arith.constant 0.000000e+00 : f32
      %292 = vector.shape_cast %2 : vector<1x128xi1> to vector<1x128xi1>
      %293 = vector.broadcast %292 : vector<1x128xi1> to vector<32x128xi1>
      %294 = vector.broadcast %cst_91 : f32 to vector<32x128xf32>
      %295 = arith.select %293, %289, %294 : vector<32x128xi1>, vector<32x128xf32>
      %cst_92 = arith.constant dense<0.000000e+00> : vector<32xf32>
      %296 = vector.multi_reduction <add>, %295, %cst_92 [1] : vector<32x128xf32> to vector<32xf32>
      %297 = vector.shape_cast %296 : vector<32xf32> to vector<32x1xf32>
      %298 = arith.mulf %295, %295 : vector<32x128xf32>
      %cst_93 = arith.constant dense<0.000000e+00> : vector<32xf32>
      %299 = vector.multi_reduction <add>, %298, %cst_93 [1] : vector<32x128xf32> to vector<32xf32>
      %300 = vector.shape_cast %299 : vector<32xf32> to vector<32x1xf32>
      %301 = vector.shape_cast %297 : vector<32x1xf32> to vector<1x32x1xf32>
      %cst_94 = arith.constant dense<0.000000e+00> : vector<1xf32>
      %302 = vector.multi_reduction <add>, %301, %cst_94 [1, 2] : vector<1x32x1xf32> to vector<1xf32>
      %303 = vector.shape_cast %302 : vector<1xf32> to vector<1x1x1xf32>
      %304 = vector.extract %303[0, 0, 0] : f32 from vector<1x1x1xf32>
      %cst_95 = arith.constant 9.765625E-4 : f32
      %305 = arith.mulf %304, %cst_95 : f32
      %306 = vector.shape_cast %300 : vector<32x1xf32> to vector<1x32x1xf32>
      %cst_96 = arith.constant dense<0.000000e+00> : vector<1xf32>
      %307 = vector.multi_reduction <add>, %306, %cst_96 [1, 2] : vector<1x32x1xf32> to vector<1xf32>
      %308 = vector.shape_cast %307 : vector<1xf32> to vector<1x1x1xf32>
      %309 = vector.extract %308[0, 0, 0] : f32 from vector<1x1x1xf32>
      %cst_97 = arith.constant 9.765625E-4 : f32
      %310 = arith.mulf %309, %cst_97 : f32
      %311 = arith.mulf %305, %305 : f32
      %312 = arith.subf %310, %311 : f32
      %cst_98 = arith.constant 0.000000e+00 : f32
      %313 = arith.maximumf %312, %cst_98 : f32
      %cst_99 = arith.constant 9.99999993E-9 : f32
      %314 = arith.addf %313, %cst_99 : f32
      %315 = math.rsqrt %314 : f32
      %316 = vector.broadcast %315 : f32 to vector<32x1xf32>
      %317 = arith.mulf %290, %316 : vector<32x1xf32>
      %318 = vector.broadcast %305 : f32 to vector<32x1xf32>
      %319 = arith.mulf %318, %317 : vector<32x1xf32>
      %320 = arith.subf %291, %319 : vector<32x1xf32>
      %321 = vector.broadcast %317 : vector<32x1xf32> to vector<32x128xf32>
      %322 = arith.mulf %289, %321 : vector<32x128xf32>
      %323 = vector.broadcast %320 : vector<32x1xf32> to vector<32x128xf32>
      %324 = arith.addf %322, %323 : vector<32x128xf32>
      %325 = arith.index_cast %208 : i32 to index
      %c0_100 = arith.constant 0 : index
      %c0_101 = arith.constant 0 : index
      %326 = vector.load %arg7[%325, %c0_100, %c0_101] : memref<4x32x32xf32, #tpu.memory_space<vmem>>, vector<1x32x32xf32>
      %327 = vector.shape_cast %326 : vector<1x32x32xf32> to vector<32x32xf32>
      %cst_102 = arith.constant dense<0.000000e+00> : vector<32x128xf32>
      %328 = tpu.matmul %327, %324, %cst_102 {dimension_numbers = #tpu.dot_dimension_numbers<[1], [0], [0], [1], [0, 0, 1, 1], [], []>} : vector<32x32xf32>, vector<32x128xf32>, vector<32x128xf32> -> vector<32x128xf32>
      %329 = arith.index_cast %208 : i32 to index
      %c0_103 = arith.constant 0 : index
      %c0_104 = arith.constant 0 : index
      %330 = vector.load %arg8[%329, %c0_103, %c0_104] : memref<4x32x1xf32, #tpu.memory_space<vmem>>, vector<1x32x1xf32>
      %331 = vector.shape_cast %330 : vector<1x32x1xf32> to vector<32x1xf32>
      %332 = vector.broadcast %331 : vector<32x1xf32> to vector<32x128xf32>
      %333 = arith.addf %328, %332 : vector<32x128xf32>
      %334 = vector.extract_strided_slice %333 {offsets = [0, 0], sizes = [16, 128], strides = [1, 1]} : vector<32x128xf32> to vector<16x128xf32>
      %335 = arith.addf %204, %334 : vector<16x128xf32>
      %336 = vector.extract_strided_slice %333 {offsets = [16, 0], sizes = [16, 128], strides = [1, 1]} : vector<32x128xf32> to vector<16x128xf32>
      %337 = arith.addf %206, %336 : vector<16x128xf32>
      scf.yield %335, %337 : vector<16x128xf32>, vector<16x128xf32>
    }
    %c2_i32_21 = arith.constant 2 : i32
    %c0_22 = arith.constant 0 : index
    %c0_23 = arith.constant 0 : index
    %56 = vector.load %arg9[%c0_22, %c0_23] : memref<1x1xf32, #tpu.memory_space<vmem>>, vector<1x1xf32>
    %cst_24 = arith.constant 0.000000e+00 : f32
    %57 = vector.broadcast %cst_24 : f32 to vector<16x128xf32>
    %58 = arith.cmpf oge, %55#1, %57 : vector<16x128xf32>
    %59 = vector.broadcast %56 : vector<1x1xf32> to vector<16x128xf32>
    %60 = arith.mulf %59, %55#1 : vector<16x128xf32>
    %61 = arith.select %58, %55#1, %60 : vector<16x128xi1>, vector<16x128xf32>
    %c0_25 = arith.constant 0 : index
    %c0_26 = arith.constant 0 : index
    %62 = vector.load %arg10[%c0_25, %c0_26] : memref<32x16xf32, #tpu.memory_space<vmem>>, vector<32x16xf32>
    %cst_27 = arith.constant dense<0.000000e+00> : vector<32x128xf32>
    %63 = tpu.matmul %62, %61, %cst_27 {dimension_numbers = #tpu.dot_dimension_numbers<[1], [0], [0], [1], [0, 0, 1, 1], [], []>} : vector<32x16xf32>, vector<16x128xf32>, vector<32x128xf32> -> vector<32x128xf32>
    %c0_28 = arith.constant 0 : index
    %c0_29 = arith.constant 0 : index
    %64 = vector.load %arg11[%c0_28, %c0_29] : memref<32x1xf32, #tpu.memory_space<vmem>>, vector<32x1xf32>
    %65 = vector.broadcast %64 : vector<32x1xf32> to vector<32x128xf32>
    %66 = arith.addf %63, %65 : vector<32x128xf32>
    %cst_30 = arith.constant 0.000000e+00 : f32
    %67 = vector.broadcast %cst_30 : f32 to vector<32x128xf32>
    %68 = arith.maximumf %66, %67 : vector<32x128xf32>
    %cst_31 = arith.constant 0.000000e+00 : f32
    %69 = vector.shape_cast %2 : vector<1x128xi1> to vector<1x128xi1>
    %70 = vector.broadcast %69 : vector<1x128xi1> to vector<32x128xi1>
    %71 = vector.broadcast %cst_31 : f32 to vector<32x128xf32>
    %72 = arith.select %70, %68, %71 : vector<32x128xi1>, vector<32x128xf32>
    %c0_32 = arith.constant 0 : index
    %c0_33 = arith.constant 0 : index
    %c0_34 = arith.constant 0 : index
    %73 = vector.load %arg12[%c0_32, %c0_33, %c0_34] : memref<1x32x128xf32, #tpu.memory_space<vmem>>, vector<1x32x128xf32>
    %74 = vector.shape_cast %73 : vector<1x32x128xf32> to vector<32x128xf32>
    %75 = vector.shape_cast %72 : vector<32x128xf32> to vector<1x32x128xf32>
    tpu.vector_store %arg12[%c0_32, %c0_33, %c0_34], %75 {strides = array<i32>} : memref<1x32x128xf32, #tpu.memory_space<vmem>>, vector<1x32x128xf32>,
    return
  }
  func.func @transform_0(%arg0: i32) -> (i32, i32, i32) {
    %c0_i32 = arith.constant 0 : i32
    %c0_i32_0 = arith.constant 0 : i32
    %c0_i32_1 = arith.constant 0 : i32
    return %arg0, %c0_i32, %c0_i32_0 : i32, i32, i32
  }
  func.func @transform_1(%arg0: i32) -> (i32, i32) {
    %c0_i32 = arith.constant 0 : i32
    %c0_i32_0 = arith.constant 0 : i32
    %c0_i32_1 = arith.constant 0 : i32
    return %c0_i32, %c0_i32_0 : i32, i32
  }
  func.func @transform_2(%arg0: i32) -> (i32, i32) {
    %c0_i32 = arith.constant 0 : i32
    %c0_i32_0 = arith.constant 0 : i32
    %c0_i32_1 = arith.constant 0 : i32
    return %c0_i32, %c0_i32_0 : i32, i32
  }
  func.func @transform_3(%arg0: i32) -> (i32, i32) {
    %c0_i32 = arith.constant 0 : i32
    %c0_i32_0 = arith.constant 0 : i32
    %c0_i32_1 = arith.constant 0 : i32
    return %c0_i32, %c0_i32_0 : i32, i32
  }
  func.func @transform_4(%arg0: i32) -> (i32, i32, i32) {
    %c0_i32 = arith.constant 0 : i32
    %c0_i32_0 = arith.constant 0 : i32
    %c0_i32_1 = arith.constant 0 : i32
    %c0_i32_2 = arith.constant 0 : i32
    return %c0_i32, %c0_i32_0, %c0_i32_1 : i32, i32, i32
  }
  func.func @transform_5(%arg0: i32) -> (i32, i32, i32) {
    %c0_i32 = arith.constant 0 : i32
    %c0_i32_0 = arith.constant 0 : i32
    %c0_i32_1 = arith.constant 0 : i32
    %c0_i32_2 = arith.constant 0 : i32
    return %c0_i32, %c0_i32_0, %c0_i32_1 : i32, i32, i32
  }
  func.func @transform_6(%arg0: i32) -> (i32, i32, i32) {
    %c0_i32 = arith.constant 0 : i32
    %c0_i32_0 = arith.constant 0 : i32
    %c0_i32_1 = arith.constant 0 : i32
    %c0_i32_2 = arith.constant 0 : i32
    return %c0_i32, %c0_i32_0, %c0_i32_1 : i32, i32, i32
  }
  func.func @transform_7(%arg0: i32) -> (i32, i32, i32) {
    %c0_i32 = arith.constant 0 : i32
    %c0_i32_0 = arith.constant 0 : i32
    %c0_i32_1 = arith.constant 0 : i32
    %c0_i32_2 = arith.constant 0 : i32
    return %c0_i32, %c0_i32_0, %c0_i32_1 : i32, i32, i32
  }
  func.func @transform_8(%arg0: i32) -> (i32, i32) {
    %c0_i32 = arith.constant 0 : i32
    %c0_i32_0 = arith.constant 0 : i32
    %c0_i32_1 = arith.constant 0 : i32
    return %c0_i32, %c0_i32_0 : i32, i32
  }
  func.func @transform_9(%arg0: i32) -> (i32, i32) {
    %c0_i32 = arith.constant 0 : i32
    %c0_i32_0 = arith.constant 0 : i32
    %c0_i32_1 = arith.constant 0 : i32
    return %c0_i32, %c0_i32_0 : i32, i32
  }
  func.func @transform_10(%arg0: i32) -> (i32, i32) {
    %c0_i32 = arith.constant 0 : i32
    %c0_i32_0 = arith.constant 0 : i32
    %c0_i32_1 = arith.constant 0 : i32
    return %c0_i32, %c0_i32_0 : i32, i32
  }
  func.func @transform_11(%arg0: i32) -> (i32, i32, i32) {
    %c0_i32 = arith.constant 0 : i32
    %c0_i32_0 = arith.constant 0 : i32
    %c0_i32_1 = arith.constant 0 : i32
    return %arg0, %c0_i32, %c0_i32_0 : i32, i32, i32
  }
}

</mosaic_0001>

<llo_original>
// kernel: tpu_custom_call.1
$region0: #{tpu_custom_call.1}
  #allocation0 [shape = 'u32[]', space=smem, size = 0x4, offset = 0x4, fixed_abs, tag = 'smem constant byte address 0x4 - core index']
  #allocation1 [shape = 'u32[72,128]{1,0:T(1,128)}', space=vmem, size = 0x9000, scoped, tag = 'internal scratch']
  #allocation2 [shape = 'f32[1,1]{1,0:T(1,128)S(1)}', space=vmem, size = 0x200, scoped, tag = 'scoped memory for tpu_custom_call.1']
  %s0 = inlined_call_operand.vmem [shape: f32[2,16,128], index: 0, kind: input, shape index: {}]
  %s1 = inlined_call_operand.vmem [shape: f32[16,2], index: 1, kind: input, shape index: {}]
  %s2 = inlined_call_operand.vmem [shape: f32[16,16], index: 2, kind: input, shape index: {}]
  %s3 = inlined_call_operand.vmem [shape: f32[16,1], index: 3, kind: input, shape index: {}]
  %s4 = inlined_call_operand.vmem [shape: f32[4,32,16], index: 4, kind: input, shape index: {}]
  %s5 = inlined_call_operand.vmem [shape: f32[4,32,11], index: 5, kind: input, shape index: {}]
  %s6 = inlined_call_operand.vmem [shape: f32[4,32,32], index: 6, kind: input, shape index: {}]
  %s7 = inlined_call_operand.vmem [shape: f32[4,32,1], index: 7, kind: input, shape index: {}]
  %s8 = inlined_call_operand.<no memory space> [shape: f32[1,1], index: 8, kind: input, shape index: {}]
  %s9 = inlined_call_operand.vmem [shape: f32[32,16], index: 9, kind: input, shape index: {}]
  %s10 = inlined_call_operand.vmem [shape: f32[32,1], index: 10, kind: input, shape index: {}]
  %s11 = inlined_call_operand.hbm [shape: f32[2,32,128], index: 11, kind: output, shape index: {}]
  %s12 = sld [smem:[#allocation0]]
  $region84: #{tpu_custom_call.1} parent=0
    _
  %s14 = ssub.s32 1, %s12
  %s15 = scalar_select 0, %s14, %s12
  %v16 = vstv %s8
  %17 = vst [vmem:[#allocation2] sm:$0x1] %v16
  $region1: #{tpu_custom_call.1} parent=0
    #allocation3 [shape = 'u8[32768]{0}', space=vmem, size = 0x8000, scoped, tag = 'output window, operand 0']
    #allocation4 [shape = 's32[2]{0}', space=sflag, size = 0x8, scoped, tag = 'scoped memory for tpu_custom_call.1']
    %18 = vsyncpa [#allocation4], 0
    %s19 = scalar_lea.sflag [#allocation4], 1
    %20 = vsyncpa %s19, 0
    loop: start=0, step=1, limit=4
    $region2: #{tpu_custom_call.1} parent=1 // loop_pre_header
      _
    $region3: #{tpu_custom_call.1} parent=1 // loop_header
      %s22 = sphi 0, %s26
      %p23 = scmp.ge.s32.totalorder %s22, 4
      %s32 = sphi 0, %s34
      %s35 = sphi 0, %s32
      %s36 = sphi 0, %s35
      %s52 = sphi 0, %s36
      %s56 = sphi 0, %s56
      %s58 = sphi 0, %s56
      %s59 = sphi 0, %s58
      %s73 = sphi 0, %s59
      %s77 = sphi 0, %s77
      %s79 = sphi 0, %s77
      %s80 = sphi 0, %s79
      %s94 = sphi 0, %s80
      %s98 = sphi 0, %s98
      %s100 = sphi 0, %s98
      %s101 = sphi 0, %s100
      %s115 = sphi 0, %s101
      %s119 = sphi 0, %s119
      %s121 = sphi 0, %s119
      %s122 = sphi 0, %s121
      %s136 = sphi 0, %s122
      %s140 = sphi 0, %s140
      %s142 = sphi 0, %s140
      %s143 = sphi 0, %s142
      %s157 = sphi 0, %s143
      %s161 = sphi 0, %s161
      %s163 = sphi 0, %s161
      %s164 = sphi 0, %s163
      %s178 = sphi 0, %s164
      %s182 = sphi 0, %s182
      %s184 = sphi 0, %s182
      %s185 = sphi 0, %s184
      %s199 = sphi 0, %s185
      %s203 = sphi 0, %s203
      %s205 = sphi 0, %s203
      %s206 = sphi 0, %s205
      %s220 = sphi 0, %s206
      %s224 = sphi 0, %s224
      %s226 = sphi 0, %s224
      %s227 = sphi 0, %s226
      %s241 = sphi 0, %s227
      %s245 = sphi 0, %s245
      %s247 = sphi 0, %s245
      %s248 = sphi 0, %s247
      %s262 = sphi 0, %s248
      %s268 = sphi 0, %s270
      %s271 = sphi 0, %s268
      %s272 = sphi 0, %s271
      %s288 = sphi 0, %s272
    $region4: #{tpu_custom_call.1} parent=1 // loop_header_branch
      %25 = sbr.rel (%p23) target = $region8
    $region5: #{tpu_custom_call.1} parent=1 // loop_body
      %s27 = ssub.s32 %s22, 1
      %s28 = ssub.s32 %s22, 2
      %s29 = sadd.s32 %s22, 1
      %s30 = ssub.s32 %s22, %s29
      %p31 = scmp.eq.s32.totalorder %s30, 0
      %s33 = sadd.s32 %s32, 1
      %s34 = scalar_select %p31, %s32, %s33
      %p37 = pneg %p31
      %p38 = scmp.eq.s32.totalorder %s22, 1
      %p39 = por %p37, %p38
      %p40 = scmp.ne.s32.totalorder %s32, %s35
      %p41 = scmp.eq.s32.totalorder %s22, 0
      %p42 = por %p40, %p41
      %p43 = scmp.ne.s32.totalorder %s32, %s35
      %p44 = scmp.eq.s32.totalorder %s27, 1
      %p45 = por %p43, %p44
      %p46 = scmp.ne.s32.totalorder %s35, %s36
      %p47 = scmp.eq.s32.totalorder %s27, 0
      %p48 = por %p46, %p47
      %p49 = scmp.ne.s32.totalorder %s35, %s36
      %p50 = scmp.eq.s32.totalorder %s28, 1
      %p51 = por %p49, %p50
      %p53 = scmp.ne.s32.totalorder %s36, %s52
      %p54 = scmp.eq.s32.totalorder %s28, 0
      %p55 = por %p53, %p54
      %s57 = sadd.s32 %s56, 1
      %p60 = scmp.eq.s32.totalorder %s22, 1
      %p61 = scmp.ne.s32.totalorder %s56, %s58
      %p62 = scmp.eq.s32.totalorder %s22, 0
      %p63 = por %p61, %p62
      %p64 = scmp.ne.s32.totalorder %s56, %s58
      %p65 = scmp.eq.s32.totalorder %s27, 1
      %p66 = por %p64, %p65
      %p67 = scmp.ne.s32.totalorder %s58, %s59
      %p68 = scmp.eq.s32.totalorder %s27, 0
      %p69 = por %p67, %p68
      %p70 = scmp.ne.s32.totalorder %s58, %s59
      %p71 = scmp.eq.s32.totalorder %s28, 1
      %p72 = por %p70, %p71
      %p74 = scmp.ne.s32.totalorder %s59, %s73
      %p75 = scmp.eq.s32.totalorder %s28, 0
      %p76 = por %p74, %p75
      %s78 = sadd.s32 %s77, 1
      %p81 = scmp.eq.s32.totalorder %s22, 1
      %p82 = scmp.ne.s32.totalorder %s77, %s79
      %p83 = scmp.eq.s32.totalorder %s22, 0
      %p84 = por %p82, %p83
      %p85 = scmp.ne.s32.totalorder %s77, %s79
      %p86 = scmp.eq.s32.totalorder %s27, 1
      %p87 = por %p85, %p86
      %p88 = scmp.ne.s32.totalorder %s79, %s80
      %p89 = scmp.eq.s32.totalorder %s27, 0
      %p90 = por %p88, %p89
      %p91 = scmp.ne.s32.totalorder %s79, %s80
      %p92 = scmp.eq.s32.totalorder %s28, 1
      %p93 = por %p91, %p92
      %p95 = scmp.ne.s32.totalorder %s80, %s94
      %p96 = scmp.eq.s32.totalorder %s28, 0
      %p97 = por %p95, %p96
      %s99 = sadd.s32 %s98, 1
      %p102 = scmp.eq.s32.totalorder %s22, 1
      %p103 = scmp.ne.s32.totalorder %s98, %s100
      %p104 = scmp.eq.s32.totalorder %s22, 0
      %p105 = por %p103, %p104
      %p106 = scmp.ne.s32.totalorder %s98, %s100
      %p107 = scmp.eq.s32.totalorder %s27, 1
      %p108 = por %p106, %p107
      %p109 = scmp.ne.s32.totalorder %s100, %s101
      %p110 = scmp.eq.s32.totalorder %s27, 0
      %p111 = por %p109, %p110
      %p112 = scmp.ne.s32.totalorder %s100, %s101
      %p113 = scmp.eq.s32.totalorder %s28, 1
      %p114 = por %p112, %p113
      %p116 = scmp.ne.s32.totalorder %s101, %s115
      %p117 = scmp.eq.s32.totalorder %s28, 0
      %p118 = por %p116, %p117
      %s120 = sadd.s32 %s119, 1
      %p123 = scmp.eq.s32.totalorder %s22, 1
      %p124 = scmp.ne.s32.totalorder %s119, %s121
      %p125 = scmp.eq.s32.totalorder %s22, 0
      %p126 = por %p124, %p125
      %p127 = scmp.ne.s32.totalorder %s119, %s121
      %p128 = scmp.eq.s32.totalorder %s27, 1
      %p129 = por %p127, %p128
      %p130 = scmp.ne.s32.totalorder %s121, %s122
      %p131 = scmp.eq.s32.totalorder %s27, 0
      %p132 = por %p130, %p131
      %p133 = scmp.ne.s32.totalorder %s121, %s122
      %p134 = scmp.eq.s32.totalorder %s28, 1
      %p135 = por %p133, %p134
      %p137 = scmp.ne.s32.totalorder %s122, %s136
      %p138 = scmp.eq.s32.totalorder %s28, 0
      %p139 = por %p137, %p138
      %s141 = sadd.s32 %s140, 1
      %p144 = scmp.eq.s32.totalorder %s22, 1
      %p145 = scmp.ne.s32.totalorder %s140, %s142
      %p146 = scmp.eq.s32.totalorder %s22, 0
      %p147 = por %p145, %p146
      %p148 = scmp.ne.s32.totalorder %s140, %s142
      %p149 = scmp.eq.s32.totalorder %s27, 1
      %p150 = por %p148, %p149
      %p151 = scmp.ne.s32.totalorder %s142, %s143
      %p152 = scmp.eq.s32.totalorder %s27, 0
      %p153 = por %p151, %p152
      %p154 = scmp.ne.s32.totalorder %s142, %s143
      %p155 = scmp.eq.s32.totalorder %s28, 1
      %p156 = por %p154, %p155
      %p158 = scmp.ne.s32.totalorder %s143, %s157
      %p159 = scmp.eq.s32.totalorder %s28, 0
      %p160 = por %p158, %p159
      %s162 = sadd.s32 %s161, 1
      %p165 = scmp.eq.s32.totalorder %s22, 1
      %p166 = scmp.ne.s32.totalorder %s161, %s163
      %p167 = scmp.eq.s32.totalorder %s22, 0
      %p168 = por %p166, %p167
      %p169 = scmp.ne.s32.totalorder %s161, %s163
      %p170 = scmp.eq.s32.totalorder %s27, 1
      %p171 = por %p169, %p170
      %p172 = scmp.ne.s32.totalorder %s163, %s164
      %p173 = scmp.eq.s32.totalorder %s27, 0
      %p174 = por %p172, %p173
      %p175 = scmp.ne.s32.totalorder %s163, %s164
      %p176 = scmp.eq.s32.totalorder %s28, 1
      %p177 = por %p175, %p176
      %p179 = scmp.ne.s32.totalorder %s164, %s178
      %p180 = scmp.eq.s32.totalorder %s28, 0
      %p181 = por %p179, %p180
      %s183 = sadd.s32 %s182, 1
      %p186 = scmp.eq.s32.totalorder %s22, 1
      %p187 = scmp.ne.s32.totalorder %s182, %s184
      %p188 = scmp.eq.s32.totalorder %s22, 0
      %p189 = por %p187, %p188
      %p190 = scmp.ne.s32.totalorder %s182, %s184
      %p191 = scmp.eq.s32.totalorder %s27, 1
      %p192 = por %p190, %p191
      %p193 = scmp.ne.s32.totalorder %s184, %s185
      %p194 = scmp.eq.s32.totalorder %s27, 0
      %p195 = por %p193, %p194
      %p196 = scmp.ne.s32.totalorder %s184, %s185
      %p197 = scmp.eq.s32.totalorder %s28, 1
      %p198 = por %p196, %p197
      %p200 = scmp.ne.s32.totalorder %s185, %s199
      %p201 = scmp.eq.s32.totalorder %s28, 0
      %p202 = por %p200, %p201
      %s204 = sadd.s32 %s203, 1
      %p207 = scmp.eq.s32.totalorder %s22, 1
      %p208 = scmp.ne.s32.totalorder %s203, %s205
      %p209 = scmp.eq.s32.totalorder %s22, 0
      %p210 = por %p208, %p209
      %p211 = scmp.ne.s32.totalorder %s203, %s205
      %p212 = scmp.eq.s32.totalorder %s27, 1
      %p213 = por %p211, %p212
      %p214 = scmp.ne.s32.totalorder %s205, %s206
      %p215 = scmp.eq.s32.totalorder %s27, 0
      %p216 = por %p214, %p215
      %p217 = scmp.ne.s32.totalorder %s205, %s206
      %p218 = scmp.eq.s32.totalorder %s28, 1
      %p219 = por %p217, %p218
      %p221 = scmp.ne.s32.totalorder %s206, %s220
      %p222 = scmp.eq.s32.totalorder %s28, 0
      %p223 = por %p221, %p222
      %s225 = sadd.s32 %s224, 1
      %p228 = scmp.eq.s32.totalorder %s22, 1
      %p229 = scmp.ne.s32.totalorder %s224, %s226
      %p230 = scmp.eq.s32.totalorder %s22, 0
      %p231 = por %p229, %p230
      %p232 = scmp.ne.s32.totalorder %s224, %s226
      %p233 = scmp.eq.s32.totalorder %s27, 1
      %p234 = por %p232, %p233
      %p235 = scmp.ne.s32.totalorder %s226, %s227
      %p236 = scmp.eq.s32.totalorder %s27, 0
      %p237 = por %p235, %p236
      %p238 = scmp.ne.s32.totalorder %s226, %s227
      %p239 = scmp.eq.s32.totalorder %s28, 1
      %p240 = por %p238, %p239
      %p242 = scmp.ne.s32.totalorder %s227, %s241
      %p243 = scmp.eq.s32.totalorder %s28, 0
      %p244 = por %p242, %p243
      %s246 = sadd.s32 %s245, 1
      %p249 = scmp.eq.s32.totalorder %s22, 1
      %p250 = scmp.ne.s32.totalorder %s245, %s247
      %p251 = scmp.eq.s32.totalorder %s22, 0
      %p252 = por %p250, %p251
      %p253 = scmp.ne.s32.totalorder %s245, %s247
      %p254 = scmp.eq.s32.totalorder %s27, 1
      %p255 = por %p253, %p254
      %p256 = scmp.ne.s32.totalorder %s247, %s248
      %p257 = scmp.eq.s32.totalorder %s27, 0
      %p258 = por %p256, %p257
      %p259 = scmp.ne.s32.totalorder %s247, %s248
      %p260 = scmp.eq.s32.totalorder %s28, 1
      %p261 = por %p259, %p260
      %p263 = scmp.ne.s32.totalorder %s248, %s262
      %p264 = scmp.eq.s32.totalorder %s28, 0
      %p265 = por %p263, %p264
      %s266 = ssub.s32 %s22, %s29
      %p267 = scmp.eq.s32.totalorder %s266, 0
      %s269 = sadd.s32 %s268, 1
      %s270 = scalar_select %p267, %s268, %s269
      %p273 = pneg %p267
      %p274 = scmp.eq.s32.totalorder %s22, 1
      %p275 = por %p273, %p274
      %p276 = scmp.ne.s32.totalorder %s268, %s271
      %p277 = scmp.eq.s32.totalorder %s22, 0
      %p278 = por %p276, %p277
      %p279 = scmp.ne.s32.totalorder %s268, %s271
      %p280 = scmp.eq.s32.totalorder %s27, 1
      %p281 = por %p279, %p280
      %p282 = scmp.ne.s32.totalorder %s271, %s272
      %p283 = scmp.eq.s32.totalorder %s27, 0
      %p284 = por %p282, %p283
      %p285 = scmp.ne.s32.totalorder %s271, %s272
      %p286 = scmp.eq.s32.totalorder %s28, 1
      %p287 = por %p285, %p286
      %p289 = scmp.ne.s32.totalorder %s272, %s288
      %p290 = scmp.eq.s32.totalorder %s28, 0
      %p291 = por %p289, %p290
      %p292 = scmp.le.s32.totalorder 1, %s22
      %p293 = scmp.lt.s32.totalorder %s22, 3
      %p294 = pnand %p292, %p293
      %p295 = pneg %p294
      // Predicated region
      $region9: #{tpu_custom_call.1} parent=5 // pred_check
        _
      $region10: #{tpu_custom_call.1} parent=5 // pred_check_branch
        %297 = sbr.rel (%p294) target = $region12
      $region11: #{tpu_custom_call.1} parent=5 // pred_region
        %s298 = ssub.s32 %s22, 1
        // Predicated region
        $region13: #{tpu_custom_call.1} parent=11 // pred_check
          %p299 = pneg %p69
        $region14: #{tpu_custom_call.1} parent=11 // pred_check_branch
          %301 = sbr.rel (%p299) target = $region16
        $region15: #{tpu_custom_call.1} parent=11 // pred_region
          _
        $region16: #{tpu_custom_call.1} parent=11 // pred_fallthru
          _
        // Predicated region
        $region17: #{tpu_custom_call.1} parent=11 // pred_check
          %p302 = pneg %p90
        $region18: #{tpu_custom_call.1} parent=11 // pred_check_branch
          %304 = sbr.rel (%p302) target = $region20
        $region19: #{tpu_custom_call.1} parent=11 // pred_region
          _
        $region20: #{tpu_custom_call.1} parent=11 // pred_fallthru
          _
        // Predicated region
        $region21: #{tpu_custom_call.1} parent=11 // pred_check
          %p305 = pneg %p111
        $region22: #{tpu_custom_call.1} parent=11 // pred_check_branch
          %307 = sbr.rel (%p305) target = $region24
        $region23: #{tpu_custom_call.1} parent=11 // pred_region
          _
        $region24: #{tpu_custom_call.1} parent=11 // pred_fallthru
          _
        // Predicated region
        $region25: #{tpu_custom_call.1} parent=11 // pred_check
          %p308 = pneg %p132
        $region26: #{tpu_custom_call.1} parent=11 // pred_check_branch
          %310 = sbr.rel (%p308) target = $region28
        $region27: #{tpu_custom_call.1} parent=11 // pred_region
          _
        $region28: #{tpu_custom_call.1} parent=11 // pred_fallthru
          _
        // Predicated region
        $region29: #{tpu_custom_call.1} parent=11 // pred_check
          %p311 = pneg %p153
        $region30: #{tpu_custom_call.1} parent=11 // pred_check_branch
          %313 = sbr.rel (%p311) target = $region32
        $region31: #{tpu_custom_call.1} parent=11 // pred_region
          _
        $region32: #{tpu_custom_call.1} parent=11 // pred_fallthru
          _
        // Predicated region
        $region33: #{tpu_custom_call.1} parent=11 // pred_check
          %p314 = pneg %p174
        $region34: #{tpu_custom_call.1} parent=11 // pred_check_branch
          %316 = sbr.rel (%p314) target = $region36
        $region35: #{tpu_custom_call.1} parent=11 // pred_region
          _
        $region36: #{tpu_custom_call.1} parent=11 // pred_fallthru
          _
        // Predicated region
        $region37: #{tpu_custom_call.1} parent=11 // pred_check
          %p317 = pneg %p195
        $region38: #{tpu_custom_call.1} parent=11 // pred_check_branch
          %319 = sbr.rel (%p317) target = $region40
        $region39: #{tpu_custom_call.1} parent=11 // pred_region
          _
        $region40: #{tpu_custom_call.1} parent=11 // pred_fallthru
          _
        // Predicated region
        $region41: #{tpu_custom_call.1} parent=11 // pred_check
          %p320 = pneg %p216
        $region42: #{tpu_custom_call.1} parent=11 // pred_check_branch
          %322 = sbr.rel (%p320) target = $region44
        $region43: #{tpu_custom_call.1} parent=11 // pred_region
          _
        $region44: #{tpu_custom_call.1} parent=11 // pred_fallthru
          _
        // Predicated region
        $region45: #{tpu_custom_call.1} parent=11 // pred_check
          %p323 = pneg %p237
        $region46: #{tpu_custom_call.1} parent=11 // pred_check_branch
          %325 = sbr.rel (%p323) target = $region48
        $region47: #{tpu_custom_call.1} parent=11 // pred_region
          _
        $region48: #{tpu_custom_call.1} parent=11 // pred_fallthru
          _
        // Predicated region
        $region49: #{tpu_custom_call.1} parent=11 // pred_check
          %p326 = pneg %p258
        $region50: #{tpu_custom_call.1} parent=11 // pred_check_branch
          %328 = sbr.rel (%p326) target = $region52
        $region51: #{tpu_custom_call.1} parent=11 // pred_region
          _
        $region52: #{tpu_custom_call.1} parent=11 // pred_fallthru
          _
      $region12: #{tpu_custom_call.1} parent=5 // pred_fallthru
        _
      %p329 = scmp.lt.s32.totalorder %s22, 2
      // Predicated region
      $region53: #{tpu_custom_call.1} parent=5 // pred_check
        %p330 = pneg %p329
      $region54: #{tpu_custom_call.1} parent=5 // pred_check_branch
        %332 = sbr.rel (%p330) target = $region56
      $region55: #{tpu_custom_call.1} parent=5 // pred_region
        // Predicated region
        $region57: #{tpu_custom_call.1} parent=55 // pred_check
          %p333 = pneg %p42
        $region58: #{tpu_custom_call.1} parent=55 // pred_check_branch
          %335 = sbr.rel (%p333) target = $region60
        $region59: #{tpu_custom_call.1} parent=55 // pred_region
          %p336 = scmp.lt.s32.totalorder %s22, 1
          %s337 = scalar_select %p336, %s22, 1
          %s338 = smul.addr %s337, 2
          %s339 = smul.addr %s338, 8
          %s340 = scalar_lea.vmem %s0, %s339
        $region60: #{tpu_custom_call.1} parent=55 // pred_fallthru
          _
      $region56: #{tpu_custom_call.1} parent=5 // pred_fallthru
        _
      %p341 = scmp.le.s32.totalorder 1, %s22
      %p342 = scmp.lt.s32.totalorder %s22, 3
      %p343 = pnand %p341, %p342
      %p344 = pneg %p343
      // Predicated region
      $region61: #{tpu_custom_call.1} parent=5 // pred_check
        _
      $region62: #{tpu_custom_call.1} parent=5 // pred_check_branch
        %346 = sbr.rel (%p343) target = $region64
      $region63: #{tpu_custom_call.1} parent=5 // pred_region
        %s347 = ssub.s32 %s22, 1
        %p348 = scmp.lt.s32.totalorder %s27, 1
        %s349 = scalar_select %p348, %s27, 1
        %s350 = smul.addr %s349, 2
        %s351 = smul.addr %s350, 8
        %s352 = scalar_lea.vmem %s0, %s351
        %p353 = pneg %p48
        %p354 = pneg %p45
        %p355 = pneg %p69
        %p356 = pneg %p66
        %p357 = pneg %p90
        %p358 = pneg %p87
        %p359 = pneg %p111
        %p360 = pneg %p108
        %p361 = pneg %p132
        %p362 = pneg %p129
        %p363 = pneg %p153
        %p364 = pneg %p150
        %p365 = pneg %p174
        %p366 = pneg %p171
        %p367 = pneg %p195
        %p368 = pneg %p192
        %p369 = pneg %p216
        %p370 = pneg %p213
        %p371 = pneg %p237
        %p372 = pneg %p234
        %p373 = pneg %p258
        %p374 = pneg %p255
        %p375 = pneg %p284
        %p376 = pneg %p281
        %s377 = sand.u32 %s271, 1
        %s378 = scalar_lea.sflag [#allocation4], %s377
        %s379 = sand.u32 %s271, 1
        %s380 = smul.addr %s379, 32
        %s381 = scalar_lea.vmem [#allocation3], %s380
        %p382 = scmp.lt.s32.totalorder %s27, 1
        %s383 = scalar_select %p382, %s27, 1
        %s384 = smul.addr %s383, 2
        %s385 = smul.addr %s384, 8
        %s386 = scalar_lea.vmem %s0, %s385
        %v387 = vlaneseq
        %v388 = vand.u32 %v387, 127
        %vm389 = vcmp.lt.s32.totalorder %v388, 32
        %vm390 = vcmp.ge.s32.totalorder %v388, 1
        %vm391 = vcmp.lt.s32.totalorder %v388, 31
        %vm392 = vcmp.ge.s32.totalorder %v388, 2
        %vm393 = vcmp.lt.s32.totalorder %v388, 30
        %v394 = vld [vmem:[%s386] sm:$0xff]
        %v395 = vld [vmem:[%s386 + $0x8] sm:$0xff]
        %v396 = vld [vmem:[%s1] sm:$0xff]
        %v397 = vld [vmem:[%s1 + $0x8] sm:$0xff]
        %v398 = vsel %vm389, 1, 0
        %vm399 = vcmp.eq.s32.totalorder %v398, 1
        %v400 = vsel %vm399, %v394, 0.0
        %v401 = vsel %vm399, %v395, 0.0
        %402 = vadd.xlane.f32.xlu0 %v400
        %v403 = vpop.xlane.xlu0 %402
        %404 = vadd.xlane.f32.xlu0 %v401
        %v405 = vpop.xlane.xlu0 %404
        %v406 = vmul.f32 %v400, %v400
        %v407 = vmul.f32 %v401, %v401
        %408 = vadd.xlane.f32.xlu0 %v406
        %v409 = vpop.xlane.xlu0 %408
        %410 = vadd.xlane.f32.xlu0 %v407
        %v411 = vpop.xlane.xlu0 %410
        %vm412 = vcmask 7168
        %v413 = vsel %vm412, %v403, 0.0
        %v414 = vsel %vm412, %v405, 0.0
        %v415 = vadd.f32 %v413, %v414
        %416 = vadd.xlane.f32.xlu0 %v415
        %v417 = vpop.xlane.xlu0 %416
        %v418 = vrot.slane %v417, 4
        %v419 = vadd.f32 %v417, %v418
        %v420 = vrot.slane %v419, 2
        %v421 = vadd.f32 %v419, %v420
        %v422 = vrot.slane %v421, 1
        %v423 = vadd.f32 %v421, %v422
        %s424 = vtos %v423
        %s425 = smul.f32 %s424, 0.001953125
        %v426 = vsel %vm412, %v409, 0.0
        %v427 = vsel %vm412, %v411, 0.0
        %v428 = vadd.f32 %v426, %v427
        %429 = vadd.xlane.f32.xlu0 %v428
        %v430 = vpop.xlane.xlu0 %429
        %v431 = vrot.slane %v430, 4
        %v432 = vadd.f32 %v430, %v431
        %v433 = vrot.slane %v432, 2
        %v434 = vadd.f32 %v432, %v433
        %v435 = vrot.slane %v434, 1
        %v436 = vadd.f32 %v434, %v435
        %s437 = vtos %v436
        %s438 = smul.f32 %s437, 0.001953125
        %s439 = smul.f32 %s425, %s425
        %s440 = ssub.f32 %s438, %s439
        %s441 = smax.f32 %s440, 0.0
        %s442 = sadd.f32 %s441, 1e-08
        %v443 = vstv %s442
        %v444 = vrsqrt.pop %v443
        %v445 = vmul.f32 %v444, %v443
        %v446 = vmul.f32 %v445, %v444
        %v447 = vmul.f32 0.5, %v446
        %v448 = vsub.f32 1.5, %v447
        %v449 = vmul.f32 %v444, %v448
        %vm450 = vweird.f32 %v443
        %vm451 = vweird.f32 %v444
        %vm452 = vmor %vm450, %vm451
        %v453 = vsel %vm452, %v444, %v449
        %s454 = vtos %v453
        %v455 = vstv %s454
        %v456 = vmul.f32 %v396, %v455
        %v457 = vmul.f32 %v397, %v455
        %v458 = vstv %s425
        %v459 = vmul.f32 %v458, %v456
        %v460 = vmul.f32 %v458, %v457
        %463 = vrot.lane.b32.xlu0 %v459, 1
        %v464 = vpop.permute.xlu0 %463
        %465 = vrot.lane.b32.xlu0 %v460, 1
        %v466 = vpop.permute.xlu0 %465
        %v469 = vsub.f32 %v396, %v464
        %v470 = vsub.f32 %v397, %v466
        %472 = vset.pattern.permute.xlu0 0
        %473 = vperm.xlu0 %472, %v456
        %v474 = vpop.permute.xlu0 %473
        %477 = vset.pattern.permute.xlu0 0
        %478 = vperm.xlu0 %477, %v457
        %v479 = vpop.permute.xlu0 %478
        %v481 = vmul.f32 %v394, %v474
        %v482 = vmul.f32 %v395, %v479
        %484 = vset.pattern.permute.xlu0 1
        %485 = vperm.xlu0 %484, %v469
        %v486 = vpop.permute.xlu0 %485
        %489 = vset.pattern.permute.xlu0 1
        %490 = vperm.xlu0 %489, %v470
        %v491 = vpop.permute.xlu0 %490
        %v493 = vadd.f32 %v481, %v486
        %v494 = vadd.f32 %v482, %v491
        %v495 = vld [vmem:[%s2] sm:$0xff]
        %v496 = vld [vmem:[%s2 + $0x8] sm:$0xff]
        %v497 = vld [vmem:[%s3] sm:$0xff]
        %v498 = vld [vmem:[%s3 + $0x8] sm:$0xff]
        %500 = vset.pattern.permute.xlu0 0
        %501 = vperm.xlu0 %500, %v497
        %v502 = vpop.permute.xlu0 %501
        %505 = vset.pattern.permute.xlu0 0
        %506 = vperm.xlu0 %505, %v498
        %v507 = vpop.permute.xlu0 %506
        %vm509 = vcmask 130048
        %v511 = vsel %vm509, %v495, 0
        %v514 = vsel %vm509, %v496, 0
        %516 = vmatpush.msra.mxu0 0.0
        %517 = vmatpush.msra.mxu0 0.0
        %518 = vmatpush.msra.mxu0 0.0
        %519 = vmatpush.msra.mxu0 0.0
        %520 = vmatpush.msra.mxu0 0.0
        %521 = vmatpush.msra.mxu0 0.0
        %522 = vmatpush.msra.mxu0 0.0
        %523 = vmatpush.msra.mxu0 0.0
        %524 = vmatpush.msra.mxu0 0.0
        %525 = vmatpush.msra.mxu0 0.0
        %526 = vmatpush.msra.mxu0 0.0
        %527 = vmatpush.msra.mxu0 0.0
        %528 = vmatpush.msra.mxu0 0.0
        %529 = vmatpush.msra.mxu0 0.0
        %v530 = vand.u32 %v494, 4294901760
        %531 = vmatpush.msra.mxu0 %v530
        %v532 = vand.u32 %v493, 4294901760
        %533 = vmatpush.msra.mxu0 %v532
        %v534 = vand.u32 %v511, 4294901760
        %v535 = vsub.f32 %v511, %v534
        %v536 = vand.u32 %v535, 4294901760
        %v537 = vsub.f32 %v535, %v536
        %v538 = vand.u32 %v537, 4294901760
        %539 = vmatmul.f32.gmra.mxu0 %v538
        %v540 = vpop.f32.mrf.mxu0
        %v541 = vadd.f32 %v502, %v540
        %v542 = vand.u32 %v514, 4294901760
        %v543 = vsub.f32 %v514, %v542
        %v544 = vand.u32 %v543, 4294901760
        %v545 = vsub.f32 %v543, %v544
        %v546 = vand.u32 %v545, 4294901760
        %547 = vmatmul.f32.gmra.mxu0 %v546
        %v548 = vpop.f32.mrf.mxu0
        %v549 = vadd.f32 %v507, %v548
        %550 = vdwg.mxu0
        %551 = vmatpush.msra.mxu0 0.0
        %552 = vmatpush.msra.mxu0 0.0
        %553 = vmatpush.msra.mxu0 0.0
        %554 = vmatpush.msra.mxu0 0.0
        %555 = vmatpush.msra.mxu0 0.0
        %556 = vmatpush.msra.mxu0 0.0
        %557 = vmatpush.msra.mxu0 0.0
        %558 = vmatpush.msra.mxu0 0.0
        %559 = vmatpush.msra.mxu0 0.0
        %560 = vmatpush.msra.mxu0 0.0
        %561 = vmatpush.msra.mxu0 0.0
        %562 = vmatpush.msra.mxu0 0.0
        %563 = vmatpush.msra.mxu0 0.0
        %564 = vmatpush.msra.mxu0 0.0
        %v565 = vand.u32 %v494, 4294901760
        %v566 = vsub.f32 %v494, %v565
        %v567 = vand.u32 %v566, 4294901760
        %v568 = vsub.f32 %v566, %v567
        %v569 = vand.u32 %v568, 4294901760
        %570 = vmatpush.msra.mxu0 %v569
        %v571 = vand.u32 %v493, 4294901760
        %v572 = vsub.f32 %v493, %v571
        %v573 = vand.u32 %v572, 4294901760
        %v574 = vsub.f32 %v572, %v573
        %v575 = vand.u32 %v574, 4294901760
        %576 = vmatpush.msra.mxu0 %v575
        %v577 = vand.u32 %v511, 4294901760
        %578 = vmatmul.f32.gmra.mxu0 %v577
        %v579 = vpop.f32.mrf.mxu0
        %v580 = vadd.f32 %v541, %v579
        %v581 = vand.u32 %v514, 4294901760
        %582 = vmatmul.f32.gmra.mxu0 %v581
        %v583 = vpop.f32.mrf.mxu0
        %v584 = vadd.f32 %v549, %v583
        %585 = vdwg.mxu0
        %586 = vmatpush.msra.mxu0 0.0
        %587 = vmatpush.msra.mxu0 0.0
        %588 = vmatpush.msra.mxu0 0.0
        %589 = vmatpush.msra.mxu0 0.0
        %590 = vmatpush.msra.mxu0 0.0
        %591 = vmatpush.msra.mxu0 0.0
        %592 = vmatpush.msra.mxu0 0.0
        %593 = vmatpush.msra.mxu0 0.0
        %594 = vmatpush.msra.mxu0 0.0
        %595 = vmatpush.msra.mxu0 0.0
        %596 = vmatpush.msra.mxu0 0.0
        %597 = vmatpush.msra.mxu0 0.0
        %598 = vmatpush.msra.mxu0 0.0
        %599 = vmatpush.msra.mxu0 0.0
        %v600 = vand.u32 %v494, 4294901760
        %v601 = vsub.f32 %v494, %v600
        %602 = vmatpush.msra.mxu0 %v601
        %v603 = vand.u32 %v493, 4294901760
        %v604 = vsub.f32 %v493, %v603
        %605 = vmatpush.msra.mxu0 %v604
        %v606 = vand.u32 %v511, 4294901760
        %v607 = vsub.f32 %v511, %v606
        %608 = vmatmul.f32.gmra.mxu0 %v607
        %v609 = vpop.f32.mrf.mxu0
        %v610 = vadd.f32 %v580, %v609
        %v611 = vand.u32 %v514, 4294901760
        %v612 = vsub.f32 %v514, %v611
        %613 = vmatmul.f32.gmra.mxu0 %v612
        %v614 = vpop.f32.mrf.mxu0
        %v615 = vadd.f32 %v584, %v614
        %616 = vdwg.mxu0
        %617 = vmatpush.msra.mxu0 0.0
        %618 = vmatpush.msra.mxu0 0.0
        %619 = vmatpush.msra.mxu0 0.0
        %620 = vmatpush.msra.mxu0 0.0
        %621 = vmatpush.msra.mxu0 0.0
        %622 = vmatpush.msra.mxu0 0.0
        %623 = vmatpush.msra.mxu0 0.0
        %624 = vmatpush.msra.mxu0 0.0
        %625 = vmatpush.msra.mxu0 0.0
        %626 = vmatpush.msra.mxu0 0.0
        %627 = vmatpush.msra.mxu0 0.0
        %628 = vmatpush.msra.mxu0 0.0
        %629 = vmatpush.msra.mxu0 0.0
        %630 = vmatpush.msra.mxu0 0.0
        %v631 = vand.u32 %v494, 4294901760
        %632 = vmatpush.msra.mxu0 %v631
        %v633 = vand.u32 %v493, 4294901760
        %634 = vmatpush.msra.mxu0 %v633
        %v635 = vand.u32 %v511, 4294901760
        %v636 = vsub.f32 %v511, %v635
        %v637 = vand.u32 %v636, 4294901760
        %638 = vmatmul.f32.gmra.mxu0 %v637
        %v639 = vpop.f32.mrf.mxu0
        %v640 = vadd.f32 %v610, %v639
        %v641 = vand.u32 %v514, 4294901760
        %v642 = vsub.f32 %v514, %v641
        %v643 = vand.u32 %v642, 4294901760
        %644 = vmatmul.f32.gmra.mxu0 %v643
        %v645 = vpop.f32.mrf.mxu0
        %v646 = vadd.f32 %v615, %v645
        %647 = vdwg.mxu0
        %648 = vmatpush.msra.mxu0 0.0
        %649 = vmatpush.msra.mxu0 0.0
        %650 = vmatpush.msra.mxu0 0.0
        %651 = vmatpush.msra.mxu0 0.0
        %652 = vmatpush.msra.mxu0 0.0
        %653 = vmatpush.msra.mxu0 0.0
        %654 = vmatpush.msra.mxu0 0.0
        %655 = vmatpush.msra.mxu0 0.0
        %656 = vmatpush.msra.mxu0 0.0
        %657 = vmatpush.msra.mxu0 0.0
        %658 = vmatpush.msra.mxu0 0.0
        %659 = vmatpush.msra.mxu0 0.0
        %660 = vmatpush.msra.mxu0 0.0
        %661 = vmatpush.msra.mxu0 0.0
        %v662 = vand.u32 %v494, 4294901760
        %v663 = vsub.f32 %v494, %v662
        %v664 = vand.u32 %v663, 4294901760
        %665 = vmatpush.msra.mxu0 %v664
        %v666 = vand.u32 %v493, 4294901760
        %v667 = vsub.f32 %v493, %v666
        %v668 = vand.u32 %v667, 4294901760
        %669 = vmatpush.msra.mxu0 %v668
        %v670 = vand.u32 %v511, 4294901760
        %671 = vmatmul.f32.gmra.mxu0 %v670
        %v672 = vpop.f32.mrf.mxu0
        %v673 = vadd.f32 %v640, %v672
        %v674 = vand.u32 %v514, 4294901760
        %675 = vmatmul.f32.gmra.mxu0 %v674
        %v676 = vpop.f32.mrf.mxu0
        %v677 = vadd.f32 %v646, %v676
        %678 = vdwg.mxu0
        %679 = vmatpush.msra.mxu0 0.0
        %680 = vmatpush.msra.mxu0 0.0
        %681 = vmatpush.msra.mxu0 0.0
        %682 = vmatpush.msra.mxu0 0.0
        %683 = vmatpush.msra.mxu0 0.0
        %684 = vmatpush.msra.mxu0 0.0
        %685 = vmatpush.msra.mxu0 0.0
        %686 = vmatpush.msra.mxu0 0.0
        %687 = vmatpush.msra.mxu0 0.0
        %688 = vmatpush.msra.mxu0 0.0
        %689 = vmatpush.msra.mxu0 0.0
        %690 = vmatpush.msra.mxu0 0.0
        %691 = vmatpush.msra.mxu0 0.0
        %692 = vmatpush.msra.mxu0 0.0
        %v693 = vand.u32 %v494, 4294901760
        %694 = vmatpush.msra.mxu0 %v693
        %v695 = vand.u32 %v493, 4294901760
        %696 = vmatpush.msra.mxu0 %v695
        %v697 = vand.u32 %v511, 4294901760
        %698 = vmatmul.f32.gmra.mxu0 %v697
        %v699 = vpop.f32.mrf.mxu0
        %v700 = vadd.f32 %v673, %v699
        %v701 = vand.u32 %v514, 4294901760
        %702 = vmatmul.f32.gmra.mxu0 %v701
        %v703 = vpop.f32.mrf.mxu0
        %v704 = vadd.f32 %v677, %v703
        %705 = vdwg.mxu0
        loop: start=0, step=1, limit=2
        $region65: #{tpu_custom_call.1} parent=63 // loop_pre_header
          _
        $region66: #{tpu_custom_call.1} parent=63 // loop_header
          %s707 = sphi 0, %s711
          %p708 = scmp.ge.s32.totalorder %s707, 2
          %v712 = vphi %v700, %v2905
          %v713 = vphi %v704, %v2906
          %v714 = vphi 0.0, %v2907
          %v715 = vphi 0.0, %v2908
        $region67: #{tpu_custom_call.1} parent=63 // loop_header_branch
          %710 = sbr.rel (%p708) target = $region71
        $region68: #{tpu_custom_call.1} parent=63 // loop_body
          %s716 = smul.u32 %s707, 2
          %s717 = smul.u32 %s716, 32
          %s718 = scalar_lea.vmem %s5, %s717
          %v719 = vld [vmem:[%s718] sm:$0xff]
          %v720 = vld [vmem:[%s718 + $0x8] sm:$0xff]
          %v721 = vld [vmem:[%s718 + $0x10] sm:$0xff]
          %v722 = vld [vmem:[%s718 + $0x18] sm:$0xff]
          %s723 = scalar_lea.vmem %s4, %s717
          %v724 = vld [vmem:[%s723] sm:$0xff]
          %v725 = vld [vmem:[%s723 + $0x8] sm:$0xff]
          %v726 = vld [vmem:[%s723 + $0x10] sm:$0xff]
          %v727 = vld [vmem:[%s723 + $0x18] sm:$0xff]
          %729 = vset.pattern.permute.xlu0 0
          %730 = vperm.xlu0 %729, %v719
          %v731 = vpop.permute.xlu0 %730
          %734 = vset.pattern.permute.xlu0 0
          %735 = vperm.xlu0 %734, %v720
          %v736 = vpop.permute.xlu0 %735
          %739 = vset.pattern.permute.xlu0 0
          %740 = vperm.xlu0 %739, %v721
          %v741 = vpop.permute.xlu0 %740
          %744 = vset.pattern.permute.xlu0 0
          %745 = vperm.xlu0 %744, %v722
          %v746 = vpop.permute.xlu0 %745
          %v749 = vsel %vm509, %v724, 0
          %v752 = vsel %vm509, %v725, 0
          %v755 = vsel %vm509, %v726, 0
          %v758 = vsel %vm509, %v727, 0
          %760 = vmatpush.msra.mxu0 0.0
          %761 = vmatpush.msra.mxu0 0.0
          %762 = vmatpush.msra.mxu0 0.0
          %763 = vmatpush.msra.mxu0 0.0
          %764 = vmatpush.msra.mxu0 0.0
          %765 = vmatpush.msra.mxu0 0.0
          %766 = vmatpush.msra.mxu0 0.0
          %767 = vmatpush.msra.mxu0 0.0
          %768 = vmatpush.msra.mxu0 0.0
          %769 = vmatpush.msra.mxu0 0.0
          %770 = vmatpush.msra.mxu0 0.0
          %771 = vmatpush.msra.mxu0 0.0
          %772 = vmatpush.msra.mxu0 0.0
          %773 = vmatpush.msra.mxu0 0.0
          %v774 = vand.u32 %v713, 4294901760
          %775 = vmatpush.msra.mxu0 %v774
          %v776 = vand.u32 %v712, 4294901760
          %777 = vmatpush.msra.mxu0 %v776
          %v778 = vand.u32 %v749, 4294901760
          %v779 = vsub.f32 %v749, %v778
          %v780 = vand.u32 %v779, 4294901760
          %v781 = vsub.f32 %v779, %v780
          %v782 = vand.u32 %v781, 4294901760
          %783 = vmatmul.f32.gmra.mxu0 %v782
          %v784 = vpop.f32.mrf.mxu0
          %v785 = vadd.f32 %v731, %v784
          %v786 = vand.u32 %v752, 4294901760
          %v787 = vsub.f32 %v752, %v786
          %v788 = vand.u32 %v787, 4294901760
          %v789 = vsub.f32 %v787, %v788
          %v790 = vand.u32 %v789, 4294901760
          %791 = vmatmul.f32.gmra.mxu0 %v790
          %v792 = vpop.f32.mrf.mxu0
          %v793 = vadd.f32 %v736, %v792
          %v794 = vand.u32 %v755, 4294901760
          %v795 = vsub.f32 %v755, %v794
          %v796 = vand.u32 %v795, 4294901760
          %v797 = vsub.f32 %v795, %v796
          %v798 = vand.u32 %v797, 4294901760
          %799 = vmatmul.f32.gmra.mxu0 %v798
          %v800 = vpop.f32.mrf.mxu0
          %v801 = vadd.f32 %v741, %v800
          %v802 = vand.u32 %v758, 4294901760
          %v803 = vsub.f32 %v758, %v802
          %v804 = vand.u32 %v803, 4294901760
          %v805 = vsub.f32 %v803, %v804
          %v806 = vand.u32 %v805, 4294901760
          %807 = vmatmul.f32.gmra.mxu0 %v806
          %v808 = vpop.f32.mrf.mxu0
          %v809 = vadd.f32 %v746, %v808
          %810 = vdwg.mxu0
          %811 = vmatpush.msra.mxu0 0.0
          %812 = vmatpush.msra.mxu0 0.0
          %813 = vmatpush.msra.mxu0 0.0
          %814 = vmatpush.msra.mxu0 0.0
          %815 = vmatpush.msra.mxu0 0.0
          %816 = vmatpush.msra.mxu0 0.0
          %817 = vmatpush.msra.mxu0 0.0
          %818 = vmatpush.msra.mxu0 0.0
          %819 = vmatpush.msra.mxu0 0.0
          %820 = vmatpush.msra.mxu0 0.0
          %821 = vmatpush.msra.mxu0 0.0
          %822 = vmatpush.msra.mxu0 0.0
          %823 = vmatpush.msra.mxu0 0.0
          %824 = vmatpush.msra.mxu0 0.0
          %v825 = vand.u32 %v713, 4294901760
          %v826 = vsub.f32 %v713, %v825
          %v827 = vand.u32 %v826, 4294901760
          %v828 = vsub.f32 %v826, %v827
          %v829 = vand.u32 %v828, 4294901760
          %830 = vmatpush.msra.mxu0 %v829
          %v831 = vand.u32 %v712, 4294901760
          %v832 = vsub.f32 %v712, %v831
          %v833 = vand.u32 %v832, 4294901760
          %v834 = vsub.f32 %v832, %v833
          %v835 = vand.u32 %v834, 4294901760
          %836 = vmatpush.msra.mxu0 %v835
          %v837 = vand.u32 %v749, 4294901760
          %838 = vmatmul.f32.gmra.mxu0 %v837
          %v839 = vpop.f32.mrf.mxu0
          %v840 = vadd.f32 %v785, %v839
          %v841 = vand.u32 %v752, 4294901760
          %842 = vmatmul.f32.gmra.mxu0 %v841
          %v843 = vpop.f32.mrf.mxu0
          %v844 = vadd.f32 %v793, %v843
          %v845 = vand.u32 %v755, 4294901760
          %846 = vmatmul.f32.gmra.mxu0 %v845
          %v847 = vpop.f32.mrf.mxu0
          %v848 = vadd.f32 %v801, %v847
          %v849 = vand.u32 %v758, 4294901760
          %850 = vmatmul.f32.gmra.mxu0 %v849
          %v851 = vpop.f32.mrf.mxu0
          %v852 = vadd.f32 %v809, %v851
          %853 = vdwg.mxu0
          %854 = vmatpush.msra.mxu0 0.0
          %855 = vmatpush.msra.mxu0 0.0
          %856 = vmatpush.msra.mxu0 0.0
          %857 = vmatpush.msra.mxu0 0.0
          %858 = vmatpush.msra.mxu0 0.0
          %859 = vmatpush.msra.mxu0 0.0
          %860 = vmatpush.msra.mxu0 0.0
          %861 = vmatpush.msra.mxu0 0.0
          %862 = vmatpush.msra.mxu0 0.0
          %863 = vmatpush.msra.mxu0 0.0
          %864 = vmatpush.msra.mxu0 0.0
          %865 = vmatpush.msra.mxu0 0.0
          %866 = vmatpush.msra.mxu0 0.0
          %867 = vmatpush.msra.mxu0 0.0
          %v868 = vand.u32 %v713, 4294901760
          %v869 = vsub.f32 %v713, %v868
          %870 = vmatpush.msra.mxu0 %v869
          %v871 = vand.u32 %v712, 4294901760
          %v872 = vsub.f32 %v712, %v871
          %873 = vmatpush.msra.mxu0 %v872
          %v874 = vand.u32 %v749, 4294901760
          %v875 = vsub.f32 %v749, %v874
          %876 = vmatmul.f32.gmra.mxu0 %v875
          %v877 = vpop.f32.mrf.mxu0
          %v878 = vadd.f32 %v840, %v877
          %v879 = vand.u32 %v752, 4294901760
          %v880 = vsub.f32 %v752, %v879
          %881 = vmatmul.f32.gmra.mxu0 %v880
          %v882 = vpop.f32.mrf.mxu0
          %v883 = vadd.f32 %v844, %v882
          %v884 = vand.u32 %v755, 4294901760
          %v885 = vsub.f32 %v755, %v884
          %886 = vmatmul.f32.gmra.mxu0 %v885
          %v887 = vpop.f32.mrf.mxu0
          %v888 = vadd.f32 %v848, %v887
          %v889 = vand.u32 %v758, 4294901760
          %v890 = vsub.f32 %v758, %v889
          %891 = vmatmul.f32.gmra.mxu0 %v890
          %v892 = vpop.f32.mrf.mxu0
          %v893 = vadd.f32 %v852, %v892
          %894 = vdwg.mxu0
          %895 = vmatpush.msra.mxu0 0.0
          %896 = vmatpush.msra.mxu0 0.0
          %897 = vmatpush.msra.mxu0 0.0
          %898 = vmatpush.msra.mxu0 0.0
          %899 = vmatpush.msra.mxu0 0.0
          %900 = vmatpush.msra.mxu0 0.0
          %901 = vmatpush.msra.mxu0 0.0
          %902 = vmatpush.msra.mxu0 0.0
          %903 = vmatpush.msra.mxu0 0.0
          %904 = vmatpush.msra.mxu0 0.0
          %905 = vmatpush.msra.mxu0 0.0
          %906 = vmatpush.msra.mxu0 0.0
          %907 = vmatpush.msra.mxu0 0.0
          %908 = vmatpush.msra.mxu0 0.0
          %v909 = vand.u32 %v713, 4294901760
          %910 = vmatpush.msra.mxu0 %v909
          %v911 = vand.u32 %v712, 4294901760
          %912 = vmatpush.msra.mxu0 %v911
          %v913 = vand.u32 %v749, 4294901760
          %v914 = vsub.f32 %v749, %v913
          %v915 = vand.u32 %v914, 4294901760
          %916 = vmatmul.f32.gmra.mxu0 %v915
          %v917 = vpop.f32.mrf.mxu0
          %v918 = vadd.f32 %v878, %v917
          %v919 = vand.u32 %v752, 4294901760
          %v920 = vsub.f32 %v752, %v919
          %v921 = vand.u32 %v920, 4294901760
          %922 = vmatmul.f32.gmra.mxu0 %v921
          %v923 = vpop.f32.mrf.mxu0
          %v924 = vadd.f32 %v883, %v923
          %v925 = vand.u32 %v755, 4294901760
          %v926 = vsub.f32 %v755, %v925
          %v927 = vand.u32 %v926, 4294901760
          %928 = vmatmul.f32.gmra.mxu0 %v927
          %v929 = vpop.f32.mrf.mxu0
          %v930 = vadd.f32 %v888, %v929
          %v931 = vand.u32 %v758, 4294901760
          %v932 = vsub.f32 %v758, %v931
          %v933 = vand.u32 %v932, 4294901760
          %934 = vmatmul.f32.gmra.mxu0 %v933
          %v935 = vpop.f32.mrf.mxu0
          %v936 = vadd.f32 %v893, %v935
          %937 = vdwg.mxu0
          %938 = vmatpush.msra.mxu0 0.0
          %939 = vmatpush.msra.mxu0 0.0
          %940 = vmatpush.msra.mxu0 0.0
          %941 = vmatpush.msra.mxu0 0.0
          %942 = vmatpush.msra.mxu0 0.0
          %943 = vmatpush.msra.mxu0 0.0
          %944 = vmatpush.msra.mxu0 0.0
          %945 = vmatpush.msra.mxu0 0.0
          %946 = vmatpush.msra.mxu0 0.0
          %947 = vmatpush.msra.mxu0 0.0
          %948 = vmatpush.msra.mxu0 0.0
          %949 = vmatpush.msra.mxu0 0.0
          %950 = vmatpush.msra.mxu0 0.0
          %951 = vmatpush.msra.mxu0 0.0
          %v952 = vand.u32 %v713, 4294901760
          %v953 = vsub.f32 %v713, %v952
          %v954 = vand.u32 %v953, 4294901760
          %955 = vmatpush.msra.mxu0 %v954
          %v956 = vand.u32 %v712, 4294901760
          %v957 = vsub.f32 %v712, %v956
          %v958 = vand.u32 %v957, 4294901760
          %959 = vmatpush.msra.mxu0 %v958
          %v960 = vand.u32 %v749, 4294901760
          %961 = vmatmul.f32.gmra.mxu0 %v960
          %v962 = vpop.f32.mrf.mxu0
          %v963 = vadd.f32 %v918, %v962
          %v964 = vand.u32 %v752, 4294901760
          %965 = vmatmul.f32.gmra.mxu0 %v964
          %v966 = vpop.f32.mrf.mxu0
          %v967 = vadd.f32 %v924, %v966
          %v968 = vand.u32 %v755, 4294901760
          %969 = vmatmul.f32.gmra.mxu0 %v968
          %v970 = vpop.f32.mrf.mxu0
          %v971 = vadd.f32 %v930, %v970
          %v972 = vand.u32 %v758, 4294901760
          %973 = vmatmul.f32.gmra.mxu0 %v972
          %v974 = vpop.f32.mrf.mxu0
          %v975 = vadd.f32 %v936, %v974
          %976 = vdwg.mxu0
          %977 = vmatpush.msra.mxu0 0.0
          %978 = vmatpush.msra.mxu0 0.0
          %979 = vmatpush.msra.mxu0 0.0
          %980 = vmatpush.msra.mxu0 0.0
          %981 = vmatpush.msra.mxu0 0.0
          %982 = vmatpush.msra.mxu0 0.0
          %983 = vmatpush.msra.mxu0 0.0
          %984 = vmatpush.msra.mxu0 0.0
          %985 = vmatpush.msra.mxu0 0.0
          %986 = vmatpush.msra.mxu0 0.0
          %987 = vmatpush.msra.mxu0 0.0
          %988 = vmatpush.msra.mxu0 0.0
          %989 = vmatpush.msra.mxu0 0.0
          %990 = vmatpush.msra.mxu0 0.0
          %v991 = vand.u32 %v713, 4294901760
          %992 = vmatpush.msra.mxu0 %v991
          %v993 = vand.u32 %v712, 4294901760
          %994 = vmatpush.msra.mxu0 %v993
          %v995 = vand.u32 %v749, 4294901760
          %996 = vmatmul.f32.gmra.mxu0 %v995
          %v997 = vpop.f32.mrf.mxu0
          %v998 = vadd.f32 %v963, %v997
          %v999 = vand.u32 %v752, 4294901760
          %1000 = vmatmul.f32.gmra.mxu0 %v999
          %v1001 = vpop.f32.mrf.mxu0
          %v1002 = vadd.f32 %v967, %v1001
          %v1003 = vand.u32 %v755, 4294901760
          %1004 = vmatmul.f32.gmra.mxu0 %v1003
          %v1005 = vpop.f32.mrf.mxu0
          %v1006 = vadd.f32 %v971, %v1005
          %v1007 = vand.u32 %v758, 4294901760
          %1008 = vmatmul.f32.gmra.mxu0 %v1007
          %v1009 = vpop.f32.mrf.mxu0
          %v1010 = vadd.f32 %v975, %v1009
          %1011 = vdwg.mxu0
          %vm1012 = vcmp.ge.f32.partialorder %v998, 0.0
          %vm1013 = vcmp.ge.f32.partialorder %v1002, 0.0
          %vm1014 = vcmp.ge.f32.partialorder %v1006, 0.0
          %vm1015 = vcmp.ge.f32.partialorder %v1010, 0.0
          %1016 = vset.pattern.permute.xlu0 9
          %1017 = vperm.xlu0 %1016, %v719
          %v1018 = vpop.permute.xlu0 %1017
          %1020 = vset.pattern.permute.xlu0 9
          %1021 = vperm.xlu0 %1020, %v720
          %v1022 = vpop.permute.xlu0 %1021
          %1024 = vset.pattern.permute.xlu0 9
          %1025 = vperm.xlu0 %1024, %v721
          %v1026 = vpop.permute.xlu0 %1025
          %1028 = vset.pattern.permute.xlu0 9
          %1029 = vperm.xlu0 %1028, %v722
          %v1030 = vpop.permute.xlu0 %1029
          %v1032 = vmul.f32 %v1018, %v998
          %v1033 = vmul.f32 %v1022, %v1002
          %v1034 = vmul.f32 %v1026, %v1006
          %v1035 = vmul.f32 %v1030, %v1010
          %v1036 = vsel %vm1012, %v998, %v1032
          %v1037 = vsel %vm1013, %v1002, %v1033
          %v1038 = vsel %vm1014, %v1006, %v1034
          %v1039 = vsel %vm1015, %v1010, %v1035
          %v1040 = vsel %vm399, %v1036, 0.0
          %v1041 = vsel %vm399, %v1037, 0.0
          %v1042 = vsel %vm399, %v1038, 0.0
          %v1043 = vsel %vm399, %v1039, 0.0
          %1044 = vadd.xlane.f32.xlu0 %v1040
          %v1045 = vpop.xlane.xlu0 %1044
          %1046 = vadd.xlane.f32.xlu0 %v1041
          %v1047 = vpop.xlane.xlu0 %1046
          %1048 = vadd.xlane.f32.xlu0 %v1042
          %v1049 = vpop.xlane.xlu0 %1048
          %1050 = vadd.xlane.f32.xlu0 %v1043
          %v1051 = vpop.xlane.xlu0 %1050
          %v1052 = vmul.f32 %v1040, %v1040
          %v1053 = vmul.f32 %v1041, %v1041
          %v1054 = vmul.f32 %v1042, %v1042
          %v1055 = vmul.f32 %v1043, %v1043
          %1056 = vadd.xlane.f32.xlu0 %v1052
          %v1057 = vpop.xlane.xlu0 %1056
          %1058 = vadd.xlane.f32.xlu0 %v1053
          %v1059 = vpop.xlane.xlu0 %1058
          %1060 = vadd.xlane.f32.xlu0 %v1054
          %v1061 = vpop.xlane.xlu0 %1060
          %1062 = vadd.xlane.f32.xlu0 %v1055
          %v1063 = vpop.xlane.xlu0 %1062
          %v1064 = vsel %vm412, %v1045, 0.0
          %v1065 = vsel %vm412, %v1047, 0.0
          %v1066 = vadd.f32 %v1064, %v1065
          %v1067 = vsel %vm412, %v1049, 0.0
          %v1068 = vadd.f32 %v1066, %v1067
          %v1069 = vsel %vm412, %v1051, 0.0
          %v1070 = vadd.f32 %v1068, %v1069
          %1071 = vadd.xlane.f32.xlu0 %v1070
          %v1072 = vpop.xlane.xlu0 %1071
          %v1073 = vrot.slane %v1072, 4
          %v1074 = vadd.f32 %v1072, %v1073
          %v1075 = vrot.slane %v1074, 2
          %v1076 = vadd.f32 %v1074, %v1075
          %v1077 = vrot.slane %v1076, 1
          %v1078 = vadd.f32 %v1076, %v1077
          %s1079 = vtos %v1078
          %s1080 = smul.f32 %s1079, 0.0009765625
          %v1081 = vsel %vm412, %v1057, 0.0
          %v1082 = vsel %vm412, %v1059, 0.0
          %v1083 = vadd.f32 %v1081, %v1082
          %v1084 = vsel %vm412, %v1061, 0.0
          %v1085 = vadd.f32 %v1083, %v1084
          %v1086 = vsel %vm412, %v1063, 0.0
          %v1087 = vadd.f32 %v1085, %v1086
          %1088 = vadd.xlane.f32.xlu0 %v1087
          %v1089 = vpop.xlane.xlu0 %1088
          %v1090 = vrot.slane %v1089, 4
          %v1091 = vadd.f32 %v1089, %v1090
          %v1092 = vrot.slane %v1091, 2
          %v1093 = vadd.f32 %v1091, %v1092
          %v1094 = vrot.slane %v1093, 1
          %v1095 = vadd.f32 %v1093, %v1094
          %s1096 = vtos %v1095
          %s1097 = smul.f32 %s1096, 0.0009765625
          %s1098 = smul.f32 %s1080, %s1080
          %s1099 = ssub.f32 %s1097, %s1098
          %s1100 = smax.f32 %s1099, 0.0
          %s1101 = sadd.f32 %s1100, 1e-08
          %v1102 = vstv %s1101
          %v1103 = vrsqrt.pop %v1102
          %v1104 = vmul.f32 %v1103, %v1102
          %v1105 = vmul.f32 %v1104, %v1103
          %v1106 = vmul.f32 0.5, %v1105
          %v1107 = vsub.f32 1.5, %v1106
          %v1108 = vmul.f32 %v1103, %v1107
          %vm1109 = vweird.f32 %v1102
          %vm1110 = vweird.f32 %v1103
          %vm1111 = vmor %vm1109, %vm1110
          %v1112 = vsel %vm1111, %v1103, %v1108
          %s1113 = vtos %v1112
          %v1114 = vstv %s1113
          %v1115 = vmul.f32 %v719, %v1114
          %v1116 = vmul.f32 %v720, %v1114
          %v1117 = vmul.f32 %v721, %v1114
          %v1118 = vmul.f32 %v722, %v1114
          %v1119 = vstv %s1080
          %v1120 = vmul.f32 %v1119, %v1115
          %v1121 = vmul.f32 %v1119, %v1116
          %v1122 = vmul.f32 %v1119, %v1117
          %v1123 = vmul.f32 %v1119, %v1118
          %1128 = vrot.lane.b32.xlu0 %v1120, 1
          %v1129 = vpop.permute.xlu0 %1128
          %1130 = vrot.lane.b32.xlu0 %v1121, 1
          %v1131 = vpop.permute.xlu0 %1130
          %1132 = vrot.lane.b32.xlu0 %v1122, 1
          %v1133 = vpop.permute.xlu0 %1132
          %1134 = vrot.lane.b32.xlu0 %v1123, 1
          %v1135 = vpop.permute.xlu0 %1134
          %v1140 = vsub.f32 %v719, %v1129
          %v1141 = vsub.f32 %v720, %v1131
          %v1142 = vsub.f32 %v721, %v1133
          %v1143 = vsub.f32 %v722, %v1135
          %1145 = vset.pattern.permute.xlu0 1
          %1146 = vperm.xlu0 %1145, %v1115
          %v1147 = vpop.permute.xlu0 %1146
          %1150 = vset.pattern.permute.xlu0 1
          %1151 = vperm.xlu0 %1150, %v1116
          %v1152 = vpop.permute.xlu0 %1151
          %1155 = vset.pattern.permute.xlu0 1
          %1156 = vperm.xlu0 %1155, %v1117
          %v1157 = vpop.permute.xlu0 %1156
          %1160 = vset.pattern.permute.xlu0 1
          %1161 = vperm.xlu0 %1160, %v1118
          %v1162 = vpop.permute.xlu0 %1161
          %v1164 = vmul.f32 %v1036, %v1147
          %v1165 = vmul.f32 %v1037, %v1152
          %v1166 = vmul.f32 %v1038, %v1157
          %v1167 = vmul.f32 %v1039, %v1162
          %1169 = vset.pattern.permute.xlu0 2
          %1170 = vperm.xlu0 %1169, %v1140
          %v1171 = vpop.permute.xlu0 %1170
          %1174 = vset.pattern.permute.xlu0 2
          %1175 = vperm.xlu0 %1174, %v1141
          %v1176 = vpop.permute.xlu0 %1175
          %1179 = vset.pattern.permute.xlu0 2
          %1180 = vperm.xlu0 %1179, %v1142
          %v1181 = vpop.permute.xlu0 %1180
          %1184 = vset.pattern.permute.xlu0 2
          %1185 = vperm.xlu0 %1184, %v1143
          %v1186 = vpop.permute.xlu0 %1185
          %v1188 = vadd.f32 %v1164, %v1171
          %v1189 = vadd.f32 %v1165, %v1176
          %v1190 = vadd.f32 %v1166, %v1181
          %v1191 = vadd.f32 %v1167, %v1186
          %1192 = vrot.lane.b32.xlu0 %v1188, 1
          %v1193 = vpop.permute.xlu0 %1192
          %1194 = vrot.lane.b32.xlu0 %v1189, 1
          %v1195 = vpop.permute.xlu0 %1194
          %1196 = vrot.lane.b32.xlu0 %v1190, 1
          %v1197 = vpop.permute.xlu0 %1196
          %1198 = vrot.lane.b32.xlu0 %v1191, 1
          %v1199 = vpop.permute.xlu0 %1198
          %v1200 = vsel %vm390, 1, 0
          %vm1201 = vcmp.eq.s32.totalorder %v1200, 1
          %v1202 = vsel %vm1201, %v1193, 0.0
          %v1203 = vsel %vm1201, %v1195, 0.0
          %v1204 = vsel %vm1201, %v1197, 0.0
          %v1205 = vsel %vm1201, %v1199, 0.0
          %1206 = vset.pattern.permute.xlu0 3
          %1207 = vperm.xlu0 %1206, %v719
          %v1208 = vpop.permute.xlu0 %1207
          %1210 = vset.pattern.permute.xlu0 3
          %1211 = vperm.xlu0 %1210, %v720
          %v1212 = vpop.permute.xlu0 %1211
          %1214 = vset.pattern.permute.xlu0 3
          %1215 = vperm.xlu0 %1214, %v721
          %v1216 = vpop.permute.xlu0 %1215
          %1218 = vset.pattern.permute.xlu0 3
          %1219 = vperm.xlu0 %1218, %v722
          %v1220 = vpop.permute.xlu0 %1219
          %v1222 = vmul.f32 %v1208, %v1202
          %v1223 = vmul.f32 %v1212, %v1203
          %v1224 = vmul.f32 %v1216, %v1204
          %v1225 = vmul.f32 %v1220, %v1205
          %1226 = vset.pattern.permute.xlu0 4
          %1227 = vperm.xlu0 %1226, %v719
          %v1228 = vpop.permute.xlu0 %1227
          %1230 = vset.pattern.permute.xlu0 4
          %1231 = vperm.xlu0 %1230, %v720
          %v1232 = vpop.permute.xlu0 %1231
          %1234 = vset.pattern.permute.xlu0 4
          %1235 = vperm.xlu0 %1234, %v721
          %v1236 = vpop.permute.xlu0 %1235
          %1238 = vset.pattern.permute.xlu0 4
          %1239 = vperm.xlu0 %1238, %v722
          %v1240 = vpop.permute.xlu0 %1239
          %v1242 = vmul.f32 %v1228, %v1188
          %v1243 = vmul.f32 %v1232, %v1189
          %v1244 = vmul.f32 %v1236, %v1190
          %v1245 = vmul.f32 %v1240, %v1191
          %v1246 = vadd.f32 %v1222, %v1242
          %v1247 = vadd.f32 %v1223, %v1243
          %v1248 = vadd.f32 %v1224, %v1244
          %v1249 = vadd.f32 %v1225, %v1245
          %1250 = vrot.lane.b32.xlu0 %v1188, 127
          %v1251 = vpop.permute.xlu0 %1250
          %1252 = vrot.lane.b32.xlu0 %v1189, 127
          %v1253 = vpop.permute.xlu0 %1252
          %1254 = vrot.lane.b32.xlu0 %v1190, 127
          %v1255 = vpop.permute.xlu0 %1254
          %1256 = vrot.lane.b32.xlu0 %v1191, 127
          %v1257 = vpop.permute.xlu0 %1256
          %v1258 = vsel %vm391, 1, 0
          %vm1259 = vcmp.eq.s32.totalorder %v1258, 1
          %v1260 = vsel %vm1259, %v1251, 0.0
          %v1261 = vsel %vm1259, %v1253, 0.0
          %v1262 = vsel %vm1259, %v1255, 0.0
          %v1263 = vsel %vm1259, %v1257, 0.0
          %1264 = vset.pattern.permute.xlu0 5
          %1265 = vperm.xlu0 %1264, %v719
          %v1266 = vpop.permute.xlu0 %1265
          %1268 = vset.pattern.permute.xlu0 5
          %1269 = vperm.xlu0 %1268, %v720
          %v1270 = vpop.permute.xlu0 %1269
          %1272 = vset.pattern.permute.xlu0 5
          %1273 = vperm.xlu0 %1272, %v721
          %v1274 = vpop.permute.xlu0 %1273
          %1276 = vset.pattern.permute.xlu0 5
          %1277 = vperm.xlu0 %1276, %v722
          %v1278 = vpop.permute.xlu0 %1277
          %v1280 = vmul.f32 %v1266, %v1260
          %v1281 = vmul.f32 %v1270, %v1261
          %v1282 = vmul.f32 %v1274, %v1262
          %v1283 = vmul.f32 %v1278, %v1263
          %v1284 = vadd.f32 %v1246, %v1280
          %v1285 = vadd.f32 %v1247, %v1281
          %v1286 = vadd.f32 %v1248, %v1282
          %v1287 = vadd.f32 %v1249, %v1283
          %1288 = vset.pattern.permute.xlu0 6
          %1289 = vperm.xlu0 %1288, %v719
          %v1290 = vpop.permute.xlu0 %1289
          %1292 = vset.pattern.permute.xlu0 6
          %1293 = vperm.xlu0 %1292, %v720
          %v1294 = vpop.permute.xlu0 %1293
          %1296 = vset.pattern.permute.xlu0 6
          %1297 = vperm.xlu0 %1296, %v721
          %v1298 = vpop.permute.xlu0 %1297
          %1300 = vset.pattern.permute.xlu0 6
          %1301 = vperm.xlu0 %1300, %v722
          %v1302 = vpop.permute.xlu0 %1301
          %v1304 = vadd.f32 %v1284, %v1290
          %v1305 = vadd.f32 %v1285, %v1294
          %v1306 = vadd.f32 %v1286, %v1298
          %v1307 = vadd.f32 %v1287, %v1302
          %vm1308 = vcmp.ge.f32.partialorder %v1304, 0.0
          %vm1309 = vcmp.ge.f32.partialorder %v1305, 0.0
          %vm1310 = vcmp.ge.f32.partialorder %v1306, 0.0
          %vm1311 = vcmp.ge.f32.partialorder %v1307, 0.0
          %1312 = vset.pattern.permute.xlu0 10
          %1313 = vperm.xlu0 %1312, %v719
          %v1314 = vpop.permute.xlu0 %1313
          %1316 = vset.pattern.permute.xlu0 10
          %1317 = vperm.xlu0 %1316, %v720
          %v1318 = vpop.permute.xlu0 %1317
          %1320 = vset.pattern.permute.xlu0 10
          %1321 = vperm.xlu0 %1320, %v721
          %v1322 = vpop.permute.xlu0 %1321
          %1324 = vset.pattern.permute.xlu0 10
          %1325 = vperm.xlu0 %1324, %v722
          %v1326 = vpop.permute.xlu0 %1325
          %v1328 = vmul.f32 %v1314, %v1304
          %v1329 = vmul.f32 %v1318, %v1305
          %v1330 = vmul.f32 %v1322, %v1306
          %v1331 = vmul.f32 %v1326, %v1307
          %v1332 = vsel %vm1308, %v1304, %v1328
          %v1333 = vsel %vm1309, %v1305, %v1329
          %v1334 = vsel %vm1310, %v1306, %v1330
          %v1335 = vsel %vm1311, %v1307, %v1331
          %v1336 = vsel %vm399, %v1332, 0.0
          %v1337 = vsel %vm399, %v1333, 0.0
          %v1338 = vsel %vm399, %v1334, 0.0
          %v1339 = vsel %vm399, %v1335, 0.0
          %1340 = vadd.xlane.f32.xlu0 %v1336
          %v1341 = vpop.xlane.xlu0 %1340
          %1342 = vadd.xlane.f32.xlu0 %v1337
          %v1343 = vpop.xlane.xlu0 %1342
          %1344 = vadd.xlane.f32.xlu0 %v1338
          %v1345 = vpop.xlane.xlu0 %1344
          %1346 = vadd.xlane.f32.xlu0 %v1339
          %v1347 = vpop.xlane.xlu0 %1346
          %v1348 = vmul.f32 %v1336, %v1336
          %v1349 = vmul.f32 %v1337, %v1337
          %v1350 = vmul.f32 %v1338, %v1338
          %v1351 = vmul.f32 %v1339, %v1339
          %1352 = vadd.xlane.f32.xlu0 %v1348
          %v1353 = vpop.xlane.xlu0 %1352
          %1354 = vadd.xlane.f32.xlu0 %v1349
          %v1355 = vpop.xlane.xlu0 %1354
          %1356 = vadd.xlane.f32.xlu0 %v1350
          %v1357 = vpop.xlane.xlu0 %1356
          %1358 = vadd.xlane.f32.xlu0 %v1351
          %v1359 = vpop.xlane.xlu0 %1358
          %v1360 = vsel %vm412, %v1341, 0.0
          %v1361 = vsel %vm412, %v1343, 0.0
          %v1362 = vadd.f32 %v1360, %v1361
          %v1363 = vsel %vm412, %v1345, 0.0
          %v1364 = vadd.f32 %v1362, %v1363
          %v1365 = vsel %vm412, %v1347, 0.0
          %v1366 = vadd.f32 %v1364, %v1365
          %1367 = vadd.xlane.f32.xlu0 %v1366
          %v1368 = vpop.xlane.xlu0 %1367
          %v1369 = vrot.slane %v1368, 4
          %v1370 = vadd.f32 %v1368, %v1369
          %v1371 = vrot.slane %v1370, 2
          %v1372 = vadd.f32 %v1370, %v1371
          %v1373 = vrot.slane %v1372, 1
          %v1374 = vadd.f32 %v1372, %v1373
          %s1375 = vtos %v1374
          %s1376 = smul.f32 %s1375, 0.0009765625
          %v1377 = vsel %vm412, %v1353, 0.0
          %v1378 = vsel %vm412, %v1355, 0.0
          %v1379 = vadd.f32 %v1377, %v1378
          %v1380 = vsel %vm412, %v1357, 0.0
          %v1381 = vadd.f32 %v1379, %v1380
          %v1382 = vsel %vm412, %v1359, 0.0
          %v1383 = vadd.f32 %v1381, %v1382
          %1384 = vadd.xlane.f32.xlu0 %v1383
          %v1385 = vpop.xlane.xlu0 %1384
          %v1386 = vrot.slane %v1385, 4
          %v1387 = vadd.f32 %v1385, %v1386
          %v1388 = vrot.slane %v1387, 2
          %v1389 = vadd.f32 %v1387, %v1388
          %v1390 = vrot.slane %v1389, 1
          %v1391 = vadd.f32 %v1389, %v1390
          %s1392 = vtos %v1391
          %s1393 = smul.f32 %s1392, 0.0009765625
          %s1394 = smul.f32 %s1376, %s1376
          %s1395 = ssub.f32 %s1393, %s1394
          %s1396 = smax.f32 %s1395, 0.0
          %s1397 = sadd.f32 %s1396, 1e-08
          %v1398 = vstv %s1397
          %v1399 = vrsqrt.pop %v1398
          %v1400 = vmul.f32 %v1399, %v1398
          %v1401 = vmul.f32 %v1400, %v1399
          %v1402 = vmul.f32 0.5, %v1401
          %v1403 = vsub.f32 1.5, %v1402
          %v1404 = vmul.f32 %v1399, %v1403
          %vm1405 = vweird.f32 %v1398
          %vm1406 = vweird.f32 %v1399
          %vm1407 = vmor %vm1405, %vm1406
          %v1408 = vsel %vm1407, %v1399, %v1404
          %s1409 = vtos %v1408
          %v1410 = vstv %s1409
          %v1411 = vmul.f32 %v719, %v1410
          %v1412 = vmul.f32 %v720, %v1410
          %v1413 = vmul.f32 %v721, %v1410
          %v1414 = vmul.f32 %v722, %v1410
          %v1415 = vstv %s1376
          %v1416 = vmul.f32 %v1415, %v1411
          %v1417 = vmul.f32 %v1415, %v1412
          %v1418 = vmul.f32 %v1415, %v1413
          %v1419 = vmul.f32 %v1415, %v1414
          %1424 = vrot.lane.b32.xlu0 %v1416, 1
          %v1425 = vpop.permute.xlu0 %1424
          %1426 = vrot.lane.b32.xlu0 %v1417, 1
          %v1427 = vpop.permute.xlu0 %1426
          %1428 = vrot.lane.b32.xlu0 %v1418, 1
          %v1429 = vpop.permute.xlu0 %1428
          %1430 = vrot.lane.b32.xlu0 %v1419, 1
          %v1431 = vpop.permute.xlu0 %1430
          %v1436 = vsub.f32 %v719, %v1425
          %v1437 = vsub.f32 %v720, %v1427
          %v1438 = vsub.f32 %v721, %v1429
          %v1439 = vsub.f32 %v722, %v1431
          %1441 = vset.pattern.permute.xlu0 7
          %1442 = vperm.xlu0 %1441, %v1411
          %v1443 = vpop.permute.xlu0 %1442
          %1446 = vset.pattern.permute.xlu0 7
          %1447 = vperm.xlu0 %1446, %v1412
          %v1448 = vpop.permute.xlu0 %1447
          %1451 = vset.pattern.permute.xlu0 7
          %1452 = vperm.xlu0 %1451, %v1413
          %v1453 = vpop.permute.xlu0 %1452
          %1456 = vset.pattern.permute.xlu0 7
          %1457 = vperm.xlu0 %1456, %v1414
          %v1458 = vpop.permute.xlu0 %1457
          %v1460 = vmul.f32 %v1332, %v1443
          %v1461 = vmul.f32 %v1333, %v1448
          %v1462 = vmul.f32 %v1334, %v1453
          %v1463 = vmul.f32 %v1335, %v1458
          %1465 = vset.pattern.permute.xlu0 8
          %1466 = vperm.xlu0 %1465, %v1436
          %v1467 = vpop.permute.xlu0 %1466
          %1470 = vset.pattern.permute.xlu0 8
          %1471 = vperm.xlu0 %1470, %v1437
          %v1472 = vpop.permute.xlu0 %1471
          %1475 = vset.pattern.permute.xlu0 8
          %1476 = vperm.xlu0 %1475, %v1438
          %v1477 = vpop.permute.xlu0 %1476
          %1480 = vset.pattern.permute.xlu0 8
          %1481 = vperm.xlu0 %1480, %v1439
          %v1482 = vpop.permute.xlu0 %1481
          %v1484 = vadd.f32 %v1460, %v1467
          %v1485 = vadd.f32 %v1461, %v1472
          %v1486 = vadd.f32 %v1462, %v1477
          %v1487 = vadd.f32 %v1463, %v1482
          %s1488 = scalar_lea.vmem %s6, %s717
          %v1489 = vld [vmem:[%s1488] sm:$0xff]
          %v1490 = vld [vmem:[%s1488 + $0x8] sm:$0xff]
          %v1491 = vld [vmem:[%s1488 + $0x10] sm:$0xff]
          %v1492 = vld [vmem:[%s1488 + $0x18] sm:$0xff]
          %s1493 = scalar_lea.vmem %s7, %s717
          %v1494 = vld [vmem:[%s1493] sm:$0xff]
          %v1495 = vld [vmem:[%s1493 + $0x8] sm:$0xff]
          %v1496 = vld [vmem:[%s1493 + $0x10] sm:$0xff]
          %v1497 = vld [vmem:[%s1493 + $0x18] sm:$0xff]
          %1499 = vset.pattern.permute.xlu0 0
          %1500 = vperm.xlu0 %1499, %v1494
          %v1501 = vpop.permute.xlu0 %1500
          %1504 = vset.pattern.permute.xlu0 0
          %1505 = vperm.xlu0 %1504, %v1495
          %v1506 = vpop.permute.xlu0 %1505
          %1509 = vset.pattern.permute.xlu0 0
          %1510 = vperm.xlu0 %1509, %v1496
          %v1511 = vpop.permute.xlu0 %1510
          %1514 = vset.pattern.permute.xlu0 0
          %1515 = vperm.xlu0 %1514, %v1497
          %v1516 = vpop.permute.xlu0 %1515
          %vm1518 = vcmask 261120
          %v1520 = vsel %vm1518, %v1489, 0
          %v1523 = vsel %vm1518, %v1490, 0
          %v1526 = vsel %vm1518, %v1491, 0
          %v1529 = vsel %vm1518, %v1492, 0
          %1531 = vmatpush.msra.mxu0 0.0
          %1532 = vmatpush.msra.mxu0 0.0
          %1533 = vmatpush.msra.mxu0 0.0
          %1534 = vmatpush.msra.mxu0 0.0
          %1535 = vmatpush.msra.mxu0 0.0
          %1536 = vmatpush.msra.mxu0 0.0
          %1537 = vmatpush.msra.mxu0 0.0
          %1538 = vmatpush.msra.mxu0 0.0
          %1539 = vmatpush.msra.mxu0 0.0
          %1540 = vmatpush.msra.mxu0 0.0
          %1541 = vmatpush.msra.mxu0 0.0
          %1542 = vmatpush.msra.mxu0 0.0
          %v1543 = vand.u32 %v1487, 4294901760
          %1544 = vmatpush.msra.mxu0 %v1543
          %v1545 = vand.u32 %v1486, 4294901760
          %1546 = vmatpush.msra.mxu0 %v1545
          %v1547 = vand.u32 %v1485, 4294901760
          %1548 = vmatpush.msra.mxu0 %v1547
          %v1549 = vand.u32 %v1484, 4294901760
          %1550 = vmatpush.msra.mxu0 %v1549
          %v1551 = vand.u32 %v1520, 4294901760
          %v1552 = vsub.f32 %v1520, %v1551
          %v1553 = vand.u32 %v1552, 4294901760
          %v1554 = vsub.f32 %v1552, %v1553
          %v1555 = vand.u32 %v1554, 4294901760
          %1556 = vmatmul.f32.gmra.mxu0 %v1555
          %v1557 = vpop.f32.mrf.mxu0
          %v1558 = vadd.f32 %v1501, %v1557
          %v1559 = vand.u32 %v1523, 4294901760
          %v1560 = vsub.f32 %v1523, %v1559
          %v1561 = vand.u32 %v1560, 4294901760
          %v1562 = vsub.f32 %v1560, %v1561
          %v1563 = vand.u32 %v1562, 4294901760
          %1564 = vmatmul.f32.gmra.mxu0 %v1563
          %v1565 = vpop.f32.mrf.mxu0
          %v1566 = vadd.f32 %v1506, %v1565
          %v1567 = vand.u32 %v1526, 4294901760
          %v1568 = vsub.f32 %v1526, %v1567
          %v1569 = vand.u32 %v1568, 4294901760
          %v1570 = vsub.f32 %v1568, %v1569
          %v1571 = vand.u32 %v1570, 4294901760
          %1572 = vmatmul.f32.gmra.mxu0 %v1571
          %v1573 = vpop.f32.mrf.mxu0
          %v1574 = vadd.f32 %v1511, %v1573
          %v1575 = vand.u32 %v1529, 4294901760
          %v1576 = vsub.f32 %v1529, %v1575
          %v1577 = vand.u32 %v1576, 4294901760
          %v1578 = vsub.f32 %v1576, %v1577
          %v1579 = vand.u32 %v1578, 4294901760
          %1580 = vmatmul.f32.gmra.mxu0 %v1579
          %v1581 = vpop.f32.mrf.mxu0
          %v1582 = vadd.f32 %v1516, %v1581
          %1583 = vdwg.mxu0
          %1584 = vmatpush.msra.mxu0 0.0
          %1585 = vmatpush.msra.mxu0 0.0
          %1586 = vmatpush.msra.mxu0 0.0
          %1587 = vmatpush.msra.mxu0 0.0
          %1588 = vmatpush.msra.mxu0 0.0
          %1589 = vmatpush.msra.mxu0 0.0
          %1590 = vmatpush.msra.mxu0 0.0
          %1591 = vmatpush.msra.mxu0 0.0
          %1592 = vmatpush.msra.mxu0 0.0
          %1593 = vmatpush.msra.mxu0 0.0
          %1594 = vmatpush.msra.mxu0 0.0
          %1595 = vmatpush.msra.mxu0 0.0
          %v1596 = vand.u32 %v1487, 4294901760
          %v1597 = vsub.f32 %v1487, %v1596
          %v1598 = vand.u32 %v1597, 4294901760
          %v1599 = vsub.f32 %v1597, %v1598
          %v1600 = vand.u32 %v1599, 4294901760
          %1601 = vmatpush.msra.mxu0 %v1600
          %v1602 = vand.u32 %v1486, 4294901760
          %v1603 = vsub.f32 %v1486, %v1602
          %v1604 = vand.u32 %v1603, 4294901760
          %v1605 = vsub.f32 %v1603, %v1604
          %v1606 = vand.u32 %v1605, 4294901760
          %1607 = vmatpush.msra.mxu0 %v1606
          %v1608 = vand.u32 %v1485, 4294901760
          %v1609 = vsub.f32 %v1485, %v1608
          %v1610 = vand.u32 %v1609, 4294901760
          %v1611 = vsub.f32 %v1609, %v1610
          %v1612 = vand.u32 %v1611, 4294901760
          %1613 = vmatpush.msra.mxu0 %v1612
          %v1614 = vand.u32 %v1484, 4294901760
          %v1615 = vsub.f32 %v1484, %v1614
          %v1616 = vand.u32 %v1615, 4294901760
          %v1617 = vsub.f32 %v1615, %v1616
          %v1618 = vand.u32 %v1617, 4294901760
          %1619 = vmatpush.msra.mxu0 %v1618
          %v1620 = vand.u32 %v1520, 4294901760
          %1621 = vmatmul.f32.gmra.mxu0 %v1620
          %v1622 = vpop.f32.mrf.mxu0
          %v1623 = vadd.f32 %v1558, %v1622
          %v1624 = vand.u32 %v1523, 4294901760
          %1625 = vmatmul.f32.gmra.mxu0 %v1624
          %v1626 = vpop.f32.mrf.mxu0
          %v1627 = vadd.f32 %v1566, %v1626
          %v1628 = vand.u32 %v1526, 4294901760
          %1629 = vmatmul.f32.gmra.mxu0 %v1628
          %v1630 = vpop.f32.mrf.mxu0
          %v1631 = vadd.f32 %v1574, %v1630
          %v1632 = vand.u32 %v1529, 4294901760
          %1633 = vmatmul.f32.gmra.mxu0 %v1632
          %v1634 = vpop.f32.mrf.mxu0
          %v1635 = vadd.f32 %v1582, %v1634
          %1636 = vdwg.mxu0
          %1637 = vmatpush.msra.mxu0 0.0
          %1638 = vmatpush.msra.mxu0 0.0
          %1639 = vmatpush.msra.mxu0 0.0
          %1640 = vmatpush.msra.mxu0 0.0
          %1641 = vmatpush.msra.mxu0 0.0
          %1642 = vmatpush.msra.mxu0 0.0
          %1643 = vmatpush.msra.mxu0 0.0
          %1644 = vmatpush.msra.mxu0 0.0
          %1645 = vmatpush.msra.mxu0 0.0
          %1646 = vmatpush.msra.mxu0 0.0
          %1647 = vmatpush.msra.mxu0 0.0
          %1648 = vmatpush.msra.mxu0 0.0
          %v1649 = vand.u32 %v1487, 4294901760
          %v1650 = vsub.f32 %v1487, %v1649
          %1651 = vmatpush.msra.mxu0 %v1650
          %v1652 = vand.u32 %v1486, 4294901760
          %v1653 = vsub.f32 %v1486, %v1652
          %1654 = vmatpush.msra.mxu0 %v1653
          %v1655 = vand.u32 %v1485, 4294901760
          %v1656 = vsub.f32 %v1485, %v1655
          %1657 = vmatpush.msra.mxu0 %v1656
          %v1658 = vand.u32 %v1484, 4294901760
          %v1659 = vsub.f32 %v1484, %v1658
          %1660 = vmatpush.msra.mxu0 %v1659
          %v1661 = vand.u32 %v1520, 4294901760
          %v1662 = vsub.f32 %v1520, %v1661
          %1663 = vmatmul.f32.gmra.mxu0 %v1662
          %v1664 = vpop.f32.mrf.mxu0
          %v1665 = vadd.f32 %v1623, %v1664
          %v1666 = vand.u32 %v1523, 4294901760
          %v1667 = vsub.f32 %v1523, %v1666
          %1668 = vmatmul.f32.gmra.mxu0 %v1667
          %v1669 = vpop.f32.mrf.mxu0
          %v1670 = vadd.f32 %v1627, %v1669
          %v1671 = vand.u32 %v1526, 4294901760
          %v1672 = vsub.f32 %v1526, %v1671
          %1673 = vmatmul.f32.gmra.mxu0 %v1672
          %v1674 = vpop.f32.mrf.mxu0
          %v1675 = vadd.f32 %v1631, %v1674
          %v1676 = vand.u32 %v1529, 4294901760
          %v1677 = vsub.f32 %v1529, %v1676
          %1678 = vmatmul.f32.gmra.mxu0 %v1677
          %v1679 = vpop.f32.mrf.mxu0
          %v1680 = vadd.f32 %v1635, %v1679
          %1681 = vdwg.mxu0
          %1682 = vmatpush.msra.mxu0 0.0
          %1683 = vmatpush.msra.mxu0 0.0
          %1684 = vmatpush.msra.mxu0 0.0
          %1685 = vmatpush.msra.mxu0 0.0
          %1686 = vmatpush.msra.mxu0 0.0
          %1687 = vmatpush.msra.mxu0 0.0
          %1688 = vmatpush.msra.mxu0 0.0
          %1689 = vmatpush.msra.mxu0 0.0
          %1690 = vmatpush.msra.mxu0 0.0
          %1691 = vmatpush.msra.mxu0 0.0
          %1692 = vmatpush.msra.mxu0 0.0
          %1693 = vmatpush.msra.mxu0 0.0
          %v1694 = vand.u32 %v1487, 4294901760
          %1695 = vmatpush.msra.mxu0 %v1694
          %v1696 = vand.u32 %v1486, 4294901760
          %1697 = vmatpush.msra.mxu0 %v1696
          %v1698 = vand.u32 %v1485, 4294901760
          %1699 = vmatpush.msra.mxu0 %v1698
          %v1700 = vand.u32 %v1484, 4294901760
          %1701 = vmatpush.msra.mxu0 %v1700
          %v1702 = vand.u32 %v1520, 4294901760
          %v1703 = vsub.f32 %v1520, %v1702
          %v1704 = vand.u32 %v1703, 4294901760
          %1705 = vmatmul.f32.gmra.mxu0 %v1704
          %v1706 = vpop.f32.mrf.mxu0
          %v1707 = vadd.f32 %v1665, %v1706
          %v1708 = vand.u32 %v1523, 4294901760
          %v1709 = vsub.f32 %v1523, %v1708
          %v1710 = vand.u32 %v1709, 4294901760
          %1711 = vmatmul.f32.gmra.mxu0 %v1710
          %v1712 = vpop.f32.mrf.mxu0
          %v1713 = vadd.f32 %v1670, %v1712
          %v1714 = vand.u32 %v1526, 4294901760
          %v1715 = vsub.f32 %v1526, %v1714
          %v1716 = vand.u32 %v1715, 4294901760
          %1717 = vmatmul.f32.gmra.mxu0 %v1716
          %v1718 = vpop.f32.mrf.mxu0
          %v1719 = vadd.f32 %v1675, %v1718
          %v1720 = vand.u32 %v1529, 4294901760
          %v1721 = vsub.f32 %v1529, %v1720
          %v1722 = vand.u32 %v1721, 4294901760
          %1723 = vmatmul.f32.gmra.mxu0 %v1722
          %v1724 = vpop.f32.mrf.mxu0
          %v1725 = vadd.f32 %v1680, %v1724
          %1726 = vdwg.mxu0
          %1727 = vmatpush.msra.mxu0 0.0
          %1728 = vmatpush.msra.mxu0 0.0
          %1729 = vmatpush.msra.mxu0 0.0
          %1730 = vmatpush.msra.mxu0 0.0
          %1731 = vmatpush.msra.mxu0 0.0
          %1732 = vmatpush.msra.mxu0 0.0
          %1733 = vmatpush.msra.mxu0 0.0
          %1734 = vmatpush.msra.mxu0 0.0
          %1735 = vmatpush.msra.mxu0 0.0
          %1736 = vmatpush.msra.mxu0 0.0
          %1737 = vmatpush.msra.mxu0 0.0
          %1738 = vmatpush.msra.mxu0 0.0
          %v1739 = vand.u32 %v1487, 4294901760
          %v1740 = vsub.f32 %v1487, %v1739
          %v1741 = vand.u32 %v1740, 4294901760
          %1742 = vmatpush.msra.mxu0 %v1741
          %v1743 = vand.u32 %v1486, 4294901760
          %v1744 = vsub.f32 %v1486, %v1743
          %v1745 = vand.u32 %v1744, 4294901760
          %1746 = vmatpush.msra.mxu0 %v1745
          %v1747 = vand.u32 %v1485, 4294901760
          %v1748 = vsub.f32 %v1485, %v1747
          %v1749 = vand.u32 %v1748, 4294901760
          %1750 = vmatpush.msra.mxu0 %v1749
          %v1751 = vand.u32 %v1484, 4294901760
          %v1752 = vsub.f32 %v1484, %v1751
          %v1753 = vand.u32 %v1752, 4294901760
          %1754 = vmatpush.msra.mxu0 %v1753
          %v1755 = vand.u32 %v1520, 4294901760
          %1756 = vmatmul.f32.gmra.mxu0 %v1755
          %v1757 = vpop.f32.mrf.mxu0
          %v1758 = vadd.f32 %v1707, %v1757
          %v1759 = vand.u32 %v1523, 4294901760
          %1760 = vmatmul.f32.gmra.mxu0 %v1759
          %v1761 = vpop.f32.mrf.mxu0
          %v1762 = vadd.f32 %v1713, %v1761
          %v1763 = vand.u32 %v1526, 4294901760
          %1764 = vmatmul.f32.gmra.mxu0 %v1763
          %v1765 = vpop.f32.mrf.mxu0
          %v1766 = vadd.f32 %v1719, %v1765
          %v1767 = vand.u32 %v1529, 4294901760
          %1768 = vmatmul.f32.gmra.mxu0 %v1767
          %v1769 = vpop.f32.mrf.mxu0
          %v1770 = vadd.f32 %v1725, %v1769
          %1771 = vdwg.mxu0
          %1772 = vmatpush.msra.mxu0 0.0
          %1773 = vmatpush.msra.mxu0 0.0
          %1774 = vmatpush.msra.mxu0 0.0
          %1775 = vmatpush.msra.mxu0 0.0
          %1776 = vmatpush.msra.mxu0 0.0
          %1777 = vmatpush.msra.mxu0 0.0
          %1778 = vmatpush.msra.mxu0 0.0
          %1779 = vmatpush.msra.mxu0 0.0
          %1780 = vmatpush.msra.mxu0 0.0
          %1781 = vmatpush.msra.mxu0 0.0
          %1782 = vmatpush.msra.mxu0 0.0
          %1783 = vmatpush.msra.mxu0 0.0
          %v1784 = vand.u32 %v1487, 4294901760
          %1785 = vmatpush.msra.mxu0 %v1784
          %v1786 = vand.u32 %v1486, 4294901760
          %1787 = vmatpush.msra.mxu0 %v1786
          %v1788 = vand.u32 %v1485, 4294901760
          %1789 = vmatpush.msra.mxu0 %v1788
          %v1790 = vand.u32 %v1484, 4294901760
          %1791 = vmatpush.msra.mxu0 %v1790
          %v1792 = vand.u32 %v1520, 4294901760
          %1793 = vmatmul.f32.gmra.mxu0 %v1792
          %v1794 = vpop.f32.mrf.mxu0
          %v1795 = vadd.f32 %v1758, %v1794
          %v1796 = vand.u32 %v1523, 4294901760
          %1797 = vmatmul.f32.gmra.mxu0 %v1796
          %v1798 = vpop.f32.mrf.mxu0
          %v1799 = vadd.f32 %v1762, %v1798
          %v1800 = vand.u32 %v1526, 4294901760
          %1801 = vmatmul.f32.gmra.mxu0 %v1800
          %v1802 = vpop.f32.mrf.mxu0
          %v1803 = vadd.f32 %v1766, %v1802
          %v1804 = vand.u32 %v1529, 4294901760
          %1805 = vmatmul.f32.gmra.mxu0 %v1804
          %v1806 = vpop.f32.mrf.mxu0
          %v1807 = vadd.f32 %v1770, %v1806
          %1808 = vdwg.mxu0
          %v1809 = vadd.f32 %v712, %v1795
          %v1810 = vadd.f32 %v713, %v1799
          %v1811 = vadd.f32 %v714, %v1803
          %v1812 = vadd.f32 %v715, %v1807
          %s1813 = sadd.s32 %s716, 1
          %s1814 = smul.u32 %s1813, 32
          %s1815 = scalar_lea.vmem %s5, %s1814
          %v1816 = vld [vmem:[%s1815] sm:$0xff]
          %v1817 = vld [vmem:[%s1815 + $0x8] sm:$0xff]
          %v1818 = vld [vmem:[%s1815 + $0x10] sm:$0xff]
          %v1819 = vld [vmem:[%s1815 + $0x18] sm:$0xff]
          %s1820 = scalar_lea.vmem %s4, %s1814
          %v1821 = vld [vmem:[%s1820] sm:$0xff]
          %v1822 = vld [vmem:[%s1820 + $0x8] sm:$0xff]
          %v1823 = vld [vmem:[%s1820 + $0x10] sm:$0xff]
          %v1824 = vld [vmem:[%s1820 + $0x18] sm:$0xff]
          %1826 = vset.pattern.permute.xlu0 0
          %1827 = vperm.xlu0 %1826, %v1816
          %v1828 = vpop.permute.xlu0 %1827
          %1831 = vset.pattern.permute.xlu0 0
          %1832 = vperm.xlu0 %1831, %v1817
          %v1833 = vpop.permute.xlu0 %1832
          %1836 = vset.pattern.permute.xlu0 0
          %1837 = vperm.xlu0 %1836, %v1818
          %v1838 = vpop.permute.xlu0 %1837
          %1841 = vset.pattern.permute.xlu0 0
          %1842 = vperm.xlu0 %1841, %v1819
          %v1843 = vpop.permute.xlu0 %1842
          %v1846 = vsel %vm509, %v1821, 0
          %v1849 = vsel %vm509, %v1822, 0
          %v1852 = vsel %vm509, %v1823, 0
          %v1855 = vsel %vm509, %v1824, 0
          %1857 = vmatpush.msra.mxu0 0.0
          %1858 = vmatpush.msra.mxu0 0.0
          %1859 = vmatpush.msra.mxu0 0.0
          %1860 = vmatpush.msra.mxu0 0.0
          %1861 = vmatpush.msra.mxu0 0.0
          %1862 = vmatpush.msra.mxu0 0.0
          %1863 = vmatpush.msra.mxu0 0.0
          %1864 = vmatpush.msra.mxu0 0.0
          %1865 = vmatpush.msra.mxu0 0.0
          %1866 = vmatpush.msra.mxu0 0.0
          %1867 = vmatpush.msra.mxu0 0.0
          %1868 = vmatpush.msra.mxu0 0.0
          %1869 = vmatpush.msra.mxu0 0.0
          %1870 = vmatpush.msra.mxu0 0.0
          %v1871 = vand.u32 %v1810, 4294901760
          %1872 = vmatpush.msra.mxu0 %v1871
          %v1873 = vand.u32 %v1809, 4294901760
          %1874 = vmatpush.msra.mxu0 %v1873
          %v1875 = vand.u32 %v1846, 4294901760
          %v1876 = vsub.f32 %v1846, %v1875
          %v1877 = vand.u32 %v1876, 4294901760
          %v1878 = vsub.f32 %v1876, %v1877
          %v1879 = vand.u32 %v1878, 4294901760
          %1880 = vmatmul.f32.gmra.mxu0 %v1879
          %v1881 = vpop.f32.mrf.mxu0
          %v1882 = vadd.f32 %v1828, %v1881
          %v1883 = vand.u32 %v1849, 4294901760
          %v1884 = vsub.f32 %v1849, %v1883
          %v1885 = vand.u32 %v1884, 4294901760
          %v1886 = vsub.f32 %v1884, %v1885
          %v1887 = vand.u32 %v1886, 4294901760
          %1888 = vmatmul.f32.gmra.mxu0 %v1887
          %v1889 = vpop.f32.mrf.mxu0
          %v1890 = vadd.f32 %v1833, %v1889
          %v1891 = vand.u32 %v1852, 4294901760
          %v1892 = vsub.f32 %v1852, %v1891
          %v1893 = vand.u32 %v1892, 4294901760
          %v1894 = vsub.f32 %v1892, %v1893
          %v1895 = vand.u32 %v1894, 4294901760
          %1896 = vmatmul.f32.gmra.mxu0 %v1895
          %v1897 = vpop.f32.mrf.mxu0
          %v1898 = vadd.f32 %v1838, %v1897
          %v1899 = vand.u32 %v1855, 4294901760
          %v1900 = vsub.f32 %v1855, %v1899
          %v1901 = vand.u32 %v1900, 4294901760
          %v1902 = vsub.f32 %v1900, %v1901
          %v1903 = vand.u32 %v1902, 4294901760
          %1904 = vmatmul.f32.gmra.mxu0 %v1903
          %v1905 = vpop.f32.mrf.mxu0
          %v1906 = vadd.f32 %v1843, %v1905
          %1907 = vdwg.mxu0
          %1908 = vmatpush.msra.mxu0 0.0
          %1909 = vmatpush.msra.mxu0 0.0
          %1910 = vmatpush.msra.mxu0 0.0
          %1911 = vmatpush.msra.mxu0 0.0
          %1912 = vmatpush.msra.mxu0 0.0
          %1913 = vmatpush.msra.mxu0 0.0
          %1914 = vmatpush.msra.mxu0 0.0
          %1915 = vmatpush.msra.mxu0 0.0
          %1916 = vmatpush.msra.mxu0 0.0
          %1917 = vmatpush.msra.mxu0 0.0
          %1918 = vmatpush.msra.mxu0 0.0
          %1919 = vmatpush.msra.mxu0 0.0
          %1920 = vmatpush.msra.mxu0 0.0
          %1921 = vmatpush.msra.mxu0 0.0
          %v1922 = vand.u32 %v1810, 4294901760
          %v1923 = vsub.f32 %v1810, %v1922
          %v1924 = vand.u32 %v1923, 4294901760
          %v1925 = vsub.f32 %v1923, %v1924
          %v1926 = vand.u32 %v1925, 4294901760
          %1927 = vmatpush.msra.mxu0 %v1926
          %v1928 = vand.u32 %v1809, 4294901760
          %v1929 = vsub.f32 %v1809, %v1928
          %v1930 = vand.u32 %v1929, 4294901760
          %v1931 = vsub.f32 %v1929, %v1930
          %v1932 = vand.u32 %v1931, 4294901760
          %1933 = vmatpush.msra.mxu0 %v1932
          %v1934 = vand.u32 %v1846, 4294901760
          %1935 = vmatmul.f32.gmra.mxu0 %v1934
          %v1936 = vpop.f32.mrf.mxu0
          %v1937 = vadd.f32 %v1882, %v1936
          %v1938 = vand.u32 %v1849, 4294901760
          %1939 = vmatmul.f32.gmra.mxu0 %v1938
          %v1940 = vpop.f32.mrf.mxu0
          %v1941 = vadd.f32 %v1890, %v1940
          %v1942 = vand.u32 %v1852, 4294901760
          %1943 = vmatmul.f32.gmra.mxu0 %v1942
          %v1944 = vpop.f32.mrf.mxu0
          %v1945 = vadd.f32 %v1898, %v1944
          %v1946 = vand.u32 %v1855, 4294901760
          %1947 = vmatmul.f32.gmra.mxu0 %v1946
          %v1948 = vpop.f32.mrf.mxu0
          %v1949 = vadd.f32 %v1906, %v1948
          %1950 = vdwg.mxu0
          %1951 = vmatpush.msra.mxu0 0.0
          %1952 = vmatpush.msra.mxu0 0.0
          %1953 = vmatpush.msra.mxu0 0.0
          %1954 = vmatpush.msra.mxu0 0.0
          %1955 = vmatpush.msra.mxu0 0.0
          %1956 = vmatpush.msra.mxu0 0.0
          %1957 = vmatpush.msra.mxu0 0.0
          %1958 = vmatpush.msra.mxu0 0.0
          %1959 = vmatpush.msra.mxu0 0.0
          %1960 = vmatpush.msra.mxu0 0.0
          %1961 = vmatpush.msra.mxu0 0.0
          %1962 = vmatpush.msra.mxu0 0.0
          %1963 = vmatpush.msra.mxu0 0.0
          %1964 = vmatpush.msra.mxu0 0.0
          %v1965 = vand.u32 %v1810, 4294901760
          %v1966 = vsub.f32 %v1810, %v1965
          %1967 = vmatpush.msra.mxu0 %v1966
          %v1968 = vand.u32 %v1809, 4294901760
          %v1969 = vsub.f32 %v1809, %v1968
          %1970 = vmatpush.msra.mxu0 %v1969
          %v1971 = vand.u32 %v1846, 4294901760
          %v1972 = vsub.f32 %v1846, %v1971
          %1973 = vmatmul.f32.gmra.mxu0 %v1972
          %v1974 = vpop.f32.mrf.mxu0
          %v1975 = vadd.f32 %v1937, %v1974
          %v1976 = vand.u32 %v1849, 4294901760
          %v1977 = vsub.f32 %v1849, %v1976
          %1978 = vmatmul.f32.gmra.mxu0 %v1977
          %v1979 = vpop.f32.mrf.mxu0
          %v1980 = vadd.f32 %v1941, %v1979
          %v1981 = vand.u32 %v1852, 4294901760
          %v1982 = vsub.f32 %v1852, %v1981
          %1983 = vmatmul.f32.gmra.mxu0 %v1982
          %v1984 = vpop.f32.mrf.mxu0
          %v1985 = vadd.f32 %v1945, %v1984
          %v1986 = vand.u32 %v1855, 4294901760
          %v1987 = vsub.f32 %v1855, %v1986
          %1988 = vmatmul.f32.gmra.mxu0 %v1987
          %v1989 = vpop.f32.mrf.mxu0
          %v1990 = vadd.f32 %v1949, %v1989
          %1991 = vdwg.mxu0
          %1992 = vmatpush.msra.mxu0 0.0
          %1993 = vmatpush.msra.mxu0 0.0
          %1994 = vmatpush.msra.mxu0 0.0
          %1995 = vmatpush.msra.mxu0 0.0
          %1996 = vmatpush.msra.mxu0 0.0
          %1997 = vmatpush.msra.mxu0 0.0
          %1998 = vmatpush.msra.mxu0 0.0
          %1999 = vmatpush.msra.mxu0 0.0
          %2000 = vmatpush.msra.mxu0 0.0
          %2001 = vmatpush.msra.mxu0 0.0
          %2002 = vmatpush.msra.mxu0 0.0
          %2003 = vmatpush.msra.mxu0 0.0
          %2004 = vmatpush.msra.mxu0 0.0
          %2005 = vmatpush.msra.mxu0 0.0
          %v2006 = vand.u32 %v1810, 4294901760
          %2007 = vmatpush.msra.mxu0 %v2006
          %v2008 = vand.u32 %v1809, 4294901760
          %2009 = vmatpush.msra.mxu0 %v2008
          %v2010 = vand.u32 %v1846, 4294901760
          %v2011 = vsub.f32 %v1846, %v2010
          %v2012 = vand.u32 %v2011, 4294901760
          %2013 = vmatmul.f32.gmra.mxu0 %v2012
          %v2014 = vpop.f32.mrf.mxu0
          %v2015 = vadd.f32 %v1975, %v2014
          %v2016 = vand.u32 %v1849, 4294901760
          %v2017 = vsub.f32 %v1849, %v2016
          %v2018 = vand.u32 %v2017, 4294901760
          %2019 = vmatmul.f32.gmra.mxu0 %v2018
          %v2020 = vpop.f32.mrf.mxu0
          %v2021 = vadd.f32 %v1980, %v2020
          %v2022 = vand.u32 %v1852, 4294901760
          %v2023 = vsub.f32 %v1852, %v2022
          %v2024 = vand.u32 %v2023, 4294901760
          %2025 = vmatmul.f32.gmra.mxu0 %v2024
          %v2026 = vpop.f32.mrf.mxu0
          %v2027 = vadd.f32 %v1985, %v2026
          %v2028 = vand.u32 %v1855, 4294901760
          %v2029 = vsub.f32 %v1855, %v2028
          %v2030 = vand.u32 %v2029, 4294901760
          %2031 = vmatmul.f32.gmra.mxu0 %v2030
          %v2032 = vpop.f32.mrf.mxu0
          %v2033 = vadd.f32 %v1990, %v2032
          %2034 = vdwg.mxu0
          %2035 = vmatpush.msra.mxu0 0.0
          %2036 = vmatpush.msra.mxu0 0.0
          %2037 = vmatpush.msra.mxu0 0.0
          %2038 = vmatpush.msra.mxu0 0.0
          %2039 = vmatpush.msra.mxu0 0.0
          %2040 = vmatpush.msra.mxu0 0.0
          %2041 = vmatpush.msra.mxu0 0.0
          %2042 = vmatpush.msra.mxu0 0.0
          %2043 = vmatpush.msra.mxu0 0.0
          %2044 = vmatpush.msra.mxu0 0.0
          %2045 = vmatpush.msra.mxu0 0.0
          %2046 = vmatpush.msra.mxu0 0.0
          %2047 = vmatpush.msra.mxu0 0.0
          %2048 = vmatpush.msra.mxu0 0.0
          %v2049 = vand.u32 %v1810, 4294901760
          %v2050 = vsub.f32 %v1810, %v2049
          %v2051 = vand.u32 %v2050, 4294901760
          %2052 = vmatpush.msra.mxu0 %v2051
          %v2053 = vand.u32 %v1809, 4294901760
          %v2054 = vsub.f32 %v1809, %v2053
          %v2055 = vand.u32 %v2054, 4294901760
          %2056 = vmatpush.msra.mxu0 %v2055
          %v2057 = vand.u32 %v1846, 4294901760
          %2058 = vmatmul.f32.gmra.mxu0 %v2057
          %v2059 = vpop.f32.mrf.mxu0
          %v2060 = vadd.f32 %v2015, %v2059
          %v2061 = vand.u32 %v1849, 4294901760
          %2062 = vmatmul.f32.gmra.mxu0 %v2061
          %v2063 = vpop.f32.mrf.mxu0
          %v2064 = vadd.f32 %v2021, %v2063
          %v2065 = vand.u32 %v1852, 4294901760
          %2066 = vmatmul.f32.gmra.mxu0 %v2065
          %v2067 = vpop.f32.mrf.mxu0
          %v2068 = vadd.f32 %v2027, %v2067
          %v2069 = vand.u32 %v1855, 4294901760
          %2070 = vmatmul.f32.gmra.mxu0 %v2069
          %v2071 = vpop.f32.mrf.mxu0
          %v2072 = vadd.f32 %v2033, %v2071
          %2073 = vdwg.mxu0
          %2074 = vmatpush.msra.mxu0 0.0
          %2075 = vmatpush.msra.mxu0 0.0
          %2076 = vmatpush.msra.mxu0 0.0
          %2077 = vmatpush.msra.mxu0 0.0
          %2078 = vmatpush.msra.mxu0 0.0
          %2079 = vmatpush.msra.mxu0 0.0
          %2080 = vmatpush.msra.mxu0 0.0
          %2081 = vmatpush.msra.mxu0 0.0
          %2082 = vmatpush.msra.mxu0 0.0
          %2083 = vmatpush.msra.mxu0 0.0
          %2084 = vmatpush.msra.mxu0 0.0
          %2085 = vmatpush.msra.mxu0 0.0
          %2086 = vmatpush.msra.mxu0 0.0
          %2087 = vmatpush.msra.mxu0 0.0
          %v2088 = vand.u32 %v1810, 4294901760
          %2089 = vmatpush.msra.mxu0 %v2088
          %v2090 = vand.u32 %v1809, 4294901760
          %2091 = vmatpush.msra.mxu0 %v2090
          %v2092 = vand.u32 %v1846, 4294901760
          %2093 = vmatmul.f32.gmra.mxu0 %v2092
          %v2094 = vpop.f32.mrf.mxu0
          %v2095 = vadd.f32 %v2060, %v2094
          %v2096 = vand.u32 %v1849, 4294901760
          %2097 = vmatmul.f32.gmra.mxu0 %v2096
          %v2098 = vpop.f32.mrf.mxu0
          %v2099 = vadd.f32 %v2064, %v2098
          %v2100 = vand.u32 %v1852, 4294901760
          %2101 = vmatmul.f32.gmra.mxu0 %v2100
          %v2102 = vpop.f32.mrf.mxu0
          %v2103 = vadd.f32 %v2068, %v2102
          %v2104 = vand.u32 %v1855, 4294901760
          %2105 = vmatmul.f32.gmra.mxu0 %v2104
          %v2106 = vpop.f32.mrf.mxu0
          %v2107 = vadd.f32 %v2072, %v2106
          %2108 = vdwg.mxu0
          %vm2109 = vcmp.ge.f32.partialorder %v2095, 0.0
          %vm2110 = vcmp.ge.f32.partialorder %v2099, 0.0
          %vm2111 = vcmp.ge.f32.partialorder %v2103, 0.0
          %vm2112 = vcmp.ge.f32.partialorder %v2107, 0.0
          %2113 = vset.pattern.permute.xlu0 9
          %2114 = vperm.xlu0 %2113, %v1816
          %v2115 = vpop.permute.xlu0 %2114
          %2117 = vset.pattern.permute.xlu0 9
          %2118 = vperm.xlu0 %2117, %v1817
          %v2119 = vpop.permute.xlu0 %2118
          %2121 = vset.pattern.permute.xlu0 9
          %2122 = vperm.xlu0 %2121, %v1818
          %v2123 = vpop.permute.xlu0 %2122
          %2125 = vset.pattern.permute.xlu0 9
          %2126 = vperm.xlu0 %2125, %v1819
          %v2127 = vpop.permute.xlu0 %2126
          %v2129 = vmul.f32 %v2115, %v2095
          %v2130 = vmul.f32 %v2119, %v2099
          %v2131 = vmul.f32 %v2123, %v2103
          %v2132 = vmul.f32 %v2127, %v2107
          %v2133 = vsel %vm2109, %v2095, %v2129
          %v2134 = vsel %vm2110, %v2099, %v2130
          %v2135 = vsel %vm2111, %v2103, %v2131
          %v2136 = vsel %vm2112, %v2107, %v2132
          %v2137 = vsel %vm399, %v2133, 0.0
          %v2138 = vsel %vm399, %v2134, 0.0
          %v2139 = vsel %vm399, %v2135, 0.0
          %v2140 = vsel %vm399, %v2136, 0.0
          %2141 = vadd.xlane.f32.xlu0 %v2137
          %v2142 = vpop.xlane.xlu0 %2141
          %2143 = vadd.xlane.f32.xlu0 %v2138
          %v2144 = vpop.xlane.xlu0 %2143
          %2145 = vadd.xlane.f32.xlu0 %v2139
          %v2146 = vpop.xlane.xlu0 %2145
          %2147 = vadd.xlane.f32.xlu0 %v2140
          %v2148 = vpop.xlane.xlu0 %2147
          %v2149 = vmul.f32 %v2137, %v2137
          %v2150 = vmul.f32 %v2138, %v2138
          %v2151 = vmul.f32 %v2139, %v2139
          %v2152 = vmul.f32 %v2140, %v2140
          %2153 = vadd.xlane.f32.xlu0 %v2149
          %v2154 = vpop.xlane.xlu0 %2153
          %2155 = vadd.xlane.f32.xlu0 %v2150
          %v2156 = vpop.xlane.xlu0 %2155
          %2157 = vadd.xlane.f32.xlu0 %v2151
          %v2158 = vpop.xlane.xlu0 %2157
          %2159 = vadd.xlane.f32.xlu0 %v2152
          %v2160 = vpop.xlane.xlu0 %2159
          %v2161 = vsel %vm412, %v2142, 0.0
          %v2162 = vsel %vm412, %v2144, 0.0
          %v2163 = vadd.f32 %v2161, %v2162
          %v2164 = vsel %vm412, %v2146, 0.0
          %v2165 = vadd.f32 %v2163, %v2164
          %v2166 = vsel %vm412, %v2148, 0.0
          %v2167 = vadd.f32 %v2165, %v2166
          %2168 = vadd.xlane.f32.xlu0 %v2167
          %v2169 = vpop.xlane.xlu0 %2168
          %v2170 = vrot.slane %v2169, 4
          %v2171 = vadd.f32 %v2169, %v2170
          %v2172 = vrot.slane %v2171, 2
          %v2173 = vadd.f32 %v2171, %v2172
          %v2174 = vrot.slane %v2173, 1
          %v2175 = vadd.f32 %v2173, %v2174
          %s2176 = vtos %v2175
          %s2177 = smul.f32 %s2176, 0.0009765625
          %v2178 = vsel %vm412, %v2154, 0.0
          %v2179 = vsel %vm412, %v2156, 0.0
          %v2180 = vadd.f32 %v2178, %v2179
          %v2181 = vsel %vm412, %v2158, 0.0
          %v2182 = vadd.f32 %v2180, %v2181
          %v2183 = vsel %vm412, %v2160, 0.0
          %v2184 = vadd.f32 %v2182, %v2183
          %2185 = vadd.xlane.f32.xlu0 %v2184
          %v2186 = vpop.xlane.xlu0 %2185
          %v2187 = vrot.slane %v2186, 4
          %v2188 = vadd.f32 %v2186, %v2187
          %v2189 = vrot.slane %v2188, 2
          %v2190 = vadd.f32 %v2188, %v2189
          %v2191 = vrot.slane %v2190, 1
          %v2192 = vadd.f32 %v2190, %v2191
          %s2193 = vtos %v2192
          %s2194 = smul.f32 %s2193, 0.0009765625
          %s2195 = smul.f32 %s2177, %s2177
          %s2196 = ssub.f32 %s2194, %s2195
          %s2197 = smax.f32 %s2196, 0.0
          %s2198 = sadd.f32 %s2197, 1e-08
          %v2199 = vstv %s2198
          %v2200 = vrsqrt.pop %v2199
          %v2201 = vmul.f32 %v2200, %v2199
          %v2202 = vmul.f32 %v2201, %v2200
          %v2203 = vmul.f32 0.5, %v2202
          %v2204 = vsub.f32 1.5, %v2203
          %v2205 = vmul.f32 %v2200, %v2204
          %vm2206 = vweird.f32 %v2199
          %vm2207 = vweird.f32 %v2200
          %vm2208 = vmor %vm2206, %vm2207
          %v2209 = vsel %vm2208, %v2200, %v2205
          %s2210 = vtos %v2209
          %v2211 = vstv %s2210
          %v2212 = vmul.f32 %v1816, %v2211
          %v2213 = vmul.f32 %v1817, %v2211
          %v2214 = vmul.f32 %v1818, %v2211
          %v2215 = vmul.f32 %v1819, %v2211
          %v2216 = vstv %s2177
          %v2217 = vmul.f32 %v2216, %v2212
          %v2218 = vmul.f32 %v2216, %v2213
          %v2219 = vmul.f32 %v2216, %v2214
          %v2220 = vmul.f32 %v2216, %v2215
          %2225 = vrot.lane.b32.xlu0 %v2217, 1
          %v2226 = vpop.permute.xlu0 %2225
          %2227 = vrot.lane.b32.xlu0 %v2218, 1
          %v2228 = vpop.permute.xlu0 %2227
          %2229 = vrot.lane.b32.xlu0 %v2219, 1
          %v2230 = vpop.permute.xlu0 %2229
          %2231 = vrot.lane.b32.xlu0 %v2220, 1
          %v2232 = vpop.permute.xlu0 %2231
          %v2237 = vsub.f32 %v1816, %v2226
          %v2238 = vsub.f32 %v1817, %v2228
          %v2239 = vsub.f32 %v1818, %v2230
          %v2240 = vsub.f32 %v1819, %v2232
          %2242 = vset.pattern.permute.xlu0 1
          %2243 = vperm.xlu0 %2242, %v2212
          %v2244 = vpop.permute.xlu0 %2243
          %2247 = vset.pattern.permute.xlu0 1
          %2248 = vperm.xlu0 %2247, %v2213
          %v2249 = vpop.permute.xlu0 %2248
          %2252 = vset.pattern.permute.xlu0 1
          %2253 = vperm.xlu0 %2252, %v2214
          %v2254 = vpop.permute.xlu0 %2253
          %2257 = vset.pattern.permute.xlu0 1
          %2258 = vperm.xlu0 %2257, %v2215
          %v2259 = vpop.permute.xlu0 %2258
          %v2261 = vmul.f32 %v2133, %v2244
          %v2262 = vmul.f32 %v2134, %v2249
          %v2263 = vmul.f32 %v2135, %v2254
          %v2264 = vmul.f32 %v2136, %v2259
          %2266 = vset.pattern.permute.xlu0 2
          %2267 = vperm.xlu0 %2266, %v2237
          %v2268 = vpop.permute.xlu0 %2267
          %2271 = vset.pattern.permute.xlu0 2
          %2272 = vperm.xlu0 %2271, %v2238
          %v2273 = vpop.permute.xlu0 %2272
          %2276 = vset.pattern.permute.xlu0 2
          %2277 = vperm.xlu0 %2276, %v2239
          %v2278 = vpop.permute.xlu0 %2277
          %2281 = vset.pattern.permute.xlu0 2
          %2282 = vperm.xlu0 %2281, %v2240
          %v2283 = vpop.permute.xlu0 %2282
          %v2285 = vadd.f32 %v2261, %v2268
          %v2286 = vadd.f32 %v2262, %v2273
          %v2287 = vadd.f32 %v2263, %v2278
          %v2288 = vadd.f32 %v2264, %v2283
          %2289 = vrot.lane.b32.xlu0 %v2285, 2
          %v2290 = vpop.permute.xlu0 %2289
          %2291 = vrot.lane.b32.xlu0 %v2286, 2
          %v2292 = vpop.permute.xlu0 %2291
          %2293 = vrot.lane.b32.xlu0 %v2287, 2
          %v2294 = vpop.permute.xlu0 %2293
          %2295 = vrot.lane.b32.xlu0 %v2288, 2
          %v2296 = vpop.permute.xlu0 %2295
          %v2297 = vsel %vm392, 1, 0
          %vm2298 = vcmp.eq.s32.totalorder %v2297, 1
          %v2299 = vsel %vm2298, %v2290, 0.0
          %v2300 = vsel %vm2298, %v2292, 0.0
          %v2301 = vsel %vm2298, %v2294, 0.0
          %v2302 = vsel %vm2298, %v2296, 0.0
          %2303 = vset.pattern.permute.xlu0 3
          %2304 = vperm.xlu0 %2303, %v1816
          %v2305 = vpop.permute.xlu0 %2304
          %2307 = vset.pattern.permute.xlu0 3
          %2308 = vperm.xlu0 %2307, %v1817
          %v2309 = vpop.permute.xlu0 %2308
          %2311 = vset.pattern.permute.xlu0 3
          %2312 = vperm.xlu0 %2311, %v1818
          %v2313 = vpop.permute.xlu0 %2312
          %2315 = vset.pattern.permute.xlu0 3
          %2316 = vperm.xlu0 %2315, %v1819
          %v2317 = vpop.permute.xlu0 %2316
          %v2319 = vmul.f32 %v2305, %v2299
          %v2320 = vmul.f32 %v2309, %v2300
          %v2321 = vmul.f32 %v2313, %v2301
          %v2322 = vmul.f32 %v2317, %v2302
          %2323 = vset.pattern.permute.xlu0 4
          %2324 = vperm.xlu0 %2323, %v1816
          %v2325 = vpop.permute.xlu0 %2324
          %2327 = vset.pattern.permute.xlu0 4
          %2328 = vperm.xlu0 %2327, %v1817
          %v2329 = vpop.permute.xlu0 %2328
          %2331 = vset.pattern.permute.xlu0 4
          %2332 = vperm.xlu0 %2331, %v1818
          %v2333 = vpop.permute.xlu0 %2332
          %2335 = vset.pattern.permute.xlu0 4
          %2336 = vperm.xlu0 %2335, %v1819
          %v2337 = vpop.permute.xlu0 %2336
          %v2339 = vmul.f32 %v2325, %v2285
          %v2340 = vmul.f32 %v2329, %v2286
          %v2341 = vmul.f32 %v2333, %v2287
          %v2342 = vmul.f32 %v2337, %v2288
          %v2343 = vadd.f32 %v2319, %v2339
          %v2344 = vadd.f32 %v2320, %v2340
          %v2345 = vadd.f32 %v2321, %v2341
          %v2346 = vadd.f32 %v2322, %v2342
          %2347 = vrot.lane.b32.xlu0 %v2285, 126
          %v2348 = vpop.permute.xlu0 %2347
          %2349 = vrot.lane.b32.xlu0 %v2286, 126
          %v2350 = vpop.permute.xlu0 %2349
          %2351 = vrot.lane.b32.xlu0 %v2287, 126
          %v2352 = vpop.permute.xlu0 %2351
          %2353 = vrot.lane.b32.xlu0 %v2288, 126
          %v2354 = vpop.permute.xlu0 %2353
          %v2355 = vsel %vm393, 1, 0
          %vm2356 = vcmp.eq.s32.totalorder %v2355, 1
          %v2357 = vsel %vm2356, %v2348, 0.0
          %v2358 = vsel %vm2356, %v2350, 0.0
          %v2359 = vsel %vm2356, %v2352, 0.0
          %v2360 = vsel %vm2356, %v2354, 0.0
          %2361 = vset.pattern.permute.xlu0 5
          %2362 = vperm.xlu0 %2361, %v1816
          %v2363 = vpop.permute.xlu0 %2362
          %2365 = vset.pattern.permute.xlu0 5
          %2366 = vperm.xlu0 %2365, %v1817
          %v2367 = vpop.permute.xlu0 %2366
          %2369 = vset.pattern.permute.xlu0 5
          %2370 = vperm.xlu0 %2369, %v1818
          %v2371 = vpop.permute.xlu0 %2370
          %2373 = vset.pattern.permute.xlu0 5
          %2374 = vperm.xlu0 %2373, %v1819
          %v2375 = vpop.permute.xlu0 %2374
          %v2377 = vmul.f32 %v2363, %v2357
          %v2378 = vmul.f32 %v2367, %v2358
          %v2379 = vmul.f32 %v2371, %v2359
          %v2380 = vmul.f32 %v2375, %v2360
          %v2381 = vadd.f32 %v2343, %v2377
          %v2382 = vadd.f32 %v2344, %v2378
          %v2383 = vadd.f32 %v2345, %v2379
          %v2384 = vadd.f32 %v2346, %v2380
          %2385 = vset.pattern.permute.xlu0 6
          %2386 = vperm.xlu0 %2385, %v1816
          %v2387 = vpop.permute.xlu0 %2386
          %2389 = vset.pattern.permute.xlu0 6
          %2390 = vperm.xlu0 %2389, %v1817
          %v2391 = vpop.permute.xlu0 %2390
          %2393 = vset.pattern.permute.xlu0 6
          %2394 = vperm.xlu0 %2393, %v1818
          %v2395 = vpop.permute.xlu0 %2394
          %2397 = vset.pattern.permute.xlu0 6
          %2398 = vperm.xlu0 %2397, %v1819
          %v2399 = vpop.permute.xlu0 %2398
          %v2401 = vadd.f32 %v2381, %v2387
          %v2402 = vadd.f32 %v2382, %v2391
          %v2403 = vadd.f32 %v2383, %v2395
          %v2404 = vadd.f32 %v2384, %v2399
          %vm2405 = vcmp.ge.f32.partialorder %v2401, 0.0
          %vm2406 = vcmp.ge.f32.partialorder %v2402, 0.0
          %vm2407 = vcmp.ge.f32.partialorder %v2403, 0.0
          %vm2408 = vcmp.ge.f32.partialorder %v2404, 0.0
          %2409 = vset.pattern.permute.xlu0 10
          %2410 = vperm.xlu0 %2409, %v1816
          %v2411 = vpop.permute.xlu0 %2410
          %2413 = vset.pattern.permute.xlu0 10
          %2414 = vperm.xlu0 %2413, %v1817
          %v2415 = vpop.permute.xlu0 %2414
          %2417 = vset.pattern.permute.xlu0 10
          %2418 = vperm.xlu0 %2417, %v1818
          %v2419 = vpop.permute.xlu0 %2418
          %2421 = vset.pattern.permute.xlu0 10
          %2422 = vperm.xlu0 %2421, %v1819
          %v2423 = vpop.permute.xlu0 %2422
          %v2425 = vmul.f32 %v2411, %v2401
          %v2426 = vmul.f32 %v2415, %v2402
          %v2427 = vmul.f32 %v2419, %v2403
          %v2428 = vmul.f32 %v2423, %v2404
          %v2429 = vsel %vm2405, %v2401, %v2425
          %v2430 = vsel %vm2406, %v2402, %v2426
          %v2431 = vsel %vm2407, %v2403, %v2427
          %v2432 = vsel %vm2408, %v2404, %v2428
          %v2433 = vsel %vm399, %v2429, 0.0
          %v2434 = vsel %vm399, %v2430, 0.0
          %v2435 = vsel %vm399, %v2431, 0.0
          %v2436 = vsel %vm399, %v2432, 0.0
          %2437 = vadd.xlane.f32.xlu0 %v2433
          %v2438 = vpop.xlane.xlu0 %2437
          %2439 = vadd.xlane.f32.xlu0 %v2434
          %v2440 = vpop.xlane.xlu0 %2439
          %2441 = vadd.xlane.f32.xlu0 %v2435
          %v2442 = vpop.xlane.xlu0 %2441
          %2443 = vadd.xlane.f32.xlu0 %v2436
          %v2444 = vpop.xlane.xlu0 %2443
          %v2445 = vmul.f32 %v2433, %v2433
          %v2446 = vmul.f32 %v2434, %v2434
          %v2447 = vmul.f32 %v2435, %v2435
          %v2448 = vmul.f32 %v2436, %v2436
          %2449 = vadd.xlane.f32.xlu0 %v2445
          %v2450 = vpop.xlane.xlu0 %2449
          %2451 = vadd.xlane.f32.xlu0 %v2446
          %v2452 = vpop.xlane.xlu0 %2451
          %2453 = vadd.xlane.f32.xlu0 %v2447
          %v2454 = vpop.xlane.xlu0 %2453
          %2455 = vadd.xlane.f32.xlu0 %v2448
          %v2456 = vpop.xlane.xlu0 %2455
          %v2457 = vsel %vm412, %v2438, 0.0
          %v2458 = vsel %vm412, %v2440, 0.0
          %v2459 = vadd.f32 %v2457, %v2458
          %v2460 = vsel %vm412, %v2442, 0.0
          %v2461 = vadd.f32 %v2459, %v2460
          %v2462 = vsel %vm412, %v2444, 0.0
          %v2463 = vadd.f32 %v2461, %v2462
          %2464 = vadd.xlane.f32.xlu0 %v2463
          %v2465 = vpop.xlane.xlu0 %2464
          %v2466 = vrot.slane %v2465, 4
          %v2467 = vadd.f32 %v2465, %v2466
          %v2468 = vrot.slane %v2467, 2
          %v2469 = vadd.f32 %v2467, %v2468
          %v2470 = vrot.slane %v2469, 1
          %v2471 = vadd.f32 %v2469, %v2470
          %s2472 = vtos %v2471
          %s2473 = smul.f32 %s2472, 0.0009765625
          %v2474 = vsel %vm412, %v2450, 0.0
          %v2475 = vsel %vm412, %v2452, 0.0
          %v2476 = vadd.f32 %v2474, %v2475
          %v2477 = vsel %vm412, %v2454, 0.0
          %v2478 = vadd.f32 %v2476, %v2477
          %v2479 = vsel %vm412, %v2456, 0.0
          %v2480 = vadd.f32 %v2478, %v2479
          %2481 = vadd.xlane.f32.xlu0 %v2480
          %v2482 = vpop.xlane.xlu0 %2481
          %v2483 = vrot.slane %v2482, 4
          %v2484 = vadd.f32 %v2482, %v2483
          %v2485 = vrot.slane %v2484, 2
          %v2486 = vadd.f32 %v2484, %v2485
          %v2487 = vrot.slane %v2486, 1
          %v2488 = vadd.f32 %v2486, %v2487
          %s2489 = vtos %v2488
          %s2490 = smul.f32 %s2489, 0.0009765625
          %s2491 = smul.f32 %s2473, %s2473
          %s2492 = ssub.f32 %s2490, %s2491
          %s2493 = smax.f32 %s2492, 0.0
          %s2494 = sadd.f32 %s2493, 1e-08
          %v2495 = vstv %s2494
          %v2496 = vrsqrt.pop %v2495
          %v2497 = vmul.f32 %v2496, %v2495
          %v2498 = vmul.f32 %v2497, %v2496
          %v2499 = vmul.f32 0.5, %v2498
          %v2500 = vsub.f32 1.5, %v2499
          %v2501 = vmul.f32 %v2496, %v2500
          %vm2502 = vweird.f32 %v2495
          %vm2503 = vweird.f32 %v2496
          %vm2504 = vmor %vm2502, %vm2503
          %v2505 = vsel %vm2504, %v2496, %v2501
          %s2506 = vtos %v2505
          %v2507 = vstv %s2506
          %v2508 = vmul.f32 %v1816, %v2507
          %v2509 = vmul.f32 %v1817, %v2507
          %v2510 = vmul.f32 %v1818, %v2507
          %v2511 = vmul.f32 %v1819, %v2507
          %v2512 = vstv %s2473
          %v2513 = vmul.f32 %v2512, %v2508
          %v2514 = vmul.f32 %v2512, %v2509
          %v2515 = vmul.f32 %v2512, %v2510
          %v2516 = vmul.f32 %v2512, %v2511
          %2521 = vrot.lane.b32.xlu0 %v2513, 1
          %v2522 = vpop.permute.xlu0 %2521
          %2523 = vrot.lane.b32.xlu0 %v2514, 1
          %v2524 = vpop.permute.xlu0 %2523
          %2525 = vrot.lane.b32.xlu0 %v2515, 1
          %v2526 = vpop.permute.xlu0 %2525
          %2527 = vrot.lane.b32.xlu0 %v2516, 1
          %v2528 = vpop.permute.xlu0 %2527
          %v2533 = vsub.f32 %v1816, %v2522
          %v2534 = vsub.f32 %v1817, %v2524
          %v2535 = vsub.f32 %v1818, %v2526
          %v2536 = vsub.f32 %v1819, %v2528
          %2538 = vset.pattern.permute.xlu0 7
          %2539 = vperm.xlu0 %2538, %v2508
          %v2540 = vpop.permute.xlu0 %2539
          %2543 = vset.pattern.permute.xlu0 7
          %2544 = vperm.xlu0 %2543, %v2509
          %v2545 = vpop.permute.xlu0 %2544
          %2548 = vset.pattern.permute.xlu0 7
          %2549 = vperm.xlu0 %2548, %v2510
          %v2550 = vpop.permute.xlu0 %2549
          %2553 = vset.pattern.permute.xlu0 7
          %2554 = vperm.xlu0 %2553, %v2511
          %v2555 = vpop.permute.xlu0 %2554
          %v2557 = vmul.f32 %v2429, %v2540
          %v2558 = vmul.f32 %v2430, %v2545
          %v2559 = vmul.f32 %v2431, %v2550
          %v2560 = vmul.f32 %v2432, %v2555
          %2562 = vset.pattern.permute.xlu0 8
          %2563 = vperm.xlu0 %2562, %v2533
          %v2564 = vpop.permute.xlu0 %2563
          %2567 = vset.pattern.permute.xlu0 8
          %2568 = vperm.xlu0 %2567, %v2534
          %v2569 = vpop.permute.xlu0 %2568
          %2572 = vset.pattern.permute.xlu0 8
          %2573 = vperm.xlu0 %2572, %v2535
          %v2574 = vpop.permute.xlu0 %2573
          %2577 = vset.pattern.permute.xlu0 8
          %2578 = vperm.xlu0 %2577, %v2536
          %v2579 = vpop.permute.xlu0 %2578
          %v2581 = vadd.f32 %v2557, %v2564
          %v2582 = vadd.f32 %v2558, %v2569
          %v2583 = vadd.f32 %v2559, %v2574
          %v2584 = vadd.f32 %v2560, %v2579
          %s2585 = scalar_lea.vmem %s6, %s1814
          %v2586 = vld [vmem:[%s2585] sm:$0xff]
          %v2587 = vld [vmem:[%s2585 + $0x8] sm:$0xff]
          %v2588 = vld [vmem:[%s2585 + $0x10] sm:$0xff]
          %v2589 = vld [vmem:[%s2585 + $0x18] sm:$0xff]
          %s2590 = scalar_lea.vmem %s7, %s1814
          %v2591 = vld [vmem:[%s2590] sm:$0xff]
          %v2592 = vld [vmem:[%s2590 + $0x8] sm:$0xff]
          %v2593 = vld [vmem:[%s2590 + $0x10] sm:$0xff]
          %v2594 = vld [vmem:[%s2590 + $0x18] sm:$0xff]
          %2596 = vset.pattern.permute.xlu0 0
          %2597 = vperm.xlu0 %2596, %v2591
          %v2598 = vpop.permute.xlu0 %2597
          %2601 = vset.pattern.permute.xlu0 0
          %2602 = vperm.xlu0 %2601, %v2592
          %v2603 = vpop.permute.xlu0 %2602
          %2606 = vset.pattern.permute.xlu0 0
          %2607 = vperm.xlu0 %2606, %v2593
          %v2608 = vpop.permute.xlu0 %2607
          %2611 = vset.pattern.permute.xlu0 0
          %2612 = vperm.xlu0 %2611, %v2594
          %v2613 = vpop.permute.xlu0 %2612
          %v2616 = vsel %vm1518, %v2586, 0
          %v2619 = vsel %vm1518, %v2587, 0
          %v2622 = vsel %vm1518, %v2588, 0
          %v2625 = vsel %vm1518, %v2589, 0
          %2627 = vmatpush.msra.mxu0 0.0
          %2628 = vmatpush.msra.mxu0 0.0
          %2629 = vmatpush.msra.mxu0 0.0
          %2630 = vmatpush.msra.mxu0 0.0
          %2631 = vmatpush.msra.mxu0 0.0
          %2632 = vmatpush.msra.mxu0 0.0
          %2633 = vmatpush.msra.mxu0 0.0
          %2634 = vmatpush.msra.mxu0 0.0
          %2635 = vmatpush.msra.mxu0 0.0
          %2636 = vmatpush.msra.mxu0 0.0
          %2637 = vmatpush.msra.mxu0 0.0
          %2638 = vmatpush.msra.mxu0 0.0
          %v2639 = vand.u32 %v2584, 4294901760
          %2640 = vmatpush.msra.mxu0 %v2639
          %v2641 = vand.u32 %v2583, 4294901760
          %2642 = vmatpush.msra.mxu0 %v2641
          %v2643 = vand.u32 %v2582, 4294901760
          %2644 = vmatpush.msra.mxu0 %v2643
          %v2645 = vand.u32 %v2581, 4294901760
          %2646 = vmatpush.msra.mxu0 %v2645
          %v2647 = vand.u32 %v2616, 4294901760
          %v2648 = vsub.f32 %v2616, %v2647
          %v2649 = vand.u32 %v2648, 4294901760
          %v2650 = vsub.f32 %v2648, %v2649
          %v2651 = vand.u32 %v2650, 4294901760
          %2652 = vmatmul.f32.gmra.mxu0 %v2651
          %v2653 = vpop.f32.mrf.mxu0
          %v2654 = vadd.f32 %v2598, %v2653
          %v2655 = vand.u32 %v2619, 4294901760
          %v2656 = vsub.f32 %v2619, %v2655
          %v2657 = vand.u32 %v2656, 4294901760
          %v2658 = vsub.f32 %v2656, %v2657
          %v2659 = vand.u32 %v2658, 4294901760
          %2660 = vmatmul.f32.gmra.mxu0 %v2659
          %v2661 = vpop.f32.mrf.mxu0
          %v2662 = vadd.f32 %v2603, %v2661
          %v2663 = vand.u32 %v2622, 4294901760
          %v2664 = vsub.f32 %v2622, %v2663
          %v2665 = vand.u32 %v2664, 4294901760
          %v2666 = vsub.f32 %v2664, %v2665
          %v2667 = vand.u32 %v2666, 4294901760
          %2668 = vmatmul.f32.gmra.mxu0 %v2667
          %v2669 = vpop.f32.mrf.mxu0
          %v2670 = vadd.f32 %v2608, %v2669
          %v2671 = vand.u32 %v2625, 4294901760
          %v2672 = vsub.f32 %v2625, %v2671
          %v2673 = vand.u32 %v2672, 4294901760
          %v2674 = vsub.f32 %v2672, %v2673
          %v2675 = vand.u32 %v2674, 4294901760
          %2676 = vmatmul.f32.gmra.mxu0 %v2675
          %v2677 = vpop.f32.mrf.mxu0
          %v2678 = vadd.f32 %v2613, %v2677
          %2679 = vdwg.mxu0
          %2680 = vmatpush.msra.mxu0 0.0
          %2681 = vmatpush.msra.mxu0 0.0
          %2682 = vmatpush.msra.mxu0 0.0
          %2683 = vmatpush.msra.mxu0 0.0
          %2684 = vmatpush.msra.mxu0 0.0
          %2685 = vmatpush.msra.mxu0 0.0
          %2686 = vmatpush.msra.mxu0 0.0
          %2687 = vmatpush.msra.mxu0 0.0
          %2688 = vmatpush.msra.mxu0 0.0
          %2689 = vmatpush.msra.mxu0 0.0
          %2690 = vmatpush.msra.mxu0 0.0
          %2691 = vmatpush.msra.mxu0 0.0
          %v2692 = vand.u32 %v2584, 4294901760
          %v2693 = vsub.f32 %v2584, %v2692
          %v2694 = vand.u32 %v2693, 4294901760
          %v2695 = vsub.f32 %v2693, %v2694
          %v2696 = vand.u32 %v2695, 4294901760
          %2697 = vmatpush.msra.mxu0 %v2696
          %v2698 = vand.u32 %v2583, 4294901760
          %v2699 = vsub.f32 %v2583, %v2698
          %v2700 = vand.u32 %v2699, 4294901760
          %v2701 = vsub.f32 %v2699, %v2700
          %v2702 = vand.u32 %v2701, 4294901760
          %2703 = vmatpush.msra.mxu0 %v2702
          %v2704 = vand.u32 %v2582, 4294901760
          %v2705 = vsub.f32 %v2582, %v2704
          %v2706 = vand.u32 %v2705, 4294901760
          %v2707 = vsub.f32 %v2705, %v2706
          %v2708 = vand.u32 %v2707, 4294901760
          %2709 = vmatpush.msra.mxu0 %v2708
          %v2710 = vand.u32 %v2581, 4294901760
          %v2711 = vsub.f32 %v2581, %v2710
          %v2712 = vand.u32 %v2711, 4294901760
          %v2713 = vsub.f32 %v2711, %v2712
          %v2714 = vand.u32 %v2713, 4294901760
          %2715 = vmatpush.msra.mxu0 %v2714
          %v2716 = vand.u32 %v2616, 4294901760
          %2717 = vmatmul.f32.gmra.mxu0 %v2716
          %v2718 = vpop.f32.mrf.mxu0
          %v2719 = vadd.f32 %v2654, %v2718
          %v2720 = vand.u32 %v2619, 4294901760
          %2721 = vmatmul.f32.gmra.mxu0 %v2720
          %v2722 = vpop.f32.mrf.mxu0
          %v2723 = vadd.f32 %v2662, %v2722
          %v2724 = vand.u32 %v2622, 4294901760
          %2725 = vmatmul.f32.gmra.mxu0 %v2724
          %v2726 = vpop.f32.mrf.mxu0
          %v2727 = vadd.f32 %v2670, %v2726
          %v2728 = vand.u32 %v2625, 4294901760
          %2729 = vmatmul.f32.gmra.mxu0 %v2728
          %v2730 = vpop.f32.mrf.mxu0
          %v2731 = vadd.f32 %v2678, %v2730
          %2732 = vdwg.mxu0
          %2733 = vmatpush.msra.mxu0 0.0
          %2734 = vmatpush.msra.mxu0 0.0
          %2735 = vmatpush.msra.mxu0 0.0
          %2736 = vmatpush.msra.mxu0 0.0
          %2737 = vmatpush.msra.mxu0 0.0
          %2738 = vmatpush.msra.mxu0 0.0
          %2739 = vmatpush.msra.mxu0 0.0
          %2740 = vmatpush.msra.mxu0 0.0
          %2741 = vmatpush.msra.mxu0 0.0
          %2742 = vmatpush.msra.mxu0 0.0
          %2743 = vmatpush.msra.mxu0 0.0
          %2744 = vmatpush.msra.mxu0 0.0
          %v2745 = vand.u32 %v2584, 4294901760
          %v2746 = vsub.f32 %v2584, %v2745
          %2747 = vmatpush.msra.mxu0 %v2746
          %v2748 = vand.u32 %v2583, 4294901760
          %v2749 = vsub.f32 %v2583, %v2748
          %2750 = vmatpush.msra.mxu0 %v2749
          %v2751 = vand.u32 %v2582, 4294901760
          %v2752 = vsub.f32 %v2582, %v2751
          %2753 = vmatpush.msra.mxu0 %v2752
          %v2754 = vand.u32 %v2581, 4294901760
          %v2755 = vsub.f32 %v2581, %v2754
          %2756 = vmatpush.msra.mxu0 %v2755
          %v2757 = vand.u32 %v2616, 4294901760
          %v2758 = vsub.f32 %v2616, %v2757
          %2759 = vmatmul.f32.gmra.mxu0 %v2758
          %v2760 = vpop.f32.mrf.mxu0
          %v2761 = vadd.f32 %v2719, %v2760
          %v2762 = vand.u32 %v2619, 4294901760
          %v2763 = vsub.f32 %v2619, %v2762
          %2764 = vmatmul.f32.gmra.mxu0 %v2763
          %v2765 = vpop.f32.mrf.mxu0
          %v2766 = vadd.f32 %v2723, %v2765
          %v2767 = vand.u32 %v2622, 4294901760
          %v2768 = vsub.f32 %v2622, %v2767
          %2769 = vmatmul.f32.gmra.mxu0 %v2768
          %v2770 = vpop.f32.mrf.mxu0
          %v2771 = vadd.f32 %v2727, %v2770
          %v2772 = vand.u32 %v2625, 4294901760
          %v2773 = vsub.f32 %v2625, %v2772
          %2774 = vmatmul.f32.gmra.mxu0 %v2773
          %v2775 = vpop.f32.mrf.mxu0
          %v2776 = vadd.f32 %v2731, %v2775
          %2777 = vdwg.mxu0
          %2778 = vmatpush.msra.mxu0 0.0
          %2779 = vmatpush.msra.mxu0 0.0
          %2780 = vmatpush.msra.mxu0 0.0
          %2781 = vmatpush.msra.mxu0 0.0
          %2782 = vmatpush.msra.mxu0 0.0
          %2783 = vmatpush.msra.mxu0 0.0
          %2784 = vmatpush.msra.mxu0 0.0
          %2785 = vmatpush.msra.mxu0 0.0
          %2786 = vmatpush.msra.mxu0 0.0
          %2787 = vmatpush.msra.mxu0 0.0
          %2788 = vmatpush.msra.mxu0 0.0
          %2789 = vmatpush.msra.mxu0 0.0
          %v2790 = vand.u32 %v2584, 4294901760
          %2791 = vmatpush.msra.mxu0 %v2790
          %v2792 = vand.u32 %v2583, 4294901760
          %2793 = vmatpush.msra.mxu0 %v2792
          %v2794 = vand.u32 %v2582, 4294901760
          %2795 = vmatpush.msra.mxu0 %v2794
          %v2796 = vand.u32 %v2581, 4294901760
          %2797 = vmatpush.msra.mxu0 %v2796
          %v2798 = vand.u32 %v2616, 4294901760
          %v2799 = vsub.f32 %v2616, %v2798
          %v2800 = vand.u32 %v2799, 4294901760
          %2801 = vmatmul.f32.gmra.mxu0 %v2800
          %v2802 = vpop.f32.mrf.mxu0
          %v2803 = vadd.f32 %v2761, %v2802
          %v2804 = vand.u32 %v2619, 4294901760
          %v2805 = vsub.f32 %v2619, %v2804
          %v2806 = vand.u32 %v2805, 4294901760
          %2807 = vmatmul.f32.gmra.mxu0 %v2806
          %v2808 = vpop.f32.mrf.mxu0
          %v2809 = vadd.f32 %v2766, %v2808
          %v2810 = vand.u32 %v2622, 4294901760
          %v2811 = vsub.f32 %v2622, %v2810
          %v2812 = vand.u32 %v2811, 4294901760
          %2813 = vmatmul.f32.gmra.mxu0 %v2812
          %v2814 = vpop.f32.mrf.mxu0
          %v2815 = vadd.f32 %v2771, %v2814
          %v2816 = vand.u32 %v2625, 4294901760
          %v2817 = vsub.f32 %v2625, %v2816
          %v2818 = vand.u32 %v2817, 4294901760
          %2819 = vmatmul.f32.gmra.mxu0 %v2818
          %v2820 = vpop.f32.mrf.mxu0
          %v2821 = vadd.f32 %v2776, %v2820
          %2822 = vdwg.mxu0
          %2823 = vmatpush.msra.mxu0 0.0
          %2824 = vmatpush.msra.mxu0 0.0
          %2825 = vmatpush.msra.mxu0 0.0
          %2826 = vmatpush.msra.mxu0 0.0
          %2827 = vmatpush.msra.mxu0 0.0
          %2828 = vmatpush.msra.mxu0 0.0
          %2829 = vmatpush.msra.mxu0 0.0
          %2830 = vmatpush.msra.mxu0 0.0
          %2831 = vmatpush.msra.mxu0 0.0
          %2832 = vmatpush.msra.mxu0 0.0
          %2833 = vmatpush.msra.mxu0 0.0
          %2834 = vmatpush.msra.mxu0 0.0
          %v2835 = vand.u32 %v2584, 4294901760
          %v2836 = vsub.f32 %v2584, %v2835
          %v2837 = vand.u32 %v2836, 4294901760
          %2838 = vmatpush.msra.mxu0 %v2837
          %v2839 = vand.u32 %v2583, 4294901760
          %v2840 = vsub.f32 %v2583, %v2839
          %v2841 = vand.u32 %v2840, 4294901760
          %2842 = vmatpush.msra.mxu0 %v2841
          %v2843 = vand.u32 %v2582, 4294901760
          %v2844 = vsub.f32 %v2582, %v2843
          %v2845 = vand.u32 %v2844, 4294901760
          %2846 = vmatpush.msra.mxu0 %v2845
          %v2847 = vand.u32 %v2581, 4294901760
          %v2848 = vsub.f32 %v2581, %v2847
          %v2849 = vand.u32 %v2848, 4294901760
          %2850 = vmatpush.msra.mxu0 %v2849
          %v2851 = vand.u32 %v2616, 4294901760
          %2852 = vmatmul.f32.gmra.mxu0 %v2851
          %v2853 = vpop.f32.mrf.mxu0
          %v2854 = vadd.f32 %v2803, %v2853
          %v2855 = vand.u32 %v2619, 4294901760
          %2856 = vmatmul.f32.gmra.mxu0 %v2855
          %v2857 = vpop.f32.mrf.mxu0
          %v2858 = vadd.f32 %v2809, %v2857
          %v2859 = vand.u32 %v2622, 4294901760
          %2860 = vmatmul.f32.gmra.mxu0 %v2859
          %v2861 = vpop.f32.mrf.mxu0
          %v2862 = vadd.f32 %v2815, %v2861
          %v2863 = vand.u32 %v2625, 4294901760
          %2864 = vmatmul.f32.gmra.mxu0 %v2863
          %v2865 = vpop.f32.mrf.mxu0
          %v2866 = vadd.f32 %v2821, %v2865
          %2867 = vdwg.mxu0
          %2868 = vmatpush.msra.mxu0 0.0
          %2869 = vmatpush.msra.mxu0 0.0
          %2870 = vmatpush.msra.mxu0 0.0
          %2871 = vmatpush.msra.mxu0 0.0
          %2872 = vmatpush.msra.mxu0 0.0
          %2873 = vmatpush.msra.mxu0 0.0
          %2874 = vmatpush.msra.mxu0 0.0
          %2875 = vmatpush.msra.mxu0 0.0
          %2876 = vmatpush.msra.mxu0 0.0
          %2877 = vmatpush.msra.mxu0 0.0
          %2878 = vmatpush.msra.mxu0 0.0
          %2879 = vmatpush.msra.mxu0 0.0
          %v2880 = vand.u32 %v2584, 4294901760
          %2881 = vmatpush.msra.mxu0 %v2880
          %v2882 = vand.u32 %v2583, 4294901760
          %2883 = vmatpush.msra.mxu0 %v2882
          %v2884 = vand.u32 %v2582, 4294901760
          %2885 = vmatpush.msra.mxu0 %v2884
          %v2886 = vand.u32 %v2581, 4294901760
          %2887 = vmatpush.msra.mxu0 %v2886
          %v2888 = vand.u32 %v2616, 4294901760
          %2889 = vmatmul.f32.gmra.mxu0 %v2888
          %v2890 = vpop.f32.mrf.mxu0
          %v2891 = vadd.f32 %v2854, %v2890
          %v2892 = vand.u32 %v2619, 4294901760
          %2893 = vmatmul.f32.gmra.mxu0 %v2892
          %v2894 = vpop.f32.mrf.mxu0
          %v2895 = vadd.f32 %v2858, %v2894
          %v2896 = vand.u32 %v2622, 4294901760
          %2897 = vmatmul.f32.gmra.mxu0 %v2896
          %v2898 = vpop.f32.mrf.mxu0
          %v2899 = vadd.f32 %v2862, %v2898
          %v2900 = vand.u32 %v2625, 4294901760
          %2901 = vmatmul.f32.gmra.mxu0 %v2900
          %v2902 = vpop.f32.mrf.mxu0
          %v2903 = vadd.f32 %v2866, %v2902
          %2904 = vdwg.mxu0
          %v2905 = vadd.f32 %v1809, %v2891
          %v2906 = vadd.f32 %v1810, %v2895
          %v2907 = vadd.f32 %v1811, %v2899
          %v2908 = vadd.f32 %v1812, %v2903
        $region69: #{tpu_custom_call.1} parent=63 // loop_footer
          %s711 = sadd.s32 1, %s707
        $region70: #{tpu_custom_call.1} parent=63 // loop_footer_branch
          %706 = sbr.rel target = $region66
        $region71: #{tpu_custom_call.1} parent=63 // loop_exit
          _
        %v2909 = vld [vmem:[#allocation2] sm:$0x1]
        %vm2910 = vcmp.ge.f32.partialorder %v714, 0.0
        %vm2911 = vcmp.ge.f32.partialorder %v715, 0.0
        %v2913 = vperm.slane %v2909, 0
        %2914 = vset.pattern.permute.xlu0 0
        %2915 = vperm.xlu0 %2914, %v2913
        %v2916 = vpop.permute.xlu0 %2915
        %v2918 = vmul.f32 %v2916, %v714
        %v2919 = vmul.f32 %v2916, %v715
        %v2920 = vsel %vm2910, %v714, %v2918
        %v2921 = vsel %vm2911, %v715, %v2919
        %v2922 = vld [vmem:[%s9] sm:$0xff]
        %v2923 = vld [vmem:[%s9 + $0x8] sm:$0xff]
        %v2924 = vld [vmem:[%s9 + $0x10] sm:$0xff]
        %v2925 = vld [vmem:[%s9 + $0x18] sm:$0xff]
        %v2926 = vld [vmem:[%s10] sm:$0xff]
        %v2927 = vld [vmem:[%s10 + $0x8] sm:$0xff]
        %v2928 = vld [vmem:[%s10 + $0x10] sm:$0xff]
        %v2929 = vld [vmem:[%s10 + $0x18] sm:$0xff]
        %2931 = vset.pattern.permute.xlu0 0
        %2932 = vperm.xlu0 %2931, %v2926
        %v2933 = vpop.permute.xlu0 %2932
        %2936 = vset.pattern.permute.xlu0 0
        %2937 = vperm.xlu0 %2936, %v2927
        %v2938 = vpop.permute.xlu0 %2937
        %2941 = vset.pattern.permute.xlu0 0
        %2942 = vperm.xlu0 %2941, %v2928
        %v2943 = vpop.permute.xlu0 %2942
        %2946 = vset.pattern.permute.xlu0 0
        %2947 = vperm.xlu0 %2946, %v2929
        %v2948 = vpop.permute.xlu0 %2947
        %v2951 = vsel %vm509, %v2922, 0
        %v2954 = vsel %vm509, %v2923, 0
        %v2957 = vsel %vm509, %v2924, 0
        %v2960 = vsel %vm509, %v2925, 0
        %2962 = vmatpush.msra.mxu0 0.0
        %2963 = vmatpush.msra.mxu0 0.0
        %2964 = vmatpush.msra.mxu0 0.0
        %2965 = vmatpush.msra.mxu0 0.0
        %2966 = vmatpush.msra.mxu0 0.0
        %2967 = vmatpush.msra.mxu0 0.0
        %2968 = vmatpush.msra.mxu0 0.0
        %2969 = vmatpush.msra.mxu0 0.0
        %2970 = vmatpush.msra.mxu0 0.0
        %2971 = vmatpush.msra.mxu0 0.0
        %2972 = vmatpush.msra.mxu0 0.0
        %2973 = vmatpush.msra.mxu0 0.0
        %2974 = vmatpush.msra.mxu0 0.0
        %2975 = vmatpush.msra.mxu0 0.0
        %v2976 = vand.u32 %v2921, 4294901760
        %2977 = vmatpush.msra.mxu0 %v2976
        %v2978 = vand.u32 %v2920, 4294901760
        %2979 = vmatpush.msra.mxu0 %v2978
        %v2980 = vand.u32 %v2951, 4294901760
        %v2981 = vsub.f32 %v2951, %v2980
        %v2982 = vand.u32 %v2981, 4294901760
        %v2983 = vsub.f32 %v2981, %v2982
        %v2984 = vand.u32 %v2983, 4294901760
        %2985 = vmatmul.f32.gmra.mxu0 %v2984
        %v2986 = vpop.f32.mrf.mxu0
        %v2987 = vadd.f32 %v2933, %v2986
        %v2988 = vand.u32 %v2954, 4294901760
        %v2989 = vsub.f32 %v2954, %v2988
        %v2990 = vand.u32 %v2989, 4294901760
        %v2991 = vsub.f32 %v2989, %v2990
        %v2992 = vand.u32 %v2991, 4294901760
        %2993 = vmatmul.f32.gmra.mxu0 %v2992
        %v2994 = vpop.f32.mrf.mxu0
        %v2995 = vadd.f32 %v2938, %v2994
        %v2996 = vand.u32 %v2957, 4294901760
        %v2997 = vsub.f32 %v2957, %v2996
        %v2998 = vand.u32 %v2997, 4294901760
        %v2999 = vsub.f32 %v2997, %v2998
        %v3000 = vand.u32 %v2999, 4294901760
        %3001 = vmatmul.f32.gmra.mxu0 %v3000
        %v3002 = vpop.f32.mrf.mxu0
        %v3003 = vadd.f32 %v2943, %v3002
        %v3004 = vand.u32 %v2960, 4294901760
        %v3005 = vsub.f32 %v2960, %v3004
        %v3006 = vand.u32 %v3005, 4294901760
        %v3007 = vsub.f32 %v3005, %v3006
        %v3008 = vand.u32 %v3007, 4294901760
        %3009 = vmatmul.f32.gmra.mxu0 %v3008
        %v3010 = vpop.f32.mrf.mxu0
        %v3011 = vadd.f32 %v2948, %v3010
        %3012 = vdwg.mxu0
        %3013 = vmatpush.msra.mxu0 0.0
        %3014 = vmatpush.msra.mxu0 0.0
        %3015 = vmatpush.msra.mxu0 0.0
        %3016 = vmatpush.msra.mxu0 0.0
        %3017 = vmatpush.msra.mxu0 0.0
        %3018 = vmatpush.msra.mxu0 0.0
        %3019 = vmatpush.msra.mxu0 0.0
        %3020 = vmatpush.msra.mxu0 0.0
        %3021 = vmatpush.msra.mxu0 0.0
        %3022 = vmatpush.msra.mxu0 0.0
        %3023 = vmatpush.msra.mxu0 0.0
        %3024 = vmatpush.msra.mxu0 0.0
        %3025 = vmatpush.msra.mxu0 0.0
        %3026 = vmatpush.msra.mxu0 0.0
        %v3027 = vand.u32 %v2921, 4294901760
        %v3028 = vsub.f32 %v2921, %v3027
        %v3029 = vand.u32 %v3028, 4294901760
        %v3030 = vsub.f32 %v3028, %v3029
        %v3031 = vand.u32 %v3030, 4294901760
        %3032 = vmatpush.msra.mxu0 %v3031
        %v3033 = vand.u32 %v2920, 4294901760
        %v3034 = vsub.f32 %v2920, %v3033
        %v3035 = vand.u32 %v3034, 4294901760
        %v3036 = vsub.f32 %v3034, %v3035
        %v3037 = vand.u32 %v3036, 4294901760
        %3038 = vmatpush.msra.mxu0 %v3037
        %v3039 = vand.u32 %v2951, 4294901760
        %3040 = vmatmul.f32.gmra.mxu0 %v3039
        %v3041 = vpop.f32.mrf.mxu0
        %v3042 = vadd.f32 %v2987, %v3041
        %v3043 = vand.u32 %v2954, 4294901760
        %3044 = vmatmul.f32.gmra.mxu0 %v3043
        %v3045 = vpop.f32.mrf.mxu0
        %v3046 = vadd.f32 %v2995, %v3045
        %v3047 = vand.u32 %v2957, 4294901760
        %3048 = vmatmul.f32.gmra.mxu0 %v3047
        %v3049 = vpop.f32.mrf.mxu0
        %v3050 = vadd.f32 %v3003, %v3049
        %v3051 = vand.u32 %v2960, 4294901760
        %3052 = vmatmul.f32.gmra.mxu0 %v3051
        %v3053 = vpop.f32.mrf.mxu0
        %v3054 = vadd.f32 %v3011, %v3053
        %3055 = vdwg.mxu0
        %3056 = vmatpush.msra.mxu0 0.0
        %3057 = vmatpush.msra.mxu0 0.0
        %3058 = vmatpush.msra.mxu0 0.0
        %3059 = vmatpush.msra.mxu0 0.0
        %3060 = vmatpush.msra.mxu0 0.0
        %3061 = vmatpush.msra.mxu0 0.0
        %3062 = vmatpush.msra.mxu0 0.0
        %3063 = vmatpush.msra.mxu0 0.0
        %3064 = vmatpush.msra.mxu0 0.0
        %3065 = vmatpush.msra.mxu0 0.0
        %3066 = vmatpush.msra.mxu0 0.0
        %3067 = vmatpush.msra.mxu0 0.0
        %3068 = vmatpush.msra.mxu0 0.0
        %3069 = vmatpush.msra.mxu0 0.0
        %v3070 = vand.u32 %v2921, 4294901760
        %v3071 = vsub.f32 %v2921, %v3070
        %3072 = vmatpush.msra.mxu0 %v3071
        %v3073 = vand.u32 %v2920, 4294901760
        %v3074 = vsub.f32 %v2920, %v3073
        %3075 = vmatpush.msra.mxu0 %v3074
        %v3076 = vand.u32 %v2951, 4294901760
        %v3077 = vsub.f32 %v2951, %v3076
        %3078 = vmatmul.f32.gmra.mxu0 %v3077
        %v3079 = vpop.f32.mrf.mxu0
        %v3080 = vadd.f32 %v3042, %v3079
        %v3081 = vand.u32 %v2954, 4294901760
        %v3082 = vsub.f32 %v2954, %v3081
        %3083 = vmatmul.f32.gmra.mxu0 %v3082
        %v3084 = vpop.f32.mrf.mxu0
        %v3085 = vadd.f32 %v3046, %v3084
        %v3086 = vand.u32 %v2957, 4294901760
        %v3087 = vsub.f32 %v2957, %v3086
        %3088 = vmatmul.f32.gmra.mxu0 %v3087
        %v3089 = vpop.f32.mrf.mxu0
        %v3090 = vadd.f32 %v3050, %v3089
        %v3091 = vand.u32 %v2960, 4294901760
        %v3092 = vsub.f32 %v2960, %v3091
        %3093 = vmatmul.f32.gmra.mxu0 %v3092
        %v3094 = vpop.f32.mrf.mxu0
        %v3095 = vadd.f32 %v3054, %v3094
        %3096 = vdwg.mxu0
        %3097 = vmatpush.msra.mxu0 0.0
        %3098 = vmatpush.msra.mxu0 0.0
        %3099 = vmatpush.msra.mxu0 0.0
        %3100 = vmatpush.msra.mxu0 0.0
        %3101 = vmatpush.msra.mxu0 0.0
        %3102 = vmatpush.msra.mxu0 0.0
        %3103 = vmatpush.msra.mxu0 0.0
        %3104 = vmatpush.msra.mxu0 0.0
        %3105 = vmatpush.msra.mxu0 0.0
        %3106 = vmatpush.msra.mxu0 0.0
        %3107 = vmatpush.msra.mxu0 0.0
        %3108 = vmatpush.msra.mxu0 0.0
        %3109 = vmatpush.msra.mxu0 0.0
        %3110 = vmatpush.msra.mxu0 0.0
        %v3111 = vand.u32 %v2921, 4294901760
        %3112 = vmatpush.msra.mxu0 %v3111
        %v3113 = vand.u32 %v2920, 4294901760
        %3114 = vmatpush.msra.mxu0 %v3113
        %v3115 = vand.u32 %v2951, 4294901760
        %v3116 = vsub.f32 %v2951, %v3115
        %v3117 = vand.u32 %v3116, 4294901760
        %3118 = vmatmul.f32.gmra.mxu0 %v3117
        %v3119 = vpop.f32.mrf.mxu0
        %v3120 = vadd.f32 %v3080, %v3119
        %v3121 = vand.u32 %v2954, 4294901760
        %v3122 = vsub.f32 %v2954, %v3121
        %v3123 = vand.u32 %v3122, 4294901760
        %3124 = vmatmul.f32.gmra.mxu0 %v3123
        %v3125 = vpop.f32.mrf.mxu0
        %v3126 = vadd.f32 %v3085, %v3125
        %v3127 = vand.u32 %v2957, 4294901760
        %v3128 = vsub.f32 %v2957, %v3127
        %v3129 = vand.u32 %v3128, 4294901760
        %3130 = vmatmul.f32.gmra.mxu0 %v3129
        %v3131 = vpop.f32.mrf.mxu0
        %v3132 = vadd.f32 %v3090, %v3131
        %v3133 = vand.u32 %v2960, 4294901760
        %v3134 = vsub.f32 %v2960, %v3133
        %v3135 = vand.u32 %v3134, 4294901760
        %3136 = vmatmul.f32.gmra.mxu0 %v3135
        %v3137 = vpop.f32.mrf.mxu0
        %v3138 = vadd.f32 %v3095, %v3137
        %3139 = vdwg.mxu0
        %3140 = vmatpush.msra.mxu0 0.0
        %3141 = vmatpush.msra.mxu0 0.0
        %3142 = vmatpush.msra.mxu0 0.0
        %3143 = vmatpush.msra.mxu0 0.0
        %3144 = vmatpush.msra.mxu0 0.0
        %3145 = vmatpush.msra.mxu0 0.0
        %3146 = vmatpush.msra.mxu0 0.0
        %3147 = vmatpush.msra.mxu0 0.0
        %3148 = vmatpush.msra.mxu0 0.0
        %3149 = vmatpush.msra.mxu0 0.0
        %3150 = vmatpush.msra.mxu0 0.0
        %3151 = vmatpush.msra.mxu0 0.0
        %3152 = vmatpush.msra.mxu0 0.0
        %3153 = vmatpush.msra.mxu0 0.0
        %v3154 = vand.u32 %v2921, 4294901760
        %v3155 = vsub.f32 %v2921, %v3154
        %v3156 = vand.u32 %v3155, 4294901760
        %3157 = vmatpush.msra.mxu0 %v3156
        %v3158 = vand.u32 %v2920, 4294901760
        %v3159 = vsub.f32 %v2920, %v3158
        %v3160 = vand.u32 %v3159, 4294901760
        %3161 = vmatpush.msra.mxu0 %v3160
        %v3162 = vand.u32 %v2951, 4294901760
        %3163 = vmatmul.f32.gmra.mxu0 %v3162
        %v3164 = vpop.f32.mrf.mxu0
        %v3165 = vadd.f32 %v3120, %v3164
        %v3166 = vand.u32 %v2954, 4294901760
        %3167 = vmatmul.f32.gmra.mxu0 %v3166
        %v3168 = vpop.f32.mrf.mxu0
        %v3169 = vadd.f32 %v3126, %v3168
        %v3170 = vand.u32 %v2957, 4294901760
        %3171 = vmatmul.f32.gmra.mxu0 %v3170
        %v3172 = vpop.f32.mrf.mxu0
        %v3173 = vadd.f32 %v3132, %v3172
        %v3174 = vand.u32 %v2960, 4294901760
        %3175 = vmatmul.f32.gmra.mxu0 %v3174
        %v3176 = vpop.f32.mrf.mxu0
        %v3177 = vadd.f32 %v3138, %v3176
        %3178 = vdwg.mxu0
        %3179 = vmatpush.msra.mxu0 0.0
        %3180 = vmatpush.msra.mxu0 0.0
        %3181 = vmatpush.msra.mxu0 0.0
        %3182 = vmatpush.msra.mxu0 0.0
        %3183 = vmatpush.msra.mxu0 0.0
        %3184 = vmatpush.msra.mxu0 0.0
        %3185 = vmatpush.msra.mxu0 0.0
        %3186 = vmatpush.msra.mxu0 0.0
        %3187 = vmatpush.msra.mxu0 0.0
        %3188 = vmatpush.msra.mxu0 0.0
        %3189 = vmatpush.msra.mxu0 0.0
        %3190 = vmatpush.msra.mxu0 0.0
        %3191 = vmatpush.msra.mxu0 0.0
        %3192 = vmatpush.msra.mxu0 0.0
        %v3193 = vand.u32 %v2921, 4294901760
        %3194 = vmatpush.msra.mxu0 %v3193
        %v3195 = vand.u32 %v2920, 4294901760
        %3196 = vmatpush.msra.mxu0 %v3195
        %v3197 = vand.u32 %v2951, 4294901760
        %3198 = vmatmul.f32.gmra.mxu0 %v3197
        %v3199 = vpop.f32.mrf.mxu0
        %v3200 = vadd.f32 %v3165, %v3199
        %v3201 = vand.u32 %v2954, 4294901760
        %3202 = vmatmul.f32.gmra.mxu0 %v3201
        %v3203 = vpop.f32.mrf.mxu0
        %v3204 = vadd.f32 %v3169, %v3203
        %v3205 = vand.u32 %v2957, 4294901760
        %3206 = vmatmul.f32.gmra.mxu0 %v3205
        %v3207 = vpop.f32.mrf.mxu0
        %v3208 = vadd.f32 %v3173, %v3207
        %v3209 = vand.u32 %v2960, 4294901760
        %3210 = vmatmul.f32.gmra.mxu0 %v3209
        %v3211 = vpop.f32.mrf.mxu0
        %v3212 = vadd.f32 %v3177, %v3211
        %3213 = vdwg.mxu0
        %v3214 = vmax.f32 %v3200, 0.0
        %v3215 = vmax.f32 %v3204, 0.0
        %v3216 = vmax.f32 %v3208, 0.0
        %v3217 = vmax.f32 %v3212, 0.0
        %v3218 = vsel %vm399, %v3214, 0.0
        %v3219 = vsel %vm399, %v3215, 0.0
        %v3220 = vsel %vm399, %v3216, 0.0
        %v3221 = vsel %vm399, %v3217, 0.0
        %3222 = vst [vmem:[%s381] sm:$0xff] %v3218
        %3223 = vst [vmem:[%s381 + $0x8] sm:$0xff] %v3219
        %3224 = vst [vmem:[%s381 + $0x10] sm:$0xff] %v3220
        %3225 = vst [vmem:[%s381 + $0x18] sm:$0xff] %v3221
        %s3226 = sand.u32 %s271, 1
        %s3227 = scalar_lea.sflag [#allocation4], %s3226
        %s3228 = sand.u32 %s271, 1
        %s3229 = smul.addr %s3228, 32
        %s3230 = scalar_lea.vmem [#allocation3], %s3229
        // Predicated region
        $region72: #{tpu_custom_call.1} parent=63 // pred_check
          %p3231 = pneg %p281
        $region73: #{tpu_custom_call.1} parent=63 // pred_check_branch
          %3233 = sbr.rel (%p3231) target = $region75
        $region74: #{tpu_custom_call.1} parent=63 // pred_region
          %3235 = vsyncadd %s3227, 0
          %s3236 = smul.addr %s27, 4
          %s3237 = smul.addr %s3236, 8
          %s3238 = scalar_lea.hbm %s11, %s3237
          %s3239 = sshll.u32 %s3230, 4
          %s3240 = int_to_ptr.vmem [resolvable:$true] %s3239
          %s3241 = sshll.u32 %s3238, 4
          %s3242 = int_to_ptr.hbm [resolvable:$true] %s3241
          %3247 = dma.vmem_to_hbm [thread:$0]  %s3240, 512, %s3242, %s3227, 128, 128, 8
        $region75: #{tpu_custom_call.1} parent=63 // pred_fallthru
          _
      $region64: #{tpu_custom_call.1} parent=5 // pred_fallthru
        _
      %p3248 = scmp.le.s32.totalorder 2, %s22
      // Predicated region
      $region76: #{tpu_custom_call.1} parent=5 // pred_check
        %p3249 = pneg %p3248
      $region77: #{tpu_custom_call.1} parent=5 // pred_check_branch
        %3251 = sbr.rel (%p3249) target = $region79
      $region78: #{tpu_custom_call.1} parent=5 // pred_region
        %s3252 = ssub.s32 %s22, 2
        // Predicated region
        $region80: #{tpu_custom_call.1} parent=78 // pred_check
          %p3253 = pneg %p287
        $region81: #{tpu_custom_call.1} parent=78 // pred_check_branch
          %3255 = sbr.rel (%p3253) target = $region83
        $region82: #{tpu_custom_call.1} parent=78 // pred_region
          %s3256 = sand.u32 %s272, 1
          %s3257 = scalar_lea.sflag [#allocation4], %s3256
          %s3258 = sand.u32 %s272, 1
          %s3259 = smul.addr %s3258, 32
          %s3260 = scalar_lea.vmem [#allocation3], %s3259
          %3262 = dma.done %s3257, 512
        $region83: #{tpu_custom_call.1} parent=78 // pred_fallthru
          _
      $region79: #{tpu_custom_call.1} parent=5 // pred_fallthru
        _
    $region6: #{tpu_custom_call.1} parent=1 // loop_footer
      %s26 = sadd.s32 1, %s22
    $region7: #{tpu_custom_call.1} parent=1 // loop_footer_branch
      %21 = sbr.rel target = $region3
    $region8: #{tpu_custom_call.1} parent=1 // loop_exit
      _
    %3263 = vsyncpa [#allocation4], 1
    %s3264 = scalar_lea.sflag [#allocation4], 1
    %3265 = vsyncpa %s3264, 1

// kernel: tpu_custom_call.1
$region0: #{tpu_custom_call.1}
  #allocation0 [shape = 'u32[]', space=smem, size = 0x4, offset = 0x4, fixed_abs, tag = 'smem constant byte address 0x4 - core index']
  #allocation1 [shape = 'u32[72,128]{1,0:T(1,128)}', space=vmem, size = 0x9000, scoped, tag = 'internal scratch']
  #allocation2 [shape = 'f32[1,1]{1,0:T(1,128)S(1)}', space=vmem, size = 0x200, scoped, tag = 'scoped memory for tpu_custom_call.1']
  %s0 = inlined_call_operand.vmem [shape: f32[2,16,128], index: 0, kind: input, shape index: {}]
  %s1 = inlined_call_operand.vmem [shape: f32[16,2], index: 1, kind: input, shape index: {}]
  %s2 = inlined_call_operand.vmem [shape: f32[16,16], index: 2, kind: input, shape index: {}]
  %s3 = inlined_call_operand.vmem [shape: f32[16,1], index: 3, kind: input, shape index: {}]
  %s4 = inlined_call_operand.vmem [shape: f32[4,32,16], index: 4, kind: input, shape index: {}]
  %s5 = inlined_call_operand.vmem [shape: f32[4,32,11], index: 5, kind: input, shape index: {}]
  %s6 = inlined_call_operand.vmem [shape: f32[4,32,32], index: 6, kind: input, shape index: {}]
  %s7 = inlined_call_operand.vmem [shape: f32[4,32,1], index: 7, kind: input, shape index: {}]
  %s8 = inlined_call_operand.<no memory space> [shape: f32[1,1], index: 8, kind: input, shape index: {}]
  %s9 = inlined_call_operand.vmem [shape: f32[32,16], index: 9, kind: input, shape index: {}]
  %s10 = inlined_call_operand.vmem [shape: f32[32,1], index: 10, kind: input, shape index: {}]
  %s11 = inlined_call_operand.hbm [shape: f32[2,32,128], index: 11, kind: output, shape index: {}]
  %s12 = sld [smem:[#allocation0]]
  $region84: #{tpu_custom_call.1} parent=0
    _
  %s14 = ssub.s32 1, %s12
  %s15 = scalar_select 0, %s14, %s12
  %v16 = vstv %s8
  %17 = vst [vmem:[#allocation2] sm:$0x1] %v16
  $region1: #{tpu_custom_call.1} parent=0
    #allocation3 [shape = 'u8[32768]{0}', space=vmem, size = 0x8000, scoped, tag = 'output window, operand 0']
    #allocation4 [shape = 's32[2]{0}', space=sflag, size = 0x8, scoped, tag = 'scoped memory for tpu_custom_call.1']
    %18 = vsyncpa [#allocation4], 0
    %s19 = scalar_lea.sflag [#allocation4], 1
    %20 = vsyncpa %s19, 0
    loop: start=0, step=1, limit=4
    $region2: #{tpu_custom_call.1} parent=1 // loop_pre_header
      _
    $region3: #{tpu_custom_call.1} parent=1 // loop_header
      %s22 = sphi 0, %s26
      %p23 = scmp.ge.s32.totalorder %s22, 4
      %s32 = sphi 0, %s34
      %s35 = sphi 0, %s32
      %s36 = sphi 0, %s35
      %s52 = sphi 0, %s36
      %s56 = sphi 0, %s56
      %s58 = sphi 0, %s56
      %s59 = sphi 0, %s58
      %s73 = sphi 0, %s59
      %s77 = sphi 0, %s77
      %s79 = sphi 0, %s77
      %s80 = sphi 0, %s79
      %s94 = sphi 0, %s80
      %s98 = sphi 0, %s98
      %s100 = sphi 0, %s98
      %s101 = sphi 0, %s100
      %s115 = sphi 0, %s101
      %s119 = sphi 0, %s119
      %s121 = sphi 0, %s119
      %s122 = sphi 0, %s121
      %s136 = sphi 0, %s122
      %s140 = sphi 0, %s140
      %s142 = sphi 0, %s140
      %s143 = sphi 0, %s142
      %s157 = sphi 0, %s143
      %s161 = sphi 0, %s161
      %s163 = sphi 0, %s161
      %s164 = sphi 0, %s163
      %s178 = sphi 0, %s164
      %s182 = sphi 0, %s182
      %s184 = sphi 0, %s182
      %s185 = sphi 0, %s184
      %s199 = sphi 0, %s185
      %s203 = sphi 0, %s203
      %s205 = sphi 0, %s203
      %s206 = sphi 0, %s205
      %s220 = sphi 0, %s206
      %s224 = sphi 0, %s224
      %s226 = sphi 0, %s224
      %s227 = sphi 0, %s226
      %s241 = sphi 0, %s227
      %s245 = sphi 0, %s245
      %s247 = sphi 0, %s245
      %s248 = sphi 0, %s247
      %s262 = sphi 0, %s248
      %s268 = sphi 0, %s270
      %s271 = sphi 0, %s268
      %s272 = sphi 0, %s271
      %s288 = sphi 0, %s272
    $region4: #{tpu_custom_call.1} parent=1 // loop_header_branch
      %25 = sbr.rel (%p23) target = $region8
    $region5: #{tpu_custom_call.1} parent=1 // loop_body
      %s27 = ssub.s32 %s22, 1
      %s28 = ssub.s32 %s22, 2
      %s29 = sadd.s32 %s22, 1
      %s30 = ssub.s32 %s22, %s29
      %p31 = scmp.eq.s32.totalorder %s30, 0
      %s33 = sadd.s32 %s32, 1
      %s34 = scalar_select %p31, %s32, %s33
      %p37 = pneg %p31
      %p38 = scmp.eq.s32.totalorder %s22, 1
      %p39 = por %p37, %p38
      %p40 = scmp.ne.s32.totalorder %s32, %s35
      %p41 = scmp.eq.s32.totalorder %s22, 0
      %p42 = por %p40, %p41
      %p43 = scmp.ne.s32.totalorder %s32, %s35
      %p44 = scmp.eq.s32.totalorder %s27, 1
      %p45 = por %p43, %p44
      %p46 = scmp.ne.s32.totalorder %s35, %s36
      %p47 = scmp.eq.s32.totalorder %s27, 0
      %p48 = por %p46, %p47
      %p49 = scmp.ne.s32.totalorder %s35, %s36
      %p50 = scmp.eq.s32.totalorder %s28, 1
      %p51 = por %p49, %p50
      %p53 = scmp.ne.s32.totalorder %s36, %s52
      %p54 = scmp.eq.s32.totalorder %s28, 0
      %p55 = por %p53, %p54
      %s57 = sadd.s32 %s56, 1
      %p60 = scmp.eq.s32.totalorder %s22, 1
      %p61 = scmp.ne.s32.totalorder %s56, %s58
      %p62 = scmp.eq.s32.totalorder %s22, 0
      %p63 = por %p61, %p62
      %p64 = scmp.ne.s32.totalorder %s56, %s58
      %p65 = scmp.eq.s32.totalorder %s27, 1
      %p66 = por %p64, %p65
      %p67 = scmp.ne.s32.totalorder %s58, %s59
      %p68 = scmp.eq.s32.totalorder %s27, 0
      %p69 = por %p67, %p68
      %p70 = scmp.ne.s32.totalorder %s58, %s59
      %p71 = scmp.eq.s32.totalorder %s28, 1
      %p72 = por %p70, %p71
      %p74 = scmp.ne.s32.totalorder %s59, %s73
      %p75 = scmp.eq.s32.totalorder %s28, 0
      %p76 = por %p74, %p75
      %s78 = sadd.s32 %s77, 1
      %p81 = scmp.eq.s32.totalorder %s22, 1
      %p82 = scmp.ne.s32.totalorder %s77, %s79
      %p83 = scmp.eq.s32.totalorder %s22, 0
      %p84 = por %p82, %p83
      %p85 = scmp.ne.s32.totalorder %s77, %s79
      %p86 = scmp.eq.s32.totalorder %s27, 1
      %p87 = por %p85, %p86
      %p88 = scmp.ne.s32.totalorder %s79, %s80
      %p89 = scmp.eq.s32.totalorder %s27, 0
      %p90 = por %p88, %p89
      %p91 = scmp.ne.s32.totalorder %s79, %s80
      %p92 = scmp.eq.s32.totalorder %s28, 1
      %p93 = por %p91, %p92
      %p95 = scmp.ne.s32.totalorder %s80, %s94
      %p96 = scmp.eq.s32.totalorder %s28, 0
      %p97 = por %p95, %p96
      %s99 = sadd.s32 %s98, 1
      %p102 = scmp.eq.s32.totalorder %s22, 1
      %p103 = scmp.ne.s32.totalorder %s98, %s100
      %p104 = scmp.eq.s32.totalorder %s22, 0
      %p105 = por %p103, %p104
      %p106 = scmp.ne.s32.totalorder %s98, %s100
      %p107 = scmp.eq.s32.totalorder %s27, 1
      %p108 = por %p106, %p107
      %p109 = scmp.ne.s32.totalorder %s100, %s101
      %p110 = scmp.eq.s32.totalorder %s27, 0
      %p111 = por %p109, %p110
      %p112 = scmp.ne.s32.totalorder %s100, %s101
      %p113 = scmp.eq.s32.totalorder %s28, 1
      %p114 = por %p112, %p113
      %p116 = scmp.ne.s32.totalorder %s101, %s115
      %p117 = scmp.eq.s32.totalorder %s28, 0
      %p118 = por %p116, %p117
      %s120 = sadd.s32 %s119, 1
      %p123 = scmp.eq.s32.totalorder %s22, 1
      %p124 = scmp.ne.s32.totalorder %s119, %s121
      %p125 = scmp.eq.s32.totalorder %s22, 0
      %p126 = por %p124, %p125
      %p127 = scmp.ne.s32.totalorder %s119, %s121
      %p128 = scmp.eq.s32.totalorder %s27, 1
      %p129 = por %p127, %p128
      %p130 = scmp.ne.s32.totalorder %s121, %s122
      %p131 = scmp.eq.s32.totalorder %s27, 0
      %p132 = por %p130, %p131
      %p133 = scmp.ne.s32.totalorder %s121, %s122
      %p134 = scmp.eq.s32.totalorder %s28, 1
      %p135 = por %p133, %p134
      %p137 = scmp.ne.s32.totalorder %s122, %s136
      %p138 = scmp.eq.s32.totalorder %s28, 0
      %p139 = por %p137, %p138
      %s141 = sadd.s32 %s140, 1
      %p144 = scmp.eq.s32.totalorder %s22, 1
      %p145 = scmp.ne.s32.totalorder %s140, %s142
      %p146 = scmp.eq.s32.totalorder %s22, 0
      %p147 = por %p145, %p146
      %p148 = scmp.ne.s32.totalorder %s140, %s142
      %p149 = scmp.eq.s32.totalorder %s27, 1
      %p150 = por %p148, %p149
      %p151 = scmp.ne.s32.totalorder %s142, %s143
      %p152 = scmp.eq.s32.totalorder %s27, 0
      %p153 = por %p151, %p152
      %p154 = scmp.ne.s32.totalorder %s142, %s143
      %p155 = scmp.eq.s32.totalorder %s28, 1
      %p156 = por %p154, %p155
      %p158 = scmp.ne.s32.totalorder %s143, %s157
      %p159 = scmp.eq.s32.totalorder %s28, 0
      %p160 = por %p158, %p159
      %s162 = sadd.s32 %s161, 1
      %p165 = scmp.eq.s32.totalorder %s22, 1
      %p166 = scmp.ne.s32.totalorder %s161, %s163
      %p167 = scmp.eq.s32.totalorder %s22, 0
      %p168 = por %p166, %p167
      %p169 = scmp.ne.s32.totalorder %s161, %s163
      %p170 = scmp.eq.s32.totalorder %s27, 1
      %p171 = por %p169, %p170
      %p172 = scmp.ne.s32.totalorder %s163, %s164
      %p173 = scmp.eq.s32.totalorder %s27, 0
      %p174 = por %p172, %p173
      %p175 = scmp.ne.s32.totalorder %s163, %s164
      %p176 = scmp.eq.s32.totalorder %s28, 1
      %p177 = por %p175, %p176
      %p179 = scmp.ne.s32.totalorder %s164, %s178
      %p180 = scmp.eq.s32.totalorder %s28, 0
      %p181 = por %p179, %p180
      %s183 = sadd.s32 %s182, 1
      %p186 = scmp.eq.s32.totalorder %s22, 1
      %p187 = scmp.ne.s32.totalorder %s182, %s184
      %p188 = scmp.eq.s32.totalorder %s22, 0
      %p189 = por %p187, %p188
      %p190 = scmp.ne.s32.totalorder %s182, %s184
      %p191 = scmp.eq.s32.totalorder %s27, 1
      %p192 = por %p190, %p191
      %p193 = scmp.ne.s32.totalorder %s184, %s185
      %p194 = scmp.eq.s32.totalorder %s27, 0
      %p195 = por %p193, %p194
      %p196 = scmp.ne.s32.totalorder %s184, %s185
      %p197 = scmp.eq.s32.totalorder %s28, 1
      %p198 = por %p196, %p197
      %p200 = scmp.ne.s32.totalorder %s185, %s199
      %p201 = scmp.eq.s32.totalorder %s28, 0
      %p202 = por %p200, %p201
      %s204 = sadd.s32 %s203, 1
      %p207 = scmp.eq.s32.totalorder %s22, 1
      %p208 = scmp.ne.s32.totalorder %s203, %s205
      %p209 = scmp.eq.s32.totalorder %s22, 0
      %p210 = por %p208, %p209
      %p211 = scmp.ne.s32.totalorder %s203, %s205
      %p212 = scmp.eq.s32.totalorder %s27, 1
      %p213 = por %p211, %p212
      %p214 = scmp.ne.s32.totalorder %s205, %s206
      %p215 = scmp.eq.s32.totalorder %s27, 0
      %p216 = por %p214, %p215
      %p217 = scmp.ne.s32.totalorder %s205, %s206
      %p218 = scmp.eq.s32.totalorder %s28, 1
      %p219 = por %p217, %p218
      %p221 = scmp.ne.s32.totalorder %s206, %s220
      %p222 = scmp.eq.s32.totalorder %s28, 0
      %p223 = por %p221, %p222
      %s225 = sadd.s32 %s224, 1
      %p228 = scmp.eq.s32.totalorder %s22, 1
      %p229 = scmp.ne.s32.totalorder %s224, %s226
      %p230 = scmp.eq.s32.totalorder %s22, 0
      %p231 = por %p229, %p230
      %p232 = scmp.ne.s32.totalorder %s224, %s226
      %p233 = scmp.eq.s32.totalorder %s27, 1
      %p234 = por %p232, %p233
      %p235 = scmp.ne.s32.totalorder %s226, %s227
      %p236 = scmp.eq.s32.totalorder %s27, 0
      %p237 = por %p235, %p236
      %p238 = scmp.ne.s32.totalorder %s226, %s227
      %p239 = scmp.eq.s32.totalorder %s28, 1
      %p240 = por %p238, %p239
      %p242 = scmp.ne.s32.totalorder %s227, %s241
      %p243 = scmp.eq.s32.totalorder %s28, 0
      %p244 = por %p242, %p243
      %s246 = sadd.s32 %s245, 1
      %p249 = scmp.eq.s32.totalorder %s22, 1
      %p250 = scmp.ne.s32.totalorder %s245, %s247
      %p251 = scmp.eq.s32.totalorder %s22, 0
      %p252 = por %p250, %p251
      %p253 = scmp.ne.s32.totalorder %s245, %s247
      %p254 = scmp.eq.s32.totalorder %s27, 1
      %p255 = por %p253, %p254
      %p256 = scmp.ne.s32.totalorder %s247, %s248
      %p257 = scmp.eq.s32.totalorder %s27, 0
      %p258 = por %p256, %p257
      %p259 = scmp.ne.s32.totalorder %s247, %s248
      %p260 = scmp.eq.s32.totalorder %s28, 1
      %p261 = por %p259, %p260
      %p263 = scmp.ne.s32.totalorder %s248, %s262
      %p264 = scmp.eq.s32.totalorder %s28, 0
      %p265 = por %p263, %p264
      %s266 = ssub.s32 %s22, %s29
      %p267 = scmp.eq.s32.totalorder %s266, 0
      %s269 = sadd.s32 %s268, 1
      %s270 = scalar_select %p267, %s268, %s269
      %p273 = pneg %p267
      %p274 = scmp.eq.s32.totalorder %s22, 1
      %p275 = por %p273, %p274
      %p276 = scmp.ne.s32.totalorder %s268, %s271
      %p277 = scmp.eq.s32.totalorder %s22, 0
      %p278 = por %p276, %p277
      %p279 = scmp.ne.s32.totalorder %s268, %s271
      %p280 = scmp.eq.s32.totalorder %s27, 1
      %p281 = por %p279, %p280
      %p282 = scmp.ne.s32.totalorder %s271, %s272
      %p283 = scmp.eq.s32.totalorder %s27, 0
      %p284 = por %p282, %p283
      %p285 = scmp.ne.s32.totalorder %s271, %s272
      %p286 = scmp.eq.s32.totalorder %s28, 1
      %p287 = por %p285, %p286
      %p289 = scmp.ne.s32.totalorder %s272, %s288
      %p290 = scmp.eq.s32.totalorder %s28, 0
      %p291 = por %p289, %p290
      %p292 = scmp.le.s32.totalorder 1, %s22
      %p293 = scmp.lt.s32.totalorder %s22, 3
      %p294 = pnand %p292, %p293
      %p295 = pneg %p294
      // Predicated region
      $region9: #{tpu_custom_call.1} parent=5 // pred_check
        _
      $region10: #{tpu_custom_call.1} parent=5 // pred_check_branch
        %297 = sbr.rel (%p294) target = $region12
      $region11: #{tpu_custom_call.1} parent=5 // pred_region
        %s298 = ssub.s32 %s22, 1
        // Predicated region
        $region13: #{tpu_custom_call.1} parent=11 // pred_check
          %p299 = pneg %p69
        $region14: #{tpu_custom_call.1} parent=11 // pred_check_branch
          %301 = sbr.rel (%p299) target = $region16
        $region15: #{tpu_custom_call.1} parent=11 // pred_region
          _
        $region16: #{tpu_custom_call.1} parent=11 // pred_fallthru
          _
        // Predicated region
        $region17: #{tpu_custom_call.1} parent=11 // pred_check
          %p302 = pneg %p90
        $region18: #{tpu_custom_call.1} parent=11 // pred_check_branch
          %304 = sbr.rel (%p302) target = $region20
        $region19: #{tpu_custom_call.1} parent=11 // pred_region
          _
        $region20: #{tpu_custom_call.1} parent=11 // pred_fallthru
          _
        // Predicated region
        $region21: #{tpu_custom_call.1} parent=11 // pred_check
          %p305 = pneg %p111
        $region22: #{tpu_custom_call.1} parent=11 // pred_check_branch
          %307 = sbr.rel (%p305) target = $region24
        $region23: #{tpu_custom_call.1} parent=11 // pred_region
          _
        $region24: #{tpu_custom_call.1} parent=11 // pred_fallthru
          _
        // Predicated region
        $region25: #{tpu_custom_call.1} parent=11 // pred_check
          %p308 = pneg %p132
        $region26: #{tpu_custom_call.1} parent=11 // pred_check_branch
          %310 = sbr.rel (%p308) target = $region28
        $region27: #{tpu_custom_call.1} parent=11 // pred_region
          _
        $region28: #{tpu_custom_call.1} parent=11 // pred_fallthru
          _
        // Predicated region
        $region29: #{tpu_custom_call.1} parent=11 // pred_check
          %p311 = pneg %p153
        $region30: #{tpu_custom_call.1} parent=11 // pred_check_branch
          %313 = sbr.rel (%p311) target = $region32
        $region31: #{tpu_custom_call.1} parent=11 // pred_region
          _
        $region32: #{tpu_custom_call.1} parent=11 // pred_fallthru
          _
        // Predicated region
        $region33: #{tpu_custom_call.1} parent=11 // pred_check
          %p314 = pneg %p174
        $region34: #{tpu_custom_call.1} parent=11 // pred_check_branch
          %316 = sbr.rel (%p314) target = $region36
        $region35: #{tpu_custom_call.1} parent=11 // pred_region
          _
        $region36: #{tpu_custom_call.1} parent=11 // pred_fallthru
          _
        // Predicated region
        $region37: #{tpu_custom_call.1} parent=11 // pred_check
          %p317 = pneg %p195
        $region38: #{tpu_custom_call.1} parent=11 // pred_check_branch
          %319 = sbr.rel (%p317) target = $region40
        $region39: #{tpu_custom_call.1} parent=11 // pred_region
          _
        $region40: #{tpu_custom_call.1} parent=11 // pred_fallthru
          _
        // Predicated region
        $region41: #{tpu_custom_call.1} parent=11 // pred_check
          %p320 = pneg %p216
        $region42: #{tpu_custom_call.1} parent=11 // pred_check_branch
          %322 = sbr.rel (%p320) target = $region44
        $region43: #{tpu_custom_call.1} parent=11 // pred_region
          _
        $region44: #{tpu_custom_call.1} parent=11 // pred_fallthru
          _
        // Predicated region
        $region45: #{tpu_custom_call.1} parent=11 // pred_check
          %p323 = pneg %p237
        $region46: #{tpu_custom_call.1} parent=11 // pred_check_branch
          %325 = sbr.rel (%p323) target = $region48
        $region47: #{tpu_custom_call.1} parent=11 // pred_region
          _
        $region48: #{tpu_custom_call.1} parent=11 // pred_fallthru
          _
        // Predicated region
        $region49: #{tpu_custom_call.1} parent=11 // pred_check
          %p326 = pneg %p258
        $region50: #{tpu_custom_call.1} parent=11 // pred_check_branch
          %328 = sbr.rel (%p326) target = $region52
        $region51: #{tpu_custom_call.1} parent=11 // pred_region
          _
        $region52: #{tpu_custom_call.1} parent=11 // pred_fallthru
          _
      $region12: #{tpu_custom_call.1} parent=5 // pred_fallthru
        _
      %p329 = scmp.lt.s32.totalorder %s22, 2
      // Predicated region
      $region53: #{tpu_custom_call.1} parent=5 // pred_check
        %p330 = pneg %p329
      $region54: #{tpu_custom_call.1} parent=5 // pred_check_branch
        %332 = sbr.rel (%p330) target = $region56
      $region55: #{tpu_custom_call.1} parent=5 // pred_region
        // Predicated region
        $region57: #{tpu_custom_call.1} parent=55 // pred_check
          %p333 = pneg %p42
        $region58: #{tpu_custom_call.1} parent=55 // pred_check_branch
          %335 = sbr.rel (%p333) target = $region60
        $region59: #{tpu_custom_call.1} parent=55 // pred_region
          %p336 = scmp.lt.s32.totalorder %s22, 1
          %s337 = scalar_select %p336, %s22, 1
          %s338 = smul.addr %s337, 2
          %s339 = smul.addr %s338, 8
          %s340 = scalar_lea.vmem %s0, %s339
        $region60: #{tpu_custom_call.1} parent=55 // pred_fallthru
          _
      $region56: #{tpu_custom_call.1} parent=5 // pred_fallthru
        _
      %p341 = scmp.le.s32.totalorder 1, %s22
      %p342 = scmp.lt.s32.totalorder %s22, 3
      %p343 = pnand %p341, %p342
      %p344 = pneg %p343
      // Predicated region
      $region61: #{tpu_custom_call.1} parent=5 // pred_check
        _
      $region62: #{tpu_custom_call.1} parent=5 // pred_check_branch
        %346 = sbr.rel (%p343) target = $region64
      $region63: #{tpu_custom_call.1} parent=5 // pred_region
        %s347 = ssub.s32 %s22, 1
        %p348 = scmp.lt.s32.totalorder %s27, 1
        %s349 = scalar_select %p348, %s27, 1
        %s350 = smul.addr %s349, 2
        %s351 = smul.addr %s350, 8
        %s352 = scalar_lea.vmem %s0, %s351
        %p353 = pneg %p48
        %p354 = pneg %p45
        %p355 = pneg %p69
        %p356 = pneg %p66
        %p357 = pneg %p90
        %p358 = pneg %p87
        %p359 = pneg %p111
        %p360 = pneg %p108
        %p361 = pneg %p132
        %p362 = pneg %p129
        %p363 = pneg %p153
        %p364 = pneg %p150
        %p365 = pneg %p174
        %p366 = pneg %p171
        %p367 = pneg %p195
        %p368 = pneg %p192
        %p369 = pneg %p216
        %p370 = pneg %p213
        %p371 = pneg %p237
        %p372 = pneg %p234
        %p373 = pneg %p258
        %p374 = pneg %p255
        %p375 = pneg %p284
        %p376 = pneg %p281
        %s377 = sand.u32 %s271, 1
        %s378 = scalar_lea.sflag [#allocation4], %s377
        %s379 = sand.u32 %s271, 1
        %s380 = smul.addr %s379, 32
        %s381 = scalar_lea.vmem [#allocation3], %s380
        %p382 = scmp.lt.s32.totalorder %s27, 1
        %s383 = scalar_select %p382, %s27, 1
        %s384 = smul.addr %s383, 2
        %s385 = smul.addr %s384, 8
        %s386 = scalar_lea.vmem %s0, %s385
        %v387 = vlaneseq
        %v388 = vand.u32 %v387, 127
        %vm389 = vcmp.lt.s32.totalorder %v388, 32
        %vm390 = vcmp.ge.s32.totalorder %v388, 1
        %vm391 = vcmp.lt.s32.totalorder %v388, 31
        %vm392 = vcmp.ge.s32.totalorder %v388, 2
        %vm393 = vcmp.lt.s32.totalorder %v388, 30
        %v394 = vld [vmem:[%s386] sm:$0xff]
        %v395 = vld [vmem:[%s386 + $0x8] sm:$0xff]
        %v396 = vld [vmem:[%s1] sm:$0xff]
        %v397 = vld [vmem:[%s1 + $0x8] sm:$0xff]
        %v398 = vsel %vm389, 1, 0
        %vm399 = vcmp.eq.s32.totalorder %v398, 1
        %v400 = vsel %vm399, %v394, 0.0
        %v401 = vsel %vm399, %v395, 0.0
        %402 = vadd.xlane.f32.xlu0 %v400
        %v403 = vpop.xlane.xlu0 %402
        %404 = vadd.xlane.f32.xlu0 %v401
        %v405 = vpop.xlane.xlu0 %404
        %v406 = vmul.f32 %v400, %v400
        %v407 = vmul.f32 %v401, %v401
        %408 = vadd.xlane.f32.xlu0 %v406
        %v409 = vpop.xlane.xlu0 %408
        %410 = vadd.xlane.f32.xlu0 %v407
        %v411 = vpop.xlane.xlu0 %410
        %vm412 = vcmask 7168
        %v413 = vsel %vm412, %v403, 0.0
        %v414 = vsel %vm412, %v405, 0.0
        %v415 = vadd.f32 %v413, %v414
        %416 = vadd.xlane.f32.xlu0 %v415
        %v417 = vpop.xlane.xlu0 %416
        %v418 = vrot.slane %v417, 4
        %v419 = vadd.f32 %v417, %v418
        %v420 = vrot.slane %v419, 2
        %v421 = vadd.f32 %v419, %v420
        %v422 = vrot.slane %v421, 1
        %v423 = vadd.f32 %v421, %v422
        %s424 = vtos %v423
        %s425 = smul.f32 %s424, 0.001953125
        %v426 = vsel %vm412, %v409, 0.0
        %v427 = vsel %vm412, %v411, 0.0
        %v428 = vadd.f32 %v426, %v427
        %429 = vadd.xlane.f32.xlu0 %v428
        %v430 = vpop.xlane.xlu0 %429
        %v431 = vrot.slane %v430, 4
        %v432 = vadd.f32 %v430, %v431
        %v433 = vrot.slane %v432, 2
        %v434 = vadd.f32 %v432, %v433
        %v435 = vrot.slane %v434, 1
        %v436 = vadd.f32 %v434, %v435
        %s437 = vtos %v436
        %s438 = smul.f32 %s437, 0.001953125
        %s439 = smul.f32 %s425, %s425
        %s440 = ssub.f32 %s438, %s439
        %s441 = smax.f32 %s440, 0.0
        %s442 = sadd.f32 %s441, 1e-08
        %v443 = vstv %s442
        %v444 = vrsqrt.pop %v443
        %v445 = vmul.f32 %v444, %v443
        %v446 = vmul.f32 %v445, %v444
        %v447 = vmul.f32 0.5, %v446
        %v448 = vsub.f32 1.5, %v447
        %v449 = vmul.f32 %v444, %v448
        %vm450 = vweird.f32 %v443
        %vm451 = vweird.f32 %v444
        %vm452 = vmor %vm450, %vm451
        %v453 = vsel %vm452, %v444, %v449
        %s454 = vtos %v453
        %v455 = vstv %s454
        %v456 = vmul.f32 %v396, %v455
        %v457 = vmul.f32 %v397, %v455
        %v458 = vstv %s425
        %v459 = vmul.f32 %v458, %v456
        %v460 = vmul.f32 %v458, %v457
        %463 = vrot.lane.b32.xlu0 %v459, 1
        %v464 = vpop.permute.xlu0 %463
        %465 = vrot.lane.b32.xlu0 %v460, 1
        %v466 = vpop.permute.xlu0 %465
        %v469 = vsub.f32 %v396, %v464
        %v470 = vsub.f32 %v397, %v466
        %472 = vset.pattern.permute.xlu0 0
        %473 = vperm.xlu0 %472, %v456
        %v474 = vpop.permute.xlu0 %473
        %477 = vset.pattern.permute.xlu0 0
        %478 = vperm.xlu0 %477, %v457
        %v479 = vpop.permute.xlu0 %478
        %v481 = vmul.f32 %v394, %v474
        %v482 = vmul.f32 %v395, %v479
        %484 = vset.pattern.permute.xlu0 1
        %485 = vperm.xlu0 %484, %v469
        %v486 = vpop.permute.xlu0 %485
        %489 = vset.pattern.permute.xlu0 1
        %490 = vperm.xlu0 %489, %v470
        %v491 = vpop.permute.xlu0 %490
        %v493 = vadd.f32 %v481, %v486
        %v494 = vadd.f32 %v482, %v491
        %v495 = vld [vmem:[%s2] sm:$0xff]
        %v496 = vld [vmem:[%s2 + $0x8] sm:$0xff]
        %v497 = vld [vmem:[%s3] sm:$0xff]
        %v498 = vld [vmem:[%s3 + $0x8] sm:$0xff]
        %500 = vset.pattern.permute.xlu0 0
        %501 = vperm.xlu0 %500, %v497
        %v502 = vpop.permute.xlu0 %501
        %505 = vset.pattern.permute.xlu0 0
        %506 = vperm.xlu0 %505, %v498
        %v507 = vpop.permute.xlu0 %506
        %vm509 = vcmask 130048
        %v511 = vsel %vm509, %v495, 0
        %v514 = vsel %vm509, %v496, 0
        %516 = vmatpush.msra.mxu0 0.0
        %517 = vmatpush.msra.mxu0 0.0
        %518 = vmatpush.msra.mxu0 0.0
        %519 = vmatpush.msra.mxu0 0.0
        %520 = vmatpush.msra.mxu0 0.0
        %521 = vmatpush.msra.mxu0 0.0
        %522 = vmatpush.msra.mxu0 0.0
        %523 = vmatpush.msra.mxu0 0.0
        %524 = vmatpush.msra.mxu0 0.0
        %525 = vmatpush.msra.mxu0 0.0
        %526 = vmatpush.msra.mxu0 0.0
        %527 = vmatpush.msra.mxu0 0.0
        %528 = vmatpush.msra.mxu0 0.0
        %529 = vmatpush.msra.mxu0 0.0
        %530 = vmatpush.msra.mxu0 %v494
        %531 = vmatpush.msra.mxu0 %v493
        %532 = vmatmul.f32.gmra.mxu0 %v511
        %v533 = vpop.f32.mrf.mxu0
        %v534 = vadd.f32 %v502, %v533
        %535 = vmatmul.f32.gmra.mxu0 %v514
        %v536 = vpop.f32.mrf.mxu0
        %v537 = vadd.f32 %v507, %v536
        %538 = vdwg.mxu0
        loop: start=0, step=1, limit=2
        $region65: #{tpu_custom_call.1} parent=63 // loop_pre_header
          _
        $region66: #{tpu_custom_call.1} parent=63 // loop_header
          %s540 = sphi 0, %s544
          %p541 = scmp.ge.s32.totalorder %s540, 2
          %v545 = vphi %v534, %v1794
          %v546 = vphi %v537, %v1795
          %v547 = vphi 0.0, %v1796
          %v548 = vphi 0.0, %v1797
        $region67: #{tpu_custom_call.1} parent=63 // loop_header_branch
          %543 = sbr.rel (%p541) target = $region71
        $region68: #{tpu_custom_call.1} parent=63 // loop_body
          %s549 = smul.u32 %s540, 2
          %s550 = smul.u32 %s549, 32
          %s551 = scalar_lea.vmem %s5, %s550
          %v552 = vld [vmem:[%s551] sm:$0xff]
          %v553 = vld [vmem:[%s551 + $0x8] sm:$0xff]
          %v554 = vld [vmem:[%s551 + $0x10] sm:$0xff]
          %v555 = vld [vmem:[%s551 + $0x18] sm:$0xff]
          %s556 = scalar_lea.vmem %s4, %s550
          %v557 = vld [vmem:[%s556] sm:$0xff]
          %v558 = vld [vmem:[%s556 + $0x8] sm:$0xff]
          %v559 = vld [vmem:[%s556 + $0x10] sm:$0xff]
          %v560 = vld [vmem:[%s556 + $0x18] sm:$0xff]
          %562 = vset.pattern.permute.xlu0 0
          %563 = vperm.xlu0 %562, %v552
          %v564 = vpop.permute.xlu0 %563
          %567 = vset.pattern.permute.xlu0 0
          %568 = vperm.xlu0 %567, %v553
          %v569 = vpop.permute.xlu0 %568
          %572 = vset.pattern.permute.xlu0 0
          %573 = vperm.xlu0 %572, %v554
          %v574 = vpop.permute.xlu0 %573
          %577 = vset.pattern.permute.xlu0 0
          %578 = vperm.xlu0 %577, %v555
          %v579 = vpop.permute.xlu0 %578
          %v582 = vsel %vm509, %v557, 0
          %v585 = vsel %vm509, %v558, 0
          %v588 = vsel %vm509, %v559, 0
          %v591 = vsel %vm509, %v560, 0
          %593 = vmatpush.msra.mxu0 0.0
          %594 = vmatpush.msra.mxu0 0.0
          %595 = vmatpush.msra.mxu0 0.0
          %596 = vmatpush.msra.mxu0 0.0
          %597 = vmatpush.msra.mxu0 0.0
          %598 = vmatpush.msra.mxu0 0.0
          %599 = vmatpush.msra.mxu0 0.0
          %600 = vmatpush.msra.mxu0 0.0
          %601 = vmatpush.msra.mxu0 0.0
          %602 = vmatpush.msra.mxu0 0.0
          %603 = vmatpush.msra.mxu0 0.0
          %604 = vmatpush.msra.mxu0 0.0
          %605 = vmatpush.msra.mxu0 0.0
          %606 = vmatpush.msra.mxu0 0.0
          %607 = vmatpush.msra.mxu0 %v546
          %608 = vmatpush.msra.mxu0 %v545
          %609 = vmatmul.f32.gmra.mxu0 %v582
          %v610 = vpop.f32.mrf.mxu0
          %v611 = vadd.f32 %v564, %v610
          %612 = vmatmul.f32.gmra.mxu0 %v585
          %v613 = vpop.f32.mrf.mxu0
          %v614 = vadd.f32 %v569, %v613
          %615 = vmatmul.f32.gmra.mxu0 %v588
          %v616 = vpop.f32.mrf.mxu0
          %v617 = vadd.f32 %v574, %v616
          %618 = vmatmul.f32.gmra.mxu0 %v591
          %v619 = vpop.f32.mrf.mxu0
          %v620 = vadd.f32 %v579, %v619
          %621 = vdwg.mxu0
          %vm622 = vcmp.ge.f32.partialorder %v611, 0.0
          %vm623 = vcmp.ge.f32.partialorder %v614, 0.0
          %vm624 = vcmp.ge.f32.partialorder %v617, 0.0
          %vm625 = vcmp.ge.f32.partialorder %v620, 0.0
          %626 = vset.pattern.permute.xlu0 9
          %627 = vperm.xlu0 %626, %v552
          %v628 = vpop.permute.xlu0 %627
          %630 = vset.pattern.permute.xlu0 9
          %631 = vperm.xlu0 %630, %v553
          %v632 = vpop.permute.xlu0 %631
          %634 = vset.pattern.permute.xlu0 9
          %635 = vperm.xlu0 %634, %v554
          %v636 = vpop.permute.xlu0 %635
          %638 = vset.pattern.permute.xlu0 9
          %639 = vperm.xlu0 %638, %v555
          %v640 = vpop.permute.xlu0 %639
          %v642 = vmul.f32 %v628, %v611
          %v643 = vmul.f32 %v632, %v614
          %v644 = vmul.f32 %v636, %v617
          %v645 = vmul.f32 %v640, %v620
          %v646 = vsel %vm622, %v611, %v642
          %v647 = vsel %vm623, %v614, %v643
          %v648 = vsel %vm624, %v617, %v644
          %v649 = vsel %vm625, %v620, %v645
          %v650 = vsel %vm399, %v646, 0.0
          %v651 = vsel %vm399, %v647, 0.0
          %v652 = vsel %vm399, %v648, 0.0
          %v653 = vsel %vm399, %v649, 0.0
          %654 = vadd.xlane.f32.xlu0 %v650
          %v655 = vpop.xlane.xlu0 %654
          %656 = vadd.xlane.f32.xlu0 %v651
          %v657 = vpop.xlane.xlu0 %656
          %658 = vadd.xlane.f32.xlu0 %v652
          %v659 = vpop.xlane.xlu0 %658
          %660 = vadd.xlane.f32.xlu0 %v653
          %v661 = vpop.xlane.xlu0 %660
          %v662 = vmul.f32 %v650, %v650
          %v663 = vmul.f32 %v651, %v651
          %v664 = vmul.f32 %v652, %v652
          %v665 = vmul.f32 %v653, %v653
          %666 = vadd.xlane.f32.xlu0 %v662
          %v667 = vpop.xlane.xlu0 %666
          %668 = vadd.xlane.f32.xlu0 %v663
          %v669 = vpop.xlane.xlu0 %668
          %670 = vadd.xlane.f32.xlu0 %v664
          %v671 = vpop.xlane.xlu0 %670
          %672 = vadd.xlane.f32.xlu0 %v665
          %v673 = vpop.xlane.xlu0 %672
          %v674 = vsel %vm412, %v655, 0.0
          %v675 = vsel %vm412, %v657, 0.0
          %v676 = vadd.f32 %v674, %v675
          %v677 = vsel %vm412, %v659, 0.0
          %v678 = vadd.f32 %v676, %v677
          %v679 = vsel %vm412, %v661, 0.0
          %v680 = vadd.f32 %v678, %v679
          %681 = vadd.xlane.f32.xlu0 %v680
          %v682 = vpop.xlane.xlu0 %681
          %v683 = vrot.slane %v682, 4
          %v684 = vadd.f32 %v682, %v683
          %v685 = vrot.slane %v684, 2
          %v686 = vadd.f32 %v684, %v685
          %v687 = vrot.slane %v686, 1
          %v688 = vadd.f32 %v686, %v687
          %s689 = vtos %v688
          %s690 = smul.f32 %s689, 0.0009765625
          %v691 = vsel %vm412, %v667, 0.0
          %v692 = vsel %vm412, %v669, 0.0
          %v693 = vadd.f32 %v691, %v692
          %v694 = vsel %vm412, %v671, 0.0
          %v695 = vadd.f32 %v693, %v694
          %v696 = vsel %vm412, %v673, 0.0
          %v697 = vadd.f32 %v695, %v696
          %698 = vadd.xlane.f32.xlu0 %v697
          %v699 = vpop.xlane.xlu0 %698
          %v700 = vrot.slane %v699, 4
          %v701 = vadd.f32 %v699, %v700
          %v702 = vrot.slane %v701, 2
          %v703 = vadd.f32 %v701, %v702
          %v704 = vrot.slane %v703, 1
          %v705 = vadd.f32 %v703, %v704
          %s706 = vtos %v705
          %s707 = smul.f32 %s706, 0.0009765625
          %s708 = smul.f32 %s690, %s690
          %s709 = ssub.f32 %s707, %s708
          %s710 = smax.f32 %s709, 0.0
          %s711 = sadd.f32 %s710, 1e-08
          %v712 = vstv %s711
          %v713 = vrsqrt.pop %v712
          %v714 = vmul.f32 %v713, %v712
          %v715 = vmul.f32 %v714, %v713
          %v716 = vmul.f32 0.5, %v715
          %v717 = vsub.f32 1.5, %v716
          %v718 = vmul.f32 %v713, %v717
          %vm719 = vweird.f32 %v712
          %vm720 = vweird.f32 %v713
          %vm721 = vmor %vm719, %vm720
          %v722 = vsel %vm721, %v713, %v718
          %s723 = vtos %v722
          %v724 = vstv %s723
          %v725 = vmul.f32 %v552, %v724
          %v726 = vmul.f32 %v553, %v724
          %v727 = vmul.f32 %v554, %v724
          %v728 = vmul.f32 %v555, %v724
          %v729 = vstv %s690
          %v730 = vmul.f32 %v729, %v725
          %v731 = vmul.f32 %v729, %v726
          %v732 = vmul.f32 %v729, %v727
          %v733 = vmul.f32 %v729, %v728
          %738 = vrot.lane.b32.xlu0 %v730, 1
          %v739 = vpop.permute.xlu0 %738
          %740 = vrot.lane.b32.xlu0 %v731, 1
          %v741 = vpop.permute.xlu0 %740
          %742 = vrot.lane.b32.xlu0 %v732, 1
          %v743 = vpop.permute.xlu0 %742
          %744 = vrot.lane.b32.xlu0 %v733, 1
          %v745 = vpop.permute.xlu0 %744
          %v750 = vsub.f32 %v552, %v739
          %v751 = vsub.f32 %v553, %v741
          %v752 = vsub.f32 %v554, %v743
          %v753 = vsub.f32 %v555, %v745
          %755 = vset.pattern.permute.xlu0 1
          %756 = vperm.xlu0 %755, %v725
          %v757 = vpop.permute.xlu0 %756
          %760 = vset.pattern.permute.xlu0 1
          %761 = vperm.xlu0 %760, %v726
          %v762 = vpop.permute.xlu0 %761
          %765 = vset.pattern.permute.xlu0 1
          %766 = vperm.xlu0 %765, %v727
          %v767 = vpop.permute.xlu0 %766
          %770 = vset.pattern.permute.xlu0 1
          %771 = vperm.xlu0 %770, %v728
          %v772 = vpop.permute.xlu0 %771
          %v774 = vmul.f32 %v646, %v757
          %v775 = vmul.f32 %v647, %v762
          %v776 = vmul.f32 %v648, %v767
          %v777 = vmul.f32 %v649, %v772
          %779 = vset.pattern.permute.xlu0 2
          %780 = vperm.xlu0 %779, %v750
          %v781 = vpop.permute.xlu0 %780
          %784 = vset.pattern.permute.xlu0 2
          %785 = vperm.xlu0 %784, %v751
          %v786 = vpop.permute.xlu0 %785
          %789 = vset.pattern.permute.xlu0 2
          %790 = vperm.xlu0 %789, %v752
          %v791 = vpop.permute.xlu0 %790
          %794 = vset.pattern.permute.xlu0 2
          %795 = vperm.xlu0 %794, %v753
          %v796 = vpop.permute.xlu0 %795
          %v798 = vadd.f32 %v774, %v781
          %v799 = vadd.f32 %v775, %v786
          %v800 = vadd.f32 %v776, %v791
          %v801 = vadd.f32 %v777, %v796
          %802 = vrot.lane.b32.xlu0 %v798, 1
          %v803 = vpop.permute.xlu0 %802
          %804 = vrot.lane.b32.xlu0 %v799, 1
          %v805 = vpop.permute.xlu0 %804
          %806 = vrot.lane.b32.xlu0 %v800, 1
          %v807 = vpop.permute.xlu0 %806
          %808 = vrot.lane.b32.xlu0 %v801, 1
          %v809 = vpop.permute.xlu0 %808
          %v810 = vsel %vm390, 1, 0
          %vm811 = vcmp.eq.s32.totalorder %v810, 1
          %v812 = vsel %vm811, %v803, 0.0
          %v813 = vsel %vm811, %v805, 0.0
          %v814 = vsel %vm811, %v807, 0.0
          %v815 = vsel %vm811, %v809, 0.0
          %816 = vset.pattern.permute.xlu0 3
          %817 = vperm.xlu0 %816, %v552
          %v818 = vpop.permute.xlu0 %817
          %820 = vset.pattern.permute.xlu0 3
          %821 = vperm.xlu0 %820, %v553
          %v822 = vpop.permute.xlu0 %821
          %824 = vset.pattern.permute.xlu0 3
          %825 = vperm.xlu0 %824, %v554
          %v826 = vpop.permute.xlu0 %825
          %828 = vset.pattern.permute.xlu0 3
          %829 = vperm.xlu0 %828, %v555
          %v830 = vpop.permute.xlu0 %829
          %v832 = vmul.f32 %v818, %v812
          %v833 = vmul.f32 %v822, %v813
          %v834 = vmul.f32 %v826, %v814
          %v835 = vmul.f32 %v830, %v815
          %836 = vset.pattern.permute.xlu0 4
          %837 = vperm.xlu0 %836, %v552
          %v838 = vpop.permute.xlu0 %837
          %840 = vset.pattern.permute.xlu0 4
          %841 = vperm.xlu0 %840, %v553
          %v842 = vpop.permute.xlu0 %841
          %844 = vset.pattern.permute.xlu0 4
          %845 = vperm.xlu0 %844, %v554
          %v846 = vpop.permute.xlu0 %845
          %848 = vset.pattern.permute.xlu0 4
          %849 = vperm.xlu0 %848, %v555
          %v850 = vpop.permute.xlu0 %849
          %v852 = vmul.f32 %v838, %v798
          %v853 = vmul.f32 %v842, %v799
          %v854 = vmul.f32 %v846, %v800
          %v855 = vmul.f32 %v850, %v801
          %v856 = vadd.f32 %v832, %v852
          %v857 = vadd.f32 %v833, %v853
          %v858 = vadd.f32 %v834, %v854
          %v859 = vadd.f32 %v835, %v855
          %860 = vrot.lane.b32.xlu0 %v798, 127
          %v861 = vpop.permute.xlu0 %860
          %862 = vrot.lane.b32.xlu0 %v799, 127
          %v863 = vpop.permute.xlu0 %862
          %864 = vrot.lane.b32.xlu0 %v800, 127
          %v865 = vpop.permute.xlu0 %864
          %866 = vrot.lane.b32.xlu0 %v801, 127
          %v867 = vpop.permute.xlu0 %866
          %v868 = vsel %vm391, 1, 0
          %vm869 = vcmp.eq.s32.totalorder %v868, 1
          %v870 = vsel %vm869, %v861, 0.0
          %v871 = vsel %vm869, %v863, 0.0
          %v872 = vsel %vm869, %v865, 0.0
          %v873 = vsel %vm869, %v867, 0.0
          %874 = vset.pattern.permute.xlu0 5
          %875 = vperm.xlu0 %874, %v552
          %v876 = vpop.permute.xlu0 %875
          %878 = vset.pattern.permute.xlu0 5
          %879 = vperm.xlu0 %878, %v553
          %v880 = vpop.permute.xlu0 %879
          %882 = vset.pattern.permute.xlu0 5
          %883 = vperm.xlu0 %882, %v554
          %v884 = vpop.permute.xlu0 %883
          %886 = vset.pattern.permute.xlu0 5
          %887 = vperm.xlu0 %886, %v555
          %v888 = vpop.permute.xlu0 %887
          %v890 = vmul.f32 %v876, %v870
          %v891 = vmul.f32 %v880, %v871
          %v892 = vmul.f32 %v884, %v872
          %v893 = vmul.f32 %v888, %v873
          %v894 = vadd.f32 %v856, %v890
          %v895 = vadd.f32 %v857, %v891
          %v896 = vadd.f32 %v858, %v892
          %v897 = vadd.f32 %v859, %v893
          %898 = vset.pattern.permute.xlu0 6
          %899 = vperm.xlu0 %898, %v552
          %v900 = vpop.permute.xlu0 %899
          %902 = vset.pattern.permute.xlu0 6
          %903 = vperm.xlu0 %902, %v553
          %v904 = vpop.permute.xlu0 %903
          %906 = vset.pattern.permute.xlu0 6
          %907 = vperm.xlu0 %906, %v554
          %v908 = vpop.permute.xlu0 %907
          %910 = vset.pattern.permute.xlu0 6
          %911 = vperm.xlu0 %910, %v555
          %v912 = vpop.permute.xlu0 %911
          %v914 = vadd.f32 %v894, %v900
          %v915 = vadd.f32 %v895, %v904
          %v916 = vadd.f32 %v896, %v908
          %v917 = vadd.f32 %v897, %v912
          %vm918 = vcmp.ge.f32.partialorder %v914, 0.0
          %vm919 = vcmp.ge.f32.partialorder %v915, 0.0
          %vm920 = vcmp.ge.f32.partialorder %v916, 0.0
          %vm921 = vcmp.ge.f32.partialorder %v917, 0.0
          %922 = vset.pattern.permute.xlu0 10
          %923 = vperm.xlu0 %922, %v552
          %v924 = vpop.permute.xlu0 %923
          %926 = vset.pattern.permute.xlu0 10
          %927 = vperm.xlu0 %926, %v553
          %v928 = vpop.permute.xlu0 %927
          %930 = vset.pattern.permute.xlu0 10
          %931 = vperm.xlu0 %930, %v554
          %v932 = vpop.permute.xlu0 %931
          %934 = vset.pattern.permute.xlu0 10
          %935 = vperm.xlu0 %934, %v555
          %v936 = vpop.permute.xlu0 %935
          %v938 = vmul.f32 %v924, %v914
          %v939 = vmul.f32 %v928, %v915
          %v940 = vmul.f32 %v932, %v916
          %v941 = vmul.f32 %v936, %v917
          %v942 = vsel %vm918, %v914, %v938
          %v943 = vsel %vm919, %v915, %v939
          %v944 = vsel %vm920, %v916, %v940
          %v945 = vsel %vm921, %v917, %v941
          %v946 = vsel %vm399, %v942, 0.0
          %v947 = vsel %vm399, %v943, 0.0
          %v948 = vsel %vm399, %v944, 0.0
          %v949 = vsel %vm399, %v945, 0.0
          %950 = vadd.xlane.f32.xlu0 %v946
          %v951 = vpop.xlane.xlu0 %950
          %952 = vadd.xlane.f32.xlu0 %v947
          %v953 = vpop.xlane.xlu0 %952
          %954 = vadd.xlane.f32.xlu0 %v948
          %v955 = vpop.xlane.xlu0 %954
          %956 = vadd.xlane.f32.xlu0 %v949
          %v957 = vpop.xlane.xlu0 %956
          %v958 = vmul.f32 %v946, %v946
          %v959 = vmul.f32 %v947, %v947
          %v960 = vmul.f32 %v948, %v948
          %v961 = vmul.f32 %v949, %v949
          %962 = vadd.xlane.f32.xlu0 %v958
          %v963 = vpop.xlane.xlu0 %962
          %964 = vadd.xlane.f32.xlu0 %v959
          %v965 = vpop.xlane.xlu0 %964
          %966 = vadd.xlane.f32.xlu0 %v960
          %v967 = vpop.xlane.xlu0 %966
          %968 = vadd.xlane.f32.xlu0 %v961
          %v969 = vpop.xlane.xlu0 %968
          %v970 = vsel %vm412, %v951, 0.0
          %v971 = vsel %vm412, %v953, 0.0
          %v972 = vadd.f32 %v970, %v971
          %v973 = vsel %vm412, %v955, 0.0
          %v974 = vadd.f32 %v972, %v973
          %v975 = vsel %vm412, %v957, 0.0
          %v976 = vadd.f32 %v974, %v975
          %977 = vadd.xlane.f32.xlu0 %v976
          %v978 = vpop.xlane.xlu0 %977
          %v979 = vrot.slane %v978, 4
          %v980 = vadd.f32 %v978, %v979
          %v981 = vrot.slane %v980, 2
          %v982 = vadd.f32 %v980, %v981
          %v983 = vrot.slane %v982, 1
          %v984 = vadd.f32 %v982, %v983
          %s985 = vtos %v984
          %s986 = smul.f32 %s985, 0.0009765625
          %v987 = vsel %vm412, %v963, 0.0
          %v988 = vsel %vm412, %v965, 0.0
          %v989 = vadd.f32 %v987, %v988
          %v990 = vsel %vm412, %v967, 0.0
          %v991 = vadd.f32 %v989, %v990
          %v992 = vsel %vm412, %v969, 0.0
          %v993 = vadd.f32 %v991, %v992
          %994 = vadd.xlane.f32.xlu0 %v993
          %v995 = vpop.xlane.xlu0 %994
          %v996 = vrot.slane %v995, 4
          %v997 = vadd.f32 %v995, %v996
          %v998 = vrot.slane %v997, 2
          %v999 = vadd.f32 %v997, %v998
          %v1000 = vrot.slane %v999, 1
          %v1001 = vadd.f32 %v999, %v1000
          %s1002 = vtos %v1001
          %s1003 = smul.f32 %s1002, 0.0009765625
          %s1004 = smul.f32 %s986, %s986
          %s1005 = ssub.f32 %s1003, %s1004
          %s1006 = smax.f32 %s1005, 0.0
          %s1007 = sadd.f32 %s1006, 1e-08
          %v1008 = vstv %s1007
          %v1009 = vrsqrt.pop %v1008
          %v1010 = vmul.f32 %v1009, %v1008
          %v1011 = vmul.f32 %v1010, %v1009
          %v1012 = vmul.f32 0.5, %v1011
          %v1013 = vsub.f32 1.5, %v1012
          %v1014 = vmul.f32 %v1009, %v1013
          %vm1015 = vweird.f32 %v1008
          %vm1016 = vweird.f32 %v1009
          %vm1017 = vmor %vm1015, %vm1016
          %v1018 = vsel %vm1017, %v1009, %v1014
          %s1019 = vtos %v1018
          %v1020 = vstv %s1019
          %v1021 = vmul.f32 %v552, %v1020
          %v1022 = vmul.f32 %v553, %v1020
          %v1023 = vmul.f32 %v554, %v1020
          %v1024 = vmul.f32 %v555, %v1020
          %v1025 = vstv %s986
          %v1026 = vmul.f32 %v1025, %v1021
          %v1027 = vmul.f32 %v1025, %v1022
          %v1028 = vmul.f32 %v1025, %v1023
          %v1029 = vmul.f32 %v1025, %v1024
          %1034 = vrot.lane.b32.xlu0 %v1026, 1
          %v1035 = vpop.permute.xlu0 %1034
          %1036 = vrot.lane.b32.xlu0 %v1027, 1
          %v1037 = vpop.permute.xlu0 %1036
          %1038 = vrot.lane.b32.xlu0 %v1028, 1
          %v1039 = vpop.permute.xlu0 %1038
          %1040 = vrot.lane.b32.xlu0 %v1029, 1
          %v1041 = vpop.permute.xlu0 %1040
          %v1046 = vsub.f32 %v552, %v1035
          %v1047 = vsub.f32 %v553, %v1037
          %v1048 = vsub.f32 %v554, %v1039
          %v1049 = vsub.f32 %v555, %v1041
          %1051 = vset.pattern.permute.xlu0 7
          %1052 = vperm.xlu0 %1051, %v1021
          %v1053 = vpop.permute.xlu0 %1052
          %1056 = vset.pattern.permute.xlu0 7
          %1057 = vperm.xlu0 %1056, %v1022
          %v1058 = vpop.permute.xlu0 %1057
          %1061 = vset.pattern.permute.xlu0 7
          %1062 = vperm.xlu0 %1061, %v1023
          %v1063 = vpop.permute.xlu0 %1062
          %1066 = vset.pattern.permute.xlu0 7
          %1067 = vperm.xlu0 %1066, %v1024
          %v1068 = vpop.permute.xlu0 %1067
          %v1070 = vmul.f32 %v942, %v1053
          %v1071 = vmul.f32 %v943, %v1058
          %v1072 = vmul.f32 %v944, %v1063
          %v1073 = vmul.f32 %v945, %v1068
          %1075 = vset.pattern.permute.xlu0 8
          %1076 = vperm.xlu0 %1075, %v1046
          %v1077 = vpop.permute.xlu0 %1076
          %1080 = vset.pattern.permute.xlu0 8
          %1081 = vperm.xlu0 %1080, %v1047
          %v1082 = vpop.permute.xlu0 %1081
          %1085 = vset.pattern.permute.xlu0 8
          %1086 = vperm.xlu0 %1085, %v1048
          %v1087 = vpop.permute.xlu0 %1086
          %1090 = vset.pattern.permute.xlu0 8
          %1091 = vperm.xlu0 %1090, %v1049
          %v1092 = vpop.permute.xlu0 %1091
          %v1094 = vadd.f32 %v1070, %v1077
          %v1095 = vadd.f32 %v1071, %v1082
          %v1096 = vadd.f32 %v1072, %v1087
          %v1097 = vadd.f32 %v1073, %v1092
          %s1098 = scalar_lea.vmem %s6, %s550
          %v1099 = vld [vmem:[%s1098] sm:$0xff]
          %v1100 = vld [vmem:[%s1098 + $0x8] sm:$0xff]
          %v1101 = vld [vmem:[%s1098 + $0x10] sm:$0xff]
          %v1102 = vld [vmem:[%s1098 + $0x18] sm:$0xff]
          %s1103 = scalar_lea.vmem %s7, %s550
          %v1104 = vld [vmem:[%s1103] sm:$0xff]
          %v1105 = vld [vmem:[%s1103 + $0x8] sm:$0xff]
          %v1106 = vld [vmem:[%s1103 + $0x10] sm:$0xff]
          %v1107 = vld [vmem:[%s1103 + $0x18] sm:$0xff]
          %1109 = vset.pattern.permute.xlu0 0
          %1110 = vperm.xlu0 %1109, %v1104
          %v1111 = vpop.permute.xlu0 %1110
          %1114 = vset.pattern.permute.xlu0 0
          %1115 = vperm.xlu0 %1114, %v1105
          %v1116 = vpop.permute.xlu0 %1115
          %1119 = vset.pattern.permute.xlu0 0
          %1120 = vperm.xlu0 %1119, %v1106
          %v1121 = vpop.permute.xlu0 %1120
          %1124 = vset.pattern.permute.xlu0 0
          %1125 = vperm.xlu0 %1124, %v1107
          %v1126 = vpop.permute.xlu0 %1125
          %vm1128 = vcmask 261120
          %v1130 = vsel %vm1128, %v1099, 0
          %v1133 = vsel %vm1128, %v1100, 0
          %v1136 = vsel %vm1128, %v1101, 0
          %v1139 = vsel %vm1128, %v1102, 0
          %1141 = vmatpush.msra.mxu0 0.0
          %1142 = vmatpush.msra.mxu0 0.0
          %1143 = vmatpush.msra.mxu0 0.0
          %1144 = vmatpush.msra.mxu0 0.0
          %1145 = vmatpush.msra.mxu0 0.0
          %1146 = vmatpush.msra.mxu0 0.0
          %1147 = vmatpush.msra.mxu0 0.0
          %1148 = vmatpush.msra.mxu0 0.0
          %1149 = vmatpush.msra.mxu0 0.0
          %1150 = vmatpush.msra.mxu0 0.0
          %1151 = vmatpush.msra.mxu0 0.0
          %1152 = vmatpush.msra.mxu0 0.0
          %1153 = vmatpush.msra.mxu0 %v1097
          %1154 = vmatpush.msra.mxu0 %v1096
          %1155 = vmatpush.msra.mxu0 %v1095
          %1156 = vmatpush.msra.mxu0 %v1094
          %1157 = vmatmul.f32.gmra.mxu0 %v1130
          %v1158 = vpop.f32.mrf.mxu0
          %v1159 = vadd.f32 %v1111, %v1158
          %1160 = vmatmul.f32.gmra.mxu0 %v1133
          %v1161 = vpop.f32.mrf.mxu0
          %v1162 = vadd.f32 %v1116, %v1161
          %1163 = vmatmul.f32.gmra.mxu0 %v1136
          %v1164 = vpop.f32.mrf.mxu0
          %v1165 = vadd.f32 %v1121, %v1164
          %1166 = vmatmul.f32.gmra.mxu0 %v1139
          %v1167 = vpop.f32.mrf.mxu0
          %v1168 = vadd.f32 %v1126, %v1167
          %1169 = vdwg.mxu0
          %v1170 = vadd.f32 %v545, %v1159
          %v1171 = vadd.f32 %v546, %v1162
          %v1172 = vadd.f32 %v547, %v1165
          %v1173 = vadd.f32 %v548, %v1168
          %s1174 = sadd.s32 %s549, 1
          %s1175 = smul.u32 %s1174, 32
          %s1176 = scalar_lea.vmem %s5, %s1175
          %v1177 = vld [vmem:[%s1176] sm:$0xff]
          %v1178 = vld [vmem:[%s1176 + $0x8] sm:$0xff]
          %v1179 = vld [vmem:[%s1176 + $0x10] sm:$0xff]
          %v1180 = vld [vmem:[%s1176 + $0x18] sm:$0xff]
          %s1181 = scalar_lea.vmem %s4, %s1175
          %v1182 = vld [vmem:[%s1181] sm:$0xff]
          %v1183 = vld [vmem:[%s1181 + $0x8] sm:$0xff]
          %v1184 = vld [vmem:[%s1181 + $0x10] sm:$0xff]
          %v1185 = vld [vmem:[%s1181 + $0x18] sm:$0xff]
          %1187 = vset.pattern.permute.xlu0 0
          %1188 = vperm.xlu0 %1187, %v1177
          %v1189 = vpop.permute.xlu0 %1188
          %1192 = vset.pattern.permute.xlu0 0
          %1193 = vperm.xlu0 %1192, %v1178
          %v1194 = vpop.permute.xlu0 %1193
          %1197 = vset.pattern.permute.xlu0 0
          %1198 = vperm.xlu0 %1197, %v1179
          %v1199 = vpop.permute.xlu0 %1198
          %1202 = vset.pattern.permute.xlu0 0
          %1203 = vperm.xlu0 %1202, %v1180
          %v1204 = vpop.permute.xlu0 %1203
          %v1207 = vsel %vm509, %v1182, 0
          %v1210 = vsel %vm509, %v1183, 0
          %v1213 = vsel %vm509, %v1184, 0
          %v1216 = vsel %vm509, %v1185, 0
          %1218 = vmatpush.msra.mxu0 0.0
          %1219 = vmatpush.msra.mxu0 0.0
          %1220 = vmatpush.msra.mxu0 0.0
          %1221 = vmatpush.msra.mxu0 0.0
          %1222 = vmatpush.msra.mxu0 0.0
          %1223 = vmatpush.msra.mxu0 0.0
          %1224 = vmatpush.msra.mxu0 0.0
          %1225 = vmatpush.msra.mxu0 0.0
          %1226 = vmatpush.msra.mxu0 0.0
          %1227 = vmatpush.msra.mxu0 0.0
          %1228 = vmatpush.msra.mxu0 0.0
          %1229 = vmatpush.msra.mxu0 0.0
          %1230 = vmatpush.msra.mxu0 0.0
          %1231 = vmatpush.msra.mxu0 0.0
          %1232 = vmatpush.msra.mxu0 %v1171
          %1233 = vmatpush.msra.mxu0 %v1170
          %1234 = vmatmul.f32.gmra.mxu0 %v1207
          %v1235 = vpop.f32.mrf.mxu0
          %v1236 = vadd.f32 %v1189, %v1235
          %1237 = vmatmul.f32.gmra.mxu0 %v1210
          %v1238 = vpop.f32.mrf.mxu0
          %v1239 = vadd.f32 %v1194, %v1238
          %1240 = vmatmul.f32.gmra.mxu0 %v1213
          %v1241 = vpop.f32.mrf.mxu0
          %v1242 = vadd.f32 %v1199, %v1241
          %1243 = vmatmul.f32.gmra.mxu0 %v1216
          %v1244 = vpop.f32.mrf.mxu0
          %v1245 = vadd.f32 %v1204, %v1244
          %1246 = vdwg.mxu0
          %vm1247 = vcmp.ge.f32.partialorder %v1236, 0.0
          %vm1248 = vcmp.ge.f32.partialorder %v1239, 0.0
          %vm1249 = vcmp.ge.f32.partialorder %v1242, 0.0
          %vm1250 = vcmp.ge.f32.partialorder %v1245, 0.0
          %1251 = vset.pattern.permute.xlu0 9
          %1252 = vperm.xlu0 %1251, %v1177
          %v1253 = vpop.permute.xlu0 %1252
          %1255 = vset.pattern.permute.xlu0 9
          %1256 = vperm.xlu0 %1255, %v1178
          %v1257 = vpop.permute.xlu0 %1256
          %1259 = vset.pattern.permute.xlu0 9
          %1260 = vperm.xlu0 %1259, %v1179
          %v1261 = vpop.permute.xlu0 %1260
          %1263 = vset.pattern.permute.xlu0 9
          %1264 = vperm.xlu0 %1263, %v1180
          %v1265 = vpop.permute.xlu0 %1264
          %v1267 = vmul.f32 %v1253, %v1236
          %v1268 = vmul.f32 %v1257, %v1239
          %v1269 = vmul.f32 %v1261, %v1242
          %v1270 = vmul.f32 %v1265, %v1245
          %v1271 = vsel %vm1247, %v1236, %v1267
          %v1272 = vsel %vm1248, %v1239, %v1268
          %v1273 = vsel %vm1249, %v1242, %v1269
          %v1274 = vsel %vm1250, %v1245, %v1270
          %v1275 = vsel %vm399, %v1271, 0.0
          %v1276 = vsel %vm399, %v1272, 0.0
          %v1277 = vsel %vm399, %v1273, 0.0
          %v1278 = vsel %vm399, %v1274, 0.0
          %1279 = vadd.xlane.f32.xlu0 %v1275
          %v1280 = vpop.xlane.xlu0 %1279
          %1281 = vadd.xlane.f32.xlu0 %v1276
          %v1282 = vpop.xlane.xlu0 %1281
          %1283 = vadd.xlane.f32.xlu0 %v1277
          %v1284 = vpop.xlane.xlu0 %1283
          %1285 = vadd.xlane.f32.xlu0 %v1278
          %v1286 = vpop.xlane.xlu0 %1285
          %v1287 = vmul.f32 %v1275, %v1275
          %v1288 = vmul.f32 %v1276, %v1276
          %v1289 = vmul.f32 %v1277, %v1277
          %v1290 = vmul.f32 %v1278, %v1278
          %1291 = vadd.xlane.f32.xlu0 %v1287
          %v1292 = vpop.xlane.xlu0 %1291
          %1293 = vadd.xlane.f32.xlu0 %v1288
          %v1294 = vpop.xlane.xlu0 %1293
          %1295 = vadd.xlane.f32.xlu0 %v1289
          %v1296 = vpop.xlane.xlu0 %1295
          %1297 = vadd.xlane.f32.xlu0 %v1290
          %v1298 = vpop.xlane.xlu0 %1297
          %v1299 = vsel %vm412, %v1280, 0.0
          %v1300 = vsel %vm412, %v1282, 0.0
          %v1301 = vadd.f32 %v1299, %v1300
          %v1302 = vsel %vm412, %v1284, 0.0
          %v1303 = vadd.f32 %v1301, %v1302
          %v1304 = vsel %vm412, %v1286, 0.0
          %v1305 = vadd.f32 %v1303, %v1304
          %1306 = vadd.xlane.f32.xlu0 %v1305
          %v1307 = vpop.xlane.xlu0 %1306
          %v1308 = vrot.slane %v1307, 4
          %v1309 = vadd.f32 %v1307, %v1308
          %v1310 = vrot.slane %v1309, 2
          %v1311 = vadd.f32 %v1309, %v1310
          %v1312 = vrot.slane %v1311, 1
          %v1313 = vadd.f32 %v1311, %v1312
          %s1314 = vtos %v1313
          %s1315 = smul.f32 %s1314, 0.0009765625
          %v1316 = vsel %vm412, %v1292, 0.0
          %v1317 = vsel %vm412, %v1294, 0.0
          %v1318 = vadd.f32 %v1316, %v1317
          %v1319 = vsel %vm412, %v1296, 0.0
          %v1320 = vadd.f32 %v1318, %v1319
          %v1321 = vsel %vm412, %v1298, 0.0
          %v1322 = vadd.f32 %v1320, %v1321
          %1323 = vadd.xlane.f32.xlu0 %v1322
          %v1324 = vpop.xlane.xlu0 %1323
          %v1325 = vrot.slane %v1324, 4
          %v1326 = vadd.f32 %v1324, %v1325
          %v1327 = vrot.slane %v1326, 2
          %v1328 = vadd.f32 %v1326, %v1327
          %v1329 = vrot.slane %v1328, 1
          %v1330 = vadd.f32 %v1328, %v1329
          %s1331 = vtos %v1330
          %s1332 = smul.f32 %s1331, 0.0009765625
          %s1333 = smul.f32 %s1315, %s1315
          %s1334 = ssub.f32 %s1332, %s1333
          %s1335 = smax.f32 %s1334, 0.0
          %s1336 = sadd.f32 %s1335, 1e-08
          %v1337 = vstv %s1336
          %v1338 = vrsqrt.pop %v1337
          %v1339 = vmul.f32 %v1338, %v1337
          %v1340 = vmul.f32 %v1339, %v1338
          %v1341 = vmul.f32 0.5, %v1340
          %v1342 = vsub.f32 1.5, %v1341
          %v1343 = vmul.f32 %v1338, %v1342
          %vm1344 = vweird.f32 %v1337
          %vm1345 = vweird.f32 %v1338
          %vm1346 = vmor %vm1344, %vm1345
          %v1347 = vsel %vm1346, %v1338, %v1343
          %s1348 = vtos %v1347
          %v1349 = vstv %s1348
          %v1350 = vmul.f32 %v1177, %v1349
          %v1351 = vmul.f32 %v1178, %v1349
          %v1352 = vmul.f32 %v1179, %v1349
          %v1353 = vmul.f32 %v1180, %v1349
          %v1354 = vstv %s1315
          %v1355 = vmul.f32 %v1354, %v1350
          %v1356 = vmul.f32 %v1354, %v1351
          %v1357 = vmul.f32 %v1354, %v1352
          %v1358 = vmul.f32 %v1354, %v1353
          %1363 = vrot.lane.b32.xlu0 %v1355, 1
          %v1364 = vpop.permute.xlu0 %1363
          %1365 = vrot.lane.b32.xlu0 %v1356, 1
          %v1366 = vpop.permute.xlu0 %1365
          %1367 = vrot.lane.b32.xlu0 %v1357, 1
          %v1368 = vpop.permute.xlu0 %1367
          %1369 = vrot.lane.b32.xlu0 %v1358, 1
          %v1370 = vpop.permute.xlu0 %1369
          %v1375 = vsub.f32 %v1177, %v1364
          %v1376 = vsub.f32 %v1178, %v1366
          %v1377 = vsub.f32 %v1179, %v1368
          %v1378 = vsub.f32 %v1180, %v1370
          %1380 = vset.pattern.permute.xlu0 1
          %1381 = vperm.xlu0 %1380, %v1350
          %v1382 = vpop.permute.xlu0 %1381
          %1385 = vset.pattern.permute.xlu0 1
          %1386 = vperm.xlu0 %1385, %v1351
          %v1387 = vpop.permute.xlu0 %1386
          %1390 = vset.pattern.permute.xlu0 1
          %1391 = vperm.xlu0 %1390, %v1352
          %v1392 = vpop.permute.xlu0 %1391
          %1395 = vset.pattern.permute.xlu0 1
          %1396 = vperm.xlu0 %1395, %v1353
          %v1397 = vpop.permute.xlu0 %1396
          %v1399 = vmul.f32 %v1271, %v1382
          %v1400 = vmul.f32 %v1272, %v1387
          %v1401 = vmul.f32 %v1273, %v1392
          %v1402 = vmul.f32 %v1274, %v1397
          %1404 = vset.pattern.permute.xlu0 2
          %1405 = vperm.xlu0 %1404, %v1375
          %v1406 = vpop.permute.xlu0 %1405
          %1409 = vset.pattern.permute.xlu0 2
          %1410 = vperm.xlu0 %1409, %v1376
          %v1411 = vpop.permute.xlu0 %1410
          %1414 = vset.pattern.permute.xlu0 2
          %1415 = vperm.xlu0 %1414, %v1377
          %v1416 = vpop.permute.xlu0 %1415
          %1419 = vset.pattern.permute.xlu0 2
          %1420 = vperm.xlu0 %1419, %v1378
          %v1421 = vpop.permute.xlu0 %1420
          %v1423 = vadd.f32 %v1399, %v1406
          %v1424 = vadd.f32 %v1400, %v1411
          %v1425 = vadd.f32 %v1401, %v1416
          %v1426 = vadd.f32 %v1402, %v1421
          %1427 = vrot.lane.b32.xlu0 %v1423, 2
          %v1428 = vpop.permute.xlu0 %1427
          %1429 = vrot.lane.b32.xlu0 %v1424, 2
          %v1430 = vpop.permute.xlu0 %1429
          %1431 = vrot.lane.b32.xlu0 %v1425, 2
          %v1432 = vpop.permute.xlu0 %1431
          %1433 = vrot.lane.b32.xlu0 %v1426, 2
          %v1434 = vpop.permute.xlu0 %1433
          %v1435 = vsel %vm392, 1, 0
          %vm1436 = vcmp.eq.s32.totalorder %v1435, 1
          %v1437 = vsel %vm1436, %v1428, 0.0
          %v1438 = vsel %vm1436, %v1430, 0.0
          %v1439 = vsel %vm1436, %v1432, 0.0
          %v1440 = vsel %vm1436, %v1434, 0.0
          %1441 = vset.pattern.permute.xlu0 3
          %1442 = vperm.xlu0 %1441, %v1177
          %v1443 = vpop.permute.xlu0 %1442
          %1445 = vset.pattern.permute.xlu0 3
          %1446 = vperm.xlu0 %1445, %v1178
          %v1447 = vpop.permute.xlu0 %1446
          %1449 = vset.pattern.permute.xlu0 3
          %1450 = vperm.xlu0 %1449, %v1179
          %v1451 = vpop.permute.xlu0 %1450
          %1453 = vset.pattern.permute.xlu0 3
          %1454 = vperm.xlu0 %1453, %v1180
          %v1455 = vpop.permute.xlu0 %1454
          %v1457 = vmul.f32 %v1443, %v1437
          %v1458 = vmul.f32 %v1447, %v1438
          %v1459 = vmul.f32 %v1451, %v1439
          %v1460 = vmul.f32 %v1455, %v1440
          %1461 = vset.pattern.permute.xlu0 4
          %1462 = vperm.xlu0 %1461, %v1177
          %v1463 = vpop.permute.xlu0 %1462
          %1465 = vset.pattern.permute.xlu0 4
          %1466 = vperm.xlu0 %1465, %v1178
          %v1467 = vpop.permute.xlu0 %1466
          %1469 = vset.pattern.permute.xlu0 4
          %1470 = vperm.xlu0 %1469, %v1179
          %v1471 = vpop.permute.xlu0 %1470
          %1473 = vset.pattern.permute.xlu0 4
          %1474 = vperm.xlu0 %1473, %v1180
          %v1475 = vpop.permute.xlu0 %1474
          %v1477 = vmul.f32 %v1463, %v1423
          %v1478 = vmul.f32 %v1467, %v1424
          %v1479 = vmul.f32 %v1471, %v1425
          %v1480 = vmul.f32 %v1475, %v1426
          %v1481 = vadd.f32 %v1457, %v1477
          %v1482 = vadd.f32 %v1458, %v1478
          %v1483 = vadd.f32 %v1459, %v1479
          %v1484 = vadd.f32 %v1460, %v1480
          %1485 = vrot.lane.b32.xlu0 %v1423, 126
          %v1486 = vpop.permute.xlu0 %1485
          %1487 = vrot.lane.b32.xlu0 %v1424, 126
          %v1488 = vpop.permute.xlu0 %1487
          %1489 = vrot.lane.b32.xlu0 %v1425, 126
          %v1490 = vpop.permute.xlu0 %1489
          %1491 = vrot.lane.b32.xlu0 %v1426, 126
          %v1492 = vpop.permute.xlu0 %1491
          %v1493 = vsel %vm393, 1, 0
          %vm1494 = vcmp.eq.s32.totalorder %v1493, 1
          %v1495 = vsel %vm1494, %v1486, 0.0
          %v1496 = vsel %vm1494, %v1488, 0.0
          %v1497 = vsel %vm1494, %v1490, 0.0
          %v1498 = vsel %vm1494, %v1492, 0.0
          %1499 = vset.pattern.permute.xlu0 5
          %1500 = vperm.xlu0 %1499, %v1177
          %v1501 = vpop.permute.xlu0 %1500
          %1503 = vset.pattern.permute.xlu0 5
          %1504 = vperm.xlu0 %1503, %v1178
          %v1505 = vpop.permute.xlu0 %1504
          %1507 = vset.pattern.permute.xlu0 5
          %1508 = vperm.xlu0 %1507, %v1179
          %v1509 = vpop.permute.xlu0 %1508
          %1511 = vset.pattern.permute.xlu0 5
          %1512 = vperm.xlu0 %1511, %v1180
          %v1513 = vpop.permute.xlu0 %1512
          %v1515 = vmul.f32 %v1501, %v1495
          %v1516 = vmul.f32 %v1505, %v1496
          %v1517 = vmul.f32 %v1509, %v1497
          %v1518 = vmul.f32 %v1513, %v1498
          %v1519 = vadd.f32 %v1481, %v1515
          %v1520 = vadd.f32 %v1482, %v1516
          %v1521 = vadd.f32 %v1483, %v1517
          %v1522 = vadd.f32 %v1484, %v1518
          %1523 = vset.pattern.permute.xlu0 6
          %1524 = vperm.xlu0 %1523, %v1177
          %v1525 = vpop.permute.xlu0 %1524
          %1527 = vset.pattern.permute.xlu0 6
          %1528 = vperm.xlu0 %1527, %v1178
          %v1529 = vpop.permute.xlu0 %1528
          %1531 = vset.pattern.permute.xlu0 6
          %1532 = vperm.xlu0 %1531, %v1179
          %v1533 = vpop.permute.xlu0 %1532
          %1535 = vset.pattern.permute.xlu0 6
          %1536 = vperm.xlu0 %1535, %v1180
          %v1537 = vpop.permute.xlu0 %1536
          %v1539 = vadd.f32 %v1519, %v1525
          %v1540 = vadd.f32 %v1520, %v1529
          %v1541 = vadd.f32 %v1521, %v1533
          %v1542 = vadd.f32 %v1522, %v1537
          %vm1543 = vcmp.ge.f32.partialorder %v1539, 0.0
          %vm1544 = vcmp.ge.f32.partialorder %v1540, 0.0
          %vm1545 = vcmp.ge.f32.partialorder %v1541, 0.0
          %vm1546 = vcmp.ge.f32.partialorder %v1542, 0.0
          %1547 = vset.pattern.permute.xlu0 10
          %1548 = vperm.xlu0 %1547, %v1177
          %v1549 = vpop.permute.xlu0 %1548
          %1551 = vset.pattern.permute.xlu0 10
          %1552 = vperm.xlu0 %1551, %v1178
          %v1553 = vpop.permute.xlu0 %1552
          %1555 = vset.pattern.permute.xlu0 10
          %1556 = vperm.xlu0 %1555, %v1179
          %v1557 = vpop.permute.xlu0 %1556
          %1559 = vset.pattern.permute.xlu0 10
          %1560 = vperm.xlu0 %1559, %v1180
          %v1561 = vpop.permute.xlu0 %1560
          %v1563 = vmul.f32 %v1549, %v1539
          %v1564 = vmul.f32 %v1553, %v1540
          %v1565 = vmul.f32 %v1557, %v1541
          %v1566 = vmul.f32 %v1561, %v1542
          %v1567 = vsel %vm1543, %v1539, %v1563
          %v1568 = vsel %vm1544, %v1540, %v1564
          %v1569 = vsel %vm1545, %v1541, %v1565
          %v1570 = vsel %vm1546, %v1542, %v1566
          %v1571 = vsel %vm399, %v1567, 0.0
          %v1572 = vsel %vm399, %v1568, 0.0
          %v1573 = vsel %vm399, %v1569, 0.0
          %v1574 = vsel %vm399, %v1570, 0.0
          %1575 = vadd.xlane.f32.xlu0 %v1571
          %v1576 = vpop.xlane.xlu0 %1575
          %1577 = vadd.xlane.f32.xlu0 %v1572
          %v1578 = vpop.xlane.xlu0 %1577
          %1579 = vadd.xlane.f32.xlu0 %v1573
          %v1580 = vpop.xlane.xlu0 %1579
          %1581 = vadd.xlane.f32.xlu0 %v1574
          %v1582 = vpop.xlane.xlu0 %1581
          %v1583 = vmul.f32 %v1571, %v1571
          %v1584 = vmul.f32 %v1572, %v1572
          %v1585 = vmul.f32 %v1573, %v1573
          %v1586 = vmul.f32 %v1574, %v1574
          %1587 = vadd.xlane.f32.xlu0 %v1583
          %v1588 = vpop.xlane.xlu0 %1587
          %1589 = vadd.xlane.f32.xlu0 %v1584
          %v1590 = vpop.xlane.xlu0 %1589
          %1591 = vadd.xlane.f32.xlu0 %v1585
          %v1592 = vpop.xlane.xlu0 %1591
          %1593 = vadd.xlane.f32.xlu0 %v1586
          %v1594 = vpop.xlane.xlu0 %1593
          %v1595 = vsel %vm412, %v1576, 0.0
          %v1596 = vsel %vm412, %v1578, 0.0
          %v1597 = vadd.f32 %v1595, %v1596
          %v1598 = vsel %vm412, %v1580, 0.0
          %v1599 = vadd.f32 %v1597, %v1598
          %v1600 = vsel %vm412, %v1582, 0.0
          %v1601 = vadd.f32 %v1599, %v1600
          %1602 = vadd.xlane.f32.xlu0 %v1601
          %v1603 = vpop.xlane.xlu0 %1602
          %v1604 = vrot.slane %v1603, 4
          %v1605 = vadd.f32 %v1603, %v1604
          %v1606 = vrot.slane %v1605, 2
          %v1607 = vadd.f32 %v1605, %v1606
          %v1608 = vrot.slane %v1607, 1
          %v1609 = vadd.f32 %v1607, %v1608
          %s1610 = vtos %v1609
          %s1611 = smul.f32 %s1610, 0.0009765625
          %v1612 = vsel %vm412, %v1588, 0.0
          %v1613 = vsel %vm412, %v1590, 0.0
          %v1614 = vadd.f32 %v1612, %v1613
          %v1615 = vsel %vm412, %v1592, 0.0
          %v1616 = vadd.f32 %v1614, %v1615
          %v1617 = vsel %vm412, %v1594, 0.0
          %v1618 = vadd.f32 %v1616, %v1617
          %1619 = vadd.xlane.f32.xlu0 %v1618
          %v1620 = vpop.xlane.xlu0 %1619
          %v1621 = vrot.slane %v1620, 4
          %v1622 = vadd.f32 %v1620, %v1621
          %v1623 = vrot.slane %v1622, 2
          %v1624 = vadd.f32 %v1622, %v1623
          %v1625 = vrot.slane %v1624, 1
          %v1626 = vadd.f32 %v1624, %v1625
          %s1627 = vtos %v1626
          %s1628 = smul.f32 %s1627, 0.0009765625
          %s1629 = smul.f32 %s1611, %s1611
          %s1630 = ssub.f32 %s1628, %s1629
          %s1631 = smax.f32 %s1630, 0.0
          %s1632 = sadd.f32 %s1631, 1e-08
          %v1633 = vstv %s1632
          %v1634 = vrsqrt.pop %v1633
          %v1635 = vmul.f32 %v1634, %v1633
          %v1636 = vmul.f32 %v1635, %v1634
          %v1637 = vmul.f32 0.5, %v1636
          %v1638 = vsub.f32 1.5, %v1637
          %v1639 = vmul.f32 %v1634, %v1638
          %vm1640 = vweird.f32 %v1633
          %vm1641 = vweird.f32 %v1634
          %vm1642 = vmor %vm1640, %vm1641
          %v1643 = vsel %vm1642, %v1634, %v1639
          %s1644 = vtos %v1643
          %v1645 = vstv %s1644
          %v1646 = vmul.f32 %v1177, %v1645
          %v1647 = vmul.f32 %v1178, %v1645
          %v1648 = vmul.f32 %v1179, %v1645
          %v1649 = vmul.f32 %v1180, %v1645
          %v1650 = vstv %s1611
          %v1651 = vmul.f32 %v1650, %v1646
          %v1652 = vmul.f32 %v1650, %v1647
          %v1653 = vmul.f32 %v1650, %v1648
          %v1654 = vmul.f32 %v1650, %v1649
          %1659 = vrot.lane.b32.xlu0 %v1651, 1
          %v1660 = vpop.permute.xlu0 %1659
          %1661 = vrot.lane.b32.xlu0 %v1652, 1
          %v1662 = vpop.permute.xlu0 %1661
          %1663 = vrot.lane.b32.xlu0 %v1653, 1
          %v1664 = vpop.permute.xlu0 %1663
          %1665 = vrot.lane.b32.xlu0 %v1654, 1
          %v1666 = vpop.permute.xlu0 %1665
          %v1671 = vsub.f32 %v1177, %v1660
          %v1672 = vsub.f32 %v1178, %v1662
          %v1673 = vsub.f32 %v1179, %v1664
          %v1674 = vsub.f32 %v1180, %v1666
          %1676 = vset.pattern.permute.xlu0 7
          %1677 = vperm.xlu0 %1676, %v1646
          %v1678 = vpop.permute.xlu0 %1677
          %1681 = vset.pattern.permute.xlu0 7
          %1682 = vperm.xlu0 %1681, %v1647
          %v1683 = vpop.permute.xlu0 %1682
          %1686 = vset.pattern.permute.xlu0 7
          %1687 = vperm.xlu0 %1686, %v1648
          %v1688 = vpop.permute.xlu0 %1687
          %1691 = vset.pattern.permute.xlu0 7
          %1692 = vperm.xlu0 %1691, %v1649
          %v1693 = vpop.permute.xlu0 %1692
          %v1695 = vmul.f32 %v1567, %v1678
          %v1696 = vmul.f32 %v1568, %v1683
          %v1697 = vmul.f32 %v1569, %v1688
          %v1698 = vmul.f32 %v1570, %v1693
          %1700 = vset.pattern.permute.xlu0 8
          %1701 = vperm.xlu0 %1700, %v1671
          %v1702 = vpop.permute.xlu0 %1701
          %1705 = vset.pattern.permute.xlu0 8
          %1706 = vperm.xlu0 %1705, %v1672
          %v1707 = vpop.permute.xlu0 %1706
          %1710 = vset.pattern.permute.xlu0 8
          %1711 = vperm.xlu0 %1710, %v1673
          %v1712 = vpop.permute.xlu0 %1711
          %1715 = vset.pattern.permute.xlu0 8
          %1716 = vperm.xlu0 %1715, %v1674
          %v1717 = vpop.permute.xlu0 %1716
          %v1719 = vadd.f32 %v1695, %v1702
          %v1720 = vadd.f32 %v1696, %v1707
          %v1721 = vadd.f32 %v1697, %v1712
          %v1722 = vadd.f32 %v1698, %v1717
          %s1723 = scalar_lea.vmem %s6, %s1175
          %v1724 = vld [vmem:[%s1723] sm:$0xff]
          %v1725 = vld [vmem:[%s1723 + $0x8] sm:$0xff]
          %v1726 = vld [vmem:[%s1723 + $0x10] sm:$0xff]
          %v1727 = vld [vmem:[%s1723 + $0x18] sm:$0xff]
          %s1728 = scalar_lea.vmem %s7, %s1175
          %v1729 = vld [vmem:[%s1728] sm:$0xff]
          %v1730 = vld [vmem:[%s1728 + $0x8] sm:$0xff]
          %v1731 = vld [vmem:[%s1728 + $0x10] sm:$0xff]
          %v1732 = vld [vmem:[%s1728 + $0x18] sm:$0xff]
          %1734 = vset.pattern.permute.xlu0 0
          %1735 = vperm.xlu0 %1734, %v1729
          %v1736 = vpop.permute.xlu0 %1735
          %1739 = vset.pattern.permute.xlu0 0
          %1740 = vperm.xlu0 %1739, %v1730
          %v1741 = vpop.permute.xlu0 %1740
          %1744 = vset.pattern.permute.xlu0 0
          %1745 = vperm.xlu0 %1744, %v1731
          %v1746 = vpop.permute.xlu0 %1745
          %1749 = vset.pattern.permute.xlu0 0
          %1750 = vperm.xlu0 %1749, %v1732
          %v1751 = vpop.permute.xlu0 %1750
          %v1754 = vsel %vm1128, %v1724, 0
          %v1757 = vsel %vm1128, %v1725, 0
          %v1760 = vsel %vm1128, %v1726, 0
          %v1763 = vsel %vm1128, %v1727, 0
          %1765 = vmatpush.msra.mxu0 0.0
          %1766 = vmatpush.msra.mxu0 0.0
          %1767 = vmatpush.msra.mxu0 0.0
          %1768 = vmatpush.msra.mxu0 0.0
          %1769 = vmatpush.msra.mxu0 0.0
          %1770 = vmatpush.msra.mxu0 0.0
          %1771 = vmatpush.msra.mxu0 0.0
          %1772 = vmatpush.msra.mxu0 0.0
          %1773 = vmatpush.msra.mxu0 0.0
          %1774 = vmatpush.msra.mxu0 0.0
          %1775 = vmatpush.msra.mxu0 0.0
          %1776 = vmatpush.msra.mxu0 0.0
          %1777 = vmatpush.msra.mxu0 %v1722
          %1778 = vmatpush.msra.mxu0 %v1721
          %1779 = vmatpush.msra.mxu0 %v1720
          %1780 = vmatpush.msra.mxu0 %v1719
          %1781 = vmatmul.f32.gmra.mxu0 %v1754
          %v1782 = vpop.f32.mrf.mxu0
          %v1783 = vadd.f32 %v1736, %v1782
          %1784 = vmatmul.f32.gmra.mxu0 %v1757
          %v1785 = vpop.f32.mrf.mxu0
          %v1786 = vadd.f32 %v1741, %v1785
          %1787 = vmatmul.f32.gmra.mxu0 %v1760
          %v1788 = vpop.f32.mrf.mxu0
          %v1789 = vadd.f32 %v1746, %v1788
          %1790 = vmatmul.f32.gmra.mxu0 %v1763
          %v1791 = vpop.f32.mrf.mxu0
          %v1792 = vadd.f32 %v1751, %v1791
          %1793 = vdwg.mxu0
          %v1794 = vadd.f32 %v1170, %v1783
          %v1795 = vadd.f32 %v1171, %v1786
          %v1796 = vadd.f32 %v1172, %v1789
          %v1797 = vadd.f32 %v1173, %v1792
        $region69: #{tpu_custom_call.1} parent=63 // loop_footer
          %s544 = sadd.s32 1, %s540
        $region70: #{tpu_custom_call.1} parent=63 // loop_footer_branch
          %539 = sbr.rel target = $region66
        $region71: #{tpu_custom_call.1} parent=63 // loop_exit
          _
        %v1798 = vld [vmem:[#allocation2] sm:$0x1]
        %vm1799 = vcmp.ge.f32.partialorder %v547, 0.0
        %vm1800 = vcmp.ge.f32.partialorder %v548, 0.0
        %v1802 = vperm.slane %v1798, 0
        %1803 = vset.pattern.permute.xlu0 0
        %1804 = vperm.xlu0 %1803, %v1802
        %v1805 = vpop.permute.xlu0 %1804
        %v1807 = vmul.f32 %v1805, %v547
        %v1808 = vmul.f32 %v1805, %v548
        %v1809 = vsel %vm1799, %v547, %v1807
        %v1810 = vsel %vm1800, %v548, %v1808
        %v1811 = vld [vmem:[%s9] sm:$0xff]
        %v1812 = vld [vmem:[%s9 + $0x8] sm:$0xff]
        %v1813 = vld [vmem:[%s9 + $0x10] sm:$0xff]
        %v1814 = vld [vmem:[%s9 + $0x18] sm:$0xff]
        %v1815 = vld [vmem:[%s10] sm:$0xff]
        %v1816 = vld [vmem:[%s10 + $0x8] sm:$0xff]
        %v1817 = vld [vmem:[%s10 + $0x10] sm:$0xff]
        %v1818 = vld [vmem:[%s10 + $0x18] sm:$0xff]
        %1820 = vset.pattern.permute.xlu0 0
        %1821 = vperm.xlu0 %1820, %v1815
        %v1822 = vpop.permute.xlu0 %1821
        %1825 = vset.pattern.permute.xlu0 0
        %1826 = vperm.xlu0 %1825, %v1816
        %v1827 = vpop.permute.xlu0 %1826
        %1830 = vset.pattern.permute.xlu0 0
        %1831 = vperm.xlu0 %1830, %v1817
        %v1832 = vpop.permute.xlu0 %1831
        %1835 = vset.pattern.permute.xlu0 0
        %1836 = vperm.xlu0 %1835, %v1818
        %v1837 = vpop.permute.xlu0 %1836
        %v1840 = vsel %vm509, %v1811, 0
        %v1843 = vsel %vm509, %v1812, 0
        %v1846 = vsel %vm509, %v1813, 0
        %v1849 = vsel %vm509, %v1814, 0
        %1851 = vmatpush.msra.mxu0 0.0
        %1852 = vmatpush.msra.mxu0 0.0
        %1853 = vmatpush.msra.mxu0 0.0
        %1854 = vmatpush.msra.mxu0 0.0
        %1855 = vmatpush.msra.mxu0 0.0
        %1856 = vmatpush.msra.mxu0 0.0
        %1857 = vmatpush.msra.mxu0 0.0
        %1858 = vmatpush.msra.mxu0 0.0
        %1859 = vmatpush.msra.mxu0 0.0
        %1860 = vmatpush.msra.mxu0 0.0
        %1861 = vmatpush.msra.mxu0 0.0
        %1862 = vmatpush.msra.mxu0 0.0
        %1863 = vmatpush.msra.mxu0 0.0
        %1864 = vmatpush.msra.mxu0 0.0
        %1865 = vmatpush.msra.mxu0 %v1810
        %1866 = vmatpush.msra.mxu0 %v1809
        %1867 = vmatmul.f32.gmra.mxu0 %v1840
        %v1868 = vpop.f32.mrf.mxu0
        %v1869 = vadd.f32 %v1822, %v1868
        %1870 = vmatmul.f32.gmra.mxu0 %v1843
        %v1871 = vpop.f32.mrf.mxu0
        %v1872 = vadd.f32 %v1827, %v1871
        %1873 = vmatmul.f32.gmra.mxu0 %v1846
        %v1874 = vpop.f32.mrf.mxu0
        %v1875 = vadd.f32 %v1832, %v1874
        %1876 = vmatmul.f32.gmra.mxu0 %v1849
        %v1877 = vpop.f32.mrf.mxu0
        %v1878 = vadd.f32 %v1837, %v1877
        %1879 = vdwg.mxu0
        %v1880 = vmax.f32 %v1869, 0.0
        %v1881 = vmax.f32 %v1872, 0.0
        %v1882 = vmax.f32 %v1875, 0.0
        %v1883 = vmax.f32 %v1878, 0.0
        %v1884 = vsel %vm399, %v1880, 0.0
        %v1885 = vsel %vm399, %v1881, 0.0
        %v1886 = vsel %vm399, %v1882, 0.0
        %v1887 = vsel %vm399, %v1883, 0.0
        %1888 = vst [vmem:[%s381] sm:$0xff] %v1884
        %1889 = vst [vmem:[%s381 + $0x8] sm:$0xff] %v1885
        %1890 = vst [vmem:[%s381 + $0x10] sm:$0xff] %v1886
        %1891 = vst [vmem:[%s381 + $0x18] sm:$0xff] %v1887
        %s1892 = sand.u32 %s271, 1
        %s1893 = scalar_lea.sflag [#allocation4], %s1892
        %s1894 = sand.u32 %s271, 1
        %s1895 = smul.addr %s1894, 32
        %s1896 = scalar_lea.vmem [#allocation3], %s1895
        // Predicated region
        $region72: #{tpu_custom_call.1} parent=63 // pred_check
          %p1897 = pneg %p281
        $region73: #{tpu_custom_call.1} parent=63 // pred_check_branch
          %1899 = sbr.rel (%p1897) target = $region75
        $region74: #{tpu_custom_call.1} parent=63 // pred_region
          %1901 = vsyncadd %s1893, 0
          %s1902 = smul.addr %s27, 4
          %s1903 = smul.addr %s1902, 8
          %s1904 = scalar_lea.hbm %s11, %s1903
          %s1905 = sshll.u32 %s1896, 4
          %s1906 = int_to_ptr.vmem [resolvable:$true] %s1905
          %s1907 = sshll.u32 %s1904, 4
          %s1908 = int_to_ptr.hbm [resolvable:$true] %s1907
          %1913 = dma.vmem_to_hbm [thread:$0]  %s1906, 512, %s1908, %s1893, 128, 128, 8
        $region75: #{tpu_custom_call.1} parent=63 // pred_fallthru
          _
      $region64: #{tpu_custom_call.1} parent=5 // pred_fallthru
        _
      %p1914 = scmp.le.s32.totalorder 2, %s22
      // Predicated region
      $region76: #{tpu_custom_call.1} parent=5 // pred_check
        %p1915 = pneg %p1914
      $region77: #{tpu_custom_call.1} parent=5 // pred_check_branch
        %1917 = sbr.rel (%p1915) target = $region79
      $region78: #{tpu_custom_call.1} parent=5 // pred_region
        %s1918 = ssub.s32 %s22, 2
        // Predicated region
        $region80: #{tpu_custom_call.1} parent=78 // pred_check
          %p1919 = pneg %p287
        $region81: #{tpu_custom_call.1} parent=78 // pred_check_branch
          %1921 = sbr.rel (%p1919) target = $region83
        $region82: #{tpu_custom_call.1} parent=78 // pred_region
          %s1922 = sand.u32 %s272, 1
          %s1923 = scalar_lea.sflag [#allocation4], %s1922
          %s1924 = sand.u32 %s272, 1
          %s1925 = smul.addr %s1924, 32
          %s1926 = scalar_lea.vmem [#allocation3], %s1925
          %1928 = dma.done %s1923, 512
        $region83: #{tpu_custom_call.1} parent=78 // pred_fallthru
          _
      $region79: #{tpu_custom_call.1} parent=5 // pred_fallthru
        _
    $region6: #{tpu_custom_call.1} parent=1 // loop_footer
      %s26 = sadd.s32 1, %s22
    $region7: #{tpu_custom_call.1} parent=1 // loop_footer_branch
      %21 = sbr.rel target = $region3
    $region8: #{tpu_custom_call.1} parent=1 // loop_exit
      _
    %1929 = vsyncpa [#allocation4], 1
    %s1930 = scalar_lea.sflag [#allocation4], 1
    %1931 = vsyncpa %s1930, 1

</llo_original>
